<compile_context>
chip_gen: v7x
topology: tpu7x:2x2x1
jax: 0.10.0
libtpu: 0.0.40
codegen_flags: <defaults>
</compile_context>

<pallas_src>
import functools

import jax
import jax.numpy as jnp
from jax.experimental import pallas as pl
from jax.experimental.pallas import tpu as pltpu


def _round_up(x, m):
    return ((x + m - 1) // m) * m


def _vmem_limit_bytes():
    # ~75% of physical VMEM: ~96 MiB on v5e/v6e (128 MiB), ~48 MiB on v7x (64 MiB).
    try:
        cap = pltpu.get_tpu_info().vmem_capacity_bytes
    except Exception:
        cap = 64 * 1024 * 1024
    return min(int(cap * 3 // 4), 100 * 1024 * 1024)


def _resident_spec(shape):
    """BlockSpec for a grid-invariant (weight/bias) operand: constant index
    map; single-buffered (no 2x VMEM) when this JAX supports pipeline_mode."""
    zeros = (0,) * len(shape)
    index_map = lambda i, _z=zeros: _z
    try:
        if hasattr(pl, "Buffered"):
            return pl.BlockSpec(shape, index_map, pipeline_mode=pl.Buffered(1))
    except Exception:
        pass
    return pl.BlockSpec(shape, index_map)


def conv_geometry(obs_shape):
    _, H, W = obs_shape
    g = {}
    g["oh1"] = (H - 8) // 4 + 1
    g["ow1"] = (W - 8) // 4 + 1
    g["oh2"] = (g["oh1"] - 4) // 2 + 1
    g["ow2"] = (g["ow1"] - 4) // 2 + 1
    g["oh3"] = g["oh2"] - 3 + 1
    g["ow3"] = g["ow2"] - 3 + 1
    # rows/cols of conv1's output that conv2 actually reads (valid conv).
    g["h1_used"] = 2 * (g["oh2"] - 1) + 4
    g["w1_used"] = 2 * (g["ow2"] - 1) + 4
    return g


# ---------------------------------------------------------------------------
# Pallas kernel 1: row-tiled matmul + bias + ReLU  (conv1 via im2col)
# ---------------------------------------------------------------------------
def _matmul_bias_relu_kernel(x_ref, w_ref, b_ref, o_ref):
    acc = jnp.dot(x_ref[...], w_ref[...], preferred_element_type=jnp.float32)
    acc = jnp.maximum(acc + b_ref[...], 0.0)
    o_ref[...] = acc.astype(o_ref.dtype)


def tiled_matmul_bias_relu(x, w, b, *, out_dtype=jnp.bfloat16, tm_default=1024):
    """x:(M,K) bf16, w:(K,N) bf16 (resident), b:(1,N) f32 -> relu(x@w+b)."""
    M, K = x.shape
    N = w.shape[1]
    # >=2 row tiles whenever possible so the "parallel" axis can shard across
    # v7x's two TensorCores; cap at tm_default to stay VMEM-friendly.
    tm = max(16, min(tm_default, _round_up(pl.cdiv(M, 2), 16)))
    grid = (pl.cdiv(M, tm),)            # ragged last tile handled by Pallas
    return pl.pallas_call(
        _matmul_bias_relu_kernel,
        out_shape=jax.ShapeDtypeStruct((M, N), out_dtype),
        grid=grid,
        in_specs=[
            pl.BlockSpec((tm, K), lambda i: (i, 0)),   # pipelined row tile
            _resident_spec((K, N)),                    # resident weight
            _resident_spec((1, N)),                    # resident bias
        ],
        out_specs=pl.BlockSpec((tm, N), lambda i: (i, 0)),  # lane-dense bf16
        compiler_params=pltpu.CompilerParams(
            dimension_semantics=("parallel",),
            vmem_limit_bytes=_vmem_limit_bytes(),
        ),
    )(x, w, b)


# ---------------------------------------------------------------------------
# Pallas kernel 2: fused conv2 -> conv3 -> dense -> l1 -> l2 -> out -> softmax
# ---------------------------------------------------------------------------
def _tail_kernel(x_ref, w2_ref, b2_ref, w3_ref, b3_ref, dw_ref, db_ref,
                 l1w_ref, l1b_ref, l2w_ref, l2b_ref, ow_ref, ob_ref, o_ref,
                 *, dims):
    tb = x_ref.shape[2]                 # batch tile (sublane dim)

    def conv_taps(h, kh, kw, stride, oh, ow, w_r, b_r):
        """Valid conv over an HWBC VMEM value via per-tap MXU accumulation."""
        cin = h.shape[-1]
        cout = w_r.shape[-1]
        if stride > 1:
            # split the (even) spatial dims so each tap is a static,
            # contiguous leading-dim slice instead of a strided read.
            h = h.reshape(h.shape[0] // stride, stride,
                          h.shape[1] // stride, stride, tb, cin)
        rows = oh * ow * tb
        acc = jnp.zeros((rows, cout), jnp.float32)
        for i in range(kh):
            for j in range(kw):
                if stride > 1:
                    patch = h[i // stride:i // stride + oh, i % stride,
                              j // stride:j // stride + ow, j % stride]
                else:
                    patch = h[i:i + oh, j:j + ow]       # (oh, ow, tb, cin)
                wt = w_r[(i * kw + j) * cin:(i * kw + j + 1) * cin, :]
                acc = acc + jnp.dot(patch.reshape(rows, cin), wt,
                                    preferred_element_type=jnp.float32)
        acc = jnp.maximum(acc + b_r[...], 0.0)
        return acc.astype(jnp.bfloat16).reshape(oh, ow, tb, cout)

    # conv2 (4x4 / stride 2) and conv3 (3x3 / stride 1), entirely in VMEM.
    h2 = conv_taps(x_ref[...], dims["kh2"], dims["kw2"], dims["s2"],
                   dims["oh2"], dims["ow2"], w2_ref, b2_ref)
    h3 = conv_taps(h2, dims["kh3"], dims["kw3"], 1,
                   dims["oh3"], dims["ow3"], w3_ref, b3_ref)

    # dense: dw rows were pre-reordered to (h, w, c_pad), so accumulate one
    # (tb, C3p) @ (C3p, F) dot per spatial position of conv3's output.
    F = db_ref.shape[1]
    c3p = w3_ref.shape[1]
    feats = jnp.zeros((tb, F), jnp.float32)
    for rh in range(dims["oh3"]):
        for rw in range(dims["ow3"]):
            r = rh * dims["ow3"] + rw
            feats = feats + jnp.dot(h3[rh, rw],
                                    dw_ref[r * c3p:(r + 1) * c3p, :],
                                    preferred_element_type=jnp.float32)
    feats = feats + db_ref[...]                      # no activation after dense

    # CategoricalNetwork MLP head.
    h = jnp.dot(feats.astype(jnp.bfloat16), l1w_ref[...],
                preferred_element_type=jnp.float32) + l1b_ref[...]
    h = jnp.maximum(h, 0.0)
    h = jnp.dot(h.astype(jnp.bfloat16), l2w_ref[...],
                preferred_element_type=jnp.float32) + l2b_ref[...]
    h = jnp.maximum(h, 0.0)
    logits = jnp.dot(h.astype(jnp.bfloat16), ow_ref[...],
                     preferred_element_type=jnp.float32) + ob_ref[...]

    # Per-action softmax over a 128-lane-aligned atom group (padded atoms got
    # a -1e9 bias -> probability exactly 0).  Results are written straight to
    # lane-aligned o_ref slices (no concat temp); exact normalization so each
    # probability row sums to 1 to f32 accuracy.
    ap = dims["atoms_pad"]
    for a in range(dims["num_actions"]):
        lg = logits[:, a * ap:(a + 1) * ap]
        m = jnp.max(lg, axis=-1, keepdims=True)
        e = jnp.exp(lg - m)
        s = jnp.sum(e, axis=-1, keepdims=True)
        o_ref[:, a * ap:(a + 1) * ap] = (e * (1.0 / s)).astype(o_ref.dtype)


def fused_tail(x1, prep, *, dims, tb=16):
    """x1: conv1 activation (H1, W1, B, C1p) bf16 -> probs (B, A*atoms_pad)."""
    H1, W1, B, c1p = x1.shape
    nap = dims["num_actions"] * dims["atoms_pad"]
    Bp = _round_up(B, tb)
    if Bp != B:
        # tiny, batch-dim-only pad (zero cost when B % tb == 0).
        x1 = jnp.pad(x1, ((0, 0), (0, 0), (0, Bp - B), (0, 0)))
    kern = functools.partial(_tail_kernel, dims=dims)
    out = pl.pallas_call(
        kern,
        out_shape=jax.ShapeDtypeStruct((Bp, nap), jnp.float32),
        grid=(Bp // tb,),
        in_specs=[
            pl.BlockSpec((H1, W1, tb, c1p), lambda ib: (0, 0, ib, 0)),
            _resident_spec(prep["w2"].shape),
            _resident_spec(prep["b2"].shape),
            _resident_spec(prep["w3"].shape),
            _resident_spec(prep["b3"].shape),
            _resident_spec(prep["dw"].shape),
            _resident_spec(prep["db"].shape),
            _resident_spec(prep["l1w"].shape),
            _resident_spec(prep["l1b"].shape),
            _resident_spec(prep["l2w"].shape),
            _resident_spec(prep["l2b"].shape),
            _resident_spec(prep["ow"].shape),
            _resident_spec(prep["ob"].shape),
        ],
        out_specs=pl.BlockSpec((tb, nap), lambda ib: (ib, 0)),
        compiler_params=pltpu.CompilerParams(
            dimension_semantics=("parallel",),
            vmem_limit_bytes=_vmem_limit_bytes(),
        ),
    )(x1, prep["w2"], prep["b2"], prep["w3"], prep["b3"], prep["dw"],
      prep["db"], prep["l1w"], prep["l1b"], prep["l2w"], prep["l2b"],
      prep["ow"], prep["ob"])
    return out[:B] if Bp != B else out


# ---------------------------------------------------------------------------
# Parameter initialization (deterministic, PyTorch-style uniform(-k, k))
# ---------------------------------------------------------------------------
def _uniform(key, shape, fan_in):
    k = 1.0 / jnp.sqrt(jnp.asarray(fan_in, jnp.float32))
    return jax.random.uniform(key, shape, jnp.float32, -k, k)


def init_params(key, obs_shape, base_depth, feature_size, layer_size,
                num_actions, num_atoms):
    C = obs_shape[0]
    g = conv_geometry(obs_shape)
    keys = jax.random.split(key, 14)
    p = {}
    p["c1w"] = _uniform(keys[0], (base_depth, C, 8, 8), C * 8 * 8)
    p["c1b"] = _uniform(keys[1], (base_depth,), C * 8 * 8)
    p["c2w"] = _uniform(keys[2], (2 * base_depth, base_depth, 4, 4), base_depth * 4 * 4)
    p["c2b"] = _uniform(keys[3], (2 * base_depth,), base_depth * 4 * 4)
    p["c3w"] = _uniform(keys[4], (2 * base_depth, 2 * base_depth, 3, 3), 2 * base_depth * 3 * 3)
    p["c3b"] = _uniform(keys[5], (2 * base_depth,), 2 * base_depth * 3 * 3)
    conv_flat = 2 * base_depth * g["oh3"] * g["ow3"]     # torch NCHW flatten
    # linear weights stored transposed (in, out)
    p["dw"] = _uniform(keys[6], (conv_flat, feature_size), conv_flat)
    p["db"] = _uniform(keys[7], (feature_size,), conv_flat)
    p["l1w"] = _uniform(keys[8], (feature_size, layer_size), feature_size)
    p["l1b"] = _uniform(keys[9], (layer_size,), feature_size)
    p["l2w"] = _uniform(keys[10], (layer_size, layer_size), layer_size)
    p["l2b"] = _uniform(keys[11], (layer_size,), layer_size)
    p["ow"] = _uniform(keys[12], (layer_size, num_actions * num_atoms), layer_size)
    p["ob"] = _uniform(keys[13], (num_actions * num_atoms,), layer_size)
    return p


def prepare_params(params, obs_shape, num_actions, num_atoms):
    """One-time weight preprocessing (hoisted out of the per-step forward):
    bf16 casts, 128-lane channel padding, dense/out-layer row reordering, and
    the /255 observation scaling folded into conv1's weight."""
    g = conv_geometry(obs_shape)
    C = obs_shape[0]
    bd = params["c1b"].shape[0]
    c1, c2, c3 = bd, 2 * bd, 2 * bd
    c1p, c2p, c3p = (_round_up(c, 128) for c in (c1, c2, c3))
    ap = _round_up(num_atoms, 128)
    F = params["dw"].shape[1]
    L = params["l1w"].shape[1]

    p = {}
    w1 = (params["c1w"] / 255.0).transpose(2, 3, 1, 0).reshape(8 * 8 * C, c1)
    p["w1"] = jnp.pad(w1, ((0, 0), (0, c1p - c1))).astype(jnp.bfloat16)
    p["b1"] = jnp.pad(params["c1b"], (0, c1p - c1)).astype(jnp.float32).reshape(1, c1p)
    w2 = params["c2w"].transpose(2, 3, 1, 0)                    # (4,4,c1,c2)
    w2 = jnp.pad(w2, ((0, 0), (0, 0), (0, c1p - c1), (0, c2p - c2)))
    p["w2"] = w2.reshape(4 * 4 * c1p, c2p).astype(jnp.bfloat16)
    p["b2"] = jnp.pad(params["c2b"], (0, c2p - c2)).astype(jnp.float32).reshape(1, c2p)
    w3 = params["c3w"].transpose(2, 3, 1, 0)
    w3 = jnp.pad(w3, ((0, 0), (0, 0), (0, c2p - c2), (0, c3p - c3)))
    p["w3"] = w3.reshape(3 * 3 * c2p, c3p).astype(jnp.bfloat16)
    p["b3"] = jnp.pad(params["c3b"], (0, c3p - c3)).astype(jnp.float32).reshape(1, c3p)
    # dense: torch flattens conv3 output in (c, h, w) order -> reorder rows to
    # (h, w, c_pad) so the fused kernel consumes the HWBC activation directly.
    dw = params["dw"].reshape(c3, g["oh3"], g["ow3"], F).transpose(1, 2, 0, 3)
    dw = jnp.pad(dw, ((0, 0), (0, 0), (0, c3p - c3), (0, 0)))
    p["dw"] = dw.reshape(g["oh3"] * g["ow3"] * c3p, F).astype(jnp.bfloat16)
    p["db"] = params["db"].astype(jnp.float32).reshape(1, F)
    p["l1w"] = params["l1w"].astype(jnp.bfloat16)
    p["l1b"] = params["l1b"].astype(jnp.float32).reshape(1, L)
    p["l2w"] = params["l2w"].astype(jnp.bfloat16)
    p["l2b"] = params["l2b"].astype(jnp.float32).reshape(1, L)
    # out layer: pad atoms to a full 128-lane group per action; padded lanes
    # carry a -1e9 bias so the fused softmax gives them probability 0.
    ow = params["ow"].reshape(L, num_actions, num_atoms)
    ow = jnp.pad(ow, ((0, 0), (0, 0), (0, ap - num_atoms)))
    p["ow"] = ow.reshape(L, num_actions * ap).astype(jnp.bfloat16)
    ob = params["ob"].reshape(num_actions, num_atoms)
    ob = jnp.pad(ob, ((0, 0), (0, ap - num_atoms)), constant_values=-1e9)
    p["ob"] = ob.astype(jnp.float32).reshape(1, num_actions * ap)
    return p


# ---------------------------------------------------------------------------
# CategoricalAgent.forward
# ---------------------------------------------------------------------------
def categorical_agent_forward(obs, prep, *, num_actions, num_atoms, obs_shape):
    g = conv_geometry(obs_shape)
    # FeatureExtractor.format_obs: /255 (folded into conv1's weight) + float;
    # add the batch dim for unbatched observations.
    x = obs.astype(jnp.bfloat16)
    if x.ndim == 3:
        x = x[None]
    B = x.shape[0]
    x = jnp.transpose(x, (2, 3, 0, 1))                 # NCHW -> (H, W, B, C)

    # conv1: bf16 XLA im2col (rows ordered (oh, ow, b)) + one Pallas matmul.
    oh1, ow1 = g["oh1"], g["ow1"]
    cols = []
    for i in range(8):
        for j in range(8):
            cols.append(x[i:i + 4 * oh1:4, j:j + 4 * ow1:4])   # (oh1, ow1, B, C)
    col = jnp.concatenate(cols, axis=-1).reshape(oh1 * ow1 * B, -1)
    c1p = prep["w1"].shape[1]
    x1 = tiled_matmul_bias_relu(col, prep["w1"], prep["b1"])   # bf16
    x1 = x1.reshape(oh1, ow1, B, c1p)                          # HWBC (metadata)
    if g["h1_used"] != oh1 or g["w1_used"] != ow1:
        x1 = x1[:g["h1_used"], :g["w1_used"]]

    # conv2 + conv3 + dense + MLP head + softmax: one fused kernel.
    ap = _round_up(num_atoms, 128)
    dims = dict(kh2=4, kw2=4, s2=2, oh2=g["oh2"], ow2=g["ow2"],
                kh3=3, kw3=3, oh3=g["oh3"], ow3=g["ow3"],
                num_actions=num_actions, atoms_pad=ap)
    probs = fused_tail(x1, prep, dims=dims)
    return probs.reshape(B, num_actions, ap)[:, :, :num_atoms]


if __name__ == "__main__":
    # Small but conv-consistent shapes: (C,H,W)=(3,36,36) -> conv out 1x1.
    obs_shape = (3, 36, 36)
    batch = 2
    base_depth = 8
    feature_size = 32
    layer_size = 32
    num_actions = 4
    num_atoms = 51

    key = jax.random.PRNGKey(0)
    pkey, okey = jax.random.split(key)
    params = init_params(pkey, obs_shape, base_depth, feature_size,
                         layer_size, num_actions, num_atoms)
    # one-time weight layout prep, hoisted out of the per-step forward
    prep = prepare_params(params, obs_shape, num_actions, num_atoms)

    obs = jax.random.uniform(okey, (batch,) + obs_shape, jnp.float32, 0.0, 255.0)

    fwd = jax.jit(functools.partial(categorical_agent_forward,
                                    num_actions=num_actions,
                                    num_atoms=num_atoms,
                                    obs_shape=obs_shape))
    out = fwd(obs, prep)
    out = jax.block_until_ready(out)

    assert out.shape == (batch, num_actions, num_atoms)
    # probability rows sum to 1 (exact softmax normalization in-kernel)
    assert jnp.allclose(jnp.sum(out, axis=-1), 1.0, atol=1e-3)
    assert bool(jnp.all(out >= 0.0))
    print("KERNEL_OK")
</pallas_src>

<mosaic_0001>
module attributes {stable_mosaic.version = 11 : i64} {
  func.func @_matmul_bias_relu_kernel(%arg0: i32, %arg1: memref<64x192xbf16, #tpu.memory_space<vmem>>, %arg2: memref<192x128xbf16, #tpu.memory_space<vmem>>, %arg3: memref<1x128xf32, #tpu.memory_space<vmem>>, %arg4: memref<64x128xbf16, #tpu.memory_space<vmem>>) attributes {dimension_semantics = [#tpu.dimension_semantics<parallel>], iteration_bounds = array<i64: 2>, scalar_prefetch = 0 : i64, scratch_operands = 0 : i64, tpu.core_type = #tpu.core_type<tc>, window_params = [{transform_indices = @transform_0, window_bounds = array<i64: 64, 192>}, {pipeline_mode = #tpu.pipeline_mode<synchronous>, transform_indices = @transform_1, window_bounds = array<i64: 192, 128>}, {pipeline_mode = #tpu.pipeline_mode<synchronous>, transform_indices = @transform_2, window_bounds = array<i64: 1, 128>}, {transform_indices = @transform_3, window_bounds = array<i64: 64, 128>}]} {
    %c0 = arith.constant 0 : index
    %c0_0 = arith.constant 0 : index
    %0 = vector.load %arg1[%c0, %c0_0] : memref<64x192xbf16, #tpu.memory_space<vmem>>, vector<64x192xbf16>
    %c0_1 = arith.constant 0 : index
    %c0_2 = arith.constant 0 : index
    %1 = vector.load %arg2[%c0_1, %c0_2] : memref<192x128xbf16, #tpu.memory_space<vmem>>, vector<192x128xbf16>
    %cst = arith.constant dense<0.000000e+00> : vector<64x128xf32>
    %2 = tpu.matmul %0, %1, %cst {dimension_numbers = #tpu.dot_dimension_numbers<[1], [0], [0], [1], [0, 0, 1, 1], [], []>} : vector<64x192xbf16>, vector<192x128xbf16>, vector<64x128xf32> -> vector<64x128xf32>
    %c0_3 = arith.constant 0 : index
    %c0_4 = arith.constant 0 : index
    %3 = vector.load %arg3[%c0_3, %c0_4] : memref<1x128xf32, #tpu.memory_space<vmem>>, vector<1x128xf32>
    %4 = vector.broadcast %3 : vector<1x128xf32> to vector<64x128xf32>
    %5 = arith.addf %2, %4 : vector<64x128xf32>
    %cst_5 = arith.constant 0.000000e+00 : f32
    %6 = vector.broadcast %cst_5 : f32 to vector<64x128xf32>
    %7 = arith.maximumf %5, %6 : vector<64x128xf32>
    %8 = arith.truncf %7 : vector<64x128xf32> to vector<64x128xbf16>
    %c0_6 = arith.constant 0 : index
    %c0_7 = arith.constant 0 : index
    %9 = vector.load %arg4[%c0_6, %c0_7] : memref<64x128xbf16, #tpu.memory_space<vmem>>, vector<64x128xbf16>
    tpu.vector_store %arg4[%c0_6, %c0_7], %8 {strides = array<i32>} : memref<64x128xbf16, #tpu.memory_space<vmem>>, vector<64x128xbf16>,
    return
  }
  func.func @transform_0(%arg0: i32) -> (i32, i32) {
    %c0_i32 = arith.constant 0 : i32
    %c0_i32_0 = arith.constant 0 : i32
    return %arg0, %c0_i32 : i32, i32
  }
  func.func @transform_1(%arg0: i32) -> (i32, i32) {
    %c0_i32 = arith.constant 0 : i32
    %c0_i32_0 = arith.constant 0 : i32
    %c0_i32_1 = arith.constant 0 : i32
    return %c0_i32, %c0_i32_0 : i32, i32
  }
  func.func @transform_2(%arg0: i32) -> (i32, i32) {
    %c0_i32 = arith.constant 0 : i32
    %c0_i32_0 = arith.constant 0 : i32
    %c0_i32_1 = arith.constant 0 : i32
    return %c0_i32, %c0_i32_0 : i32, i32
  }
  func.func @transform_3(%arg0: i32) -> (i32, i32) {
    %c0_i32 = arith.constant 0 : i32
    %c0_i32_0 = arith.constant 0 : i32
    return %arg0, %c0_i32 : i32, i32
  }
}

module attributes {stable_mosaic.version = 11 : i64} {
  func.func @_tail_kernel(%arg0: i32, %arg1: memref<8x8x16x128xbf16, #tpu.memory_space<vmem>>, %arg2: memref<2048x128xbf16, #tpu.memory_space<vmem>>, %arg3: memref<1x128xf32, #tpu.memory_space<vmem>>, %arg4: memref<1152x128xbf16, #tpu.memory_space<vmem>>, %arg5: memref<1x128xf32, #tpu.memory_space<vmem>>, %arg6: memref<128x32xbf16, #tpu.memory_space<vmem>>, %arg7: memref<1x32xf32, #tpu.memory_space<vmem>>, %arg8: memref<32x32xbf16, #tpu.memory_space<vmem>>, %arg9: memref<1x32xf32, #tpu.memory_space<vmem>>, %arg10: memref<32x32xbf16, #tpu.memory_space<vmem>>, %arg11: memref<1x32xf32, #tpu.memory_space<vmem>>, %arg12: memref<32x512xbf16, #tpu.memory_space<vmem>>, %arg13: memref<1x512xf32, #tpu.memory_space<vmem>>, %arg14: memref<16x512xf32, #tpu.memory_space<vmem>>) attributes {dimension_semantics = [#tpu.dimension_semantics<parallel>], iteration_bounds = array<i64: 1>, scalar_prefetch = 0 : i64, scratch_operands = 0 : i64, tpu.core_type = #tpu.core_type<tc>, window_params = [{transform_indices = @transform_0, window_bounds = array<i64: 8, 8, 16, 128>}, {pipeline_mode = #tpu.pipeline_mode<synchronous>, transform_indices = @transform_1, window_bounds = array<i64: 2048, 128>}, {pipeline_mode = #tpu.pipeline_mode<synchronous>, transform_indices = @transform_2, window_bounds = array<i64: 1, 128>}, {pipeline_mode = #tpu.pipeline_mode<synchronous>, transform_indices = @transform_3, window_bounds = array<i64: 1152, 128>}, {pipeline_mode = #tpu.pipeline_mode<synchronous>, transform_indices = @transform_4, window_bounds = array<i64: 1, 128>}, {pipeline_mode = #tpu.pipeline_mode<synchronous>, transform_indices = @transform_5, window_bounds = array<i64: 128, 32>}, {pipeline_mode = #tpu.pipeline_mode<synchronous>, transform_indices = @transform_6, window_bounds = array<i64: 1, 32>}, {pipeline_mode = #tpu.pipeline_mode<synchronous>, transform_indices = @transform_7, window_bounds = array<i64: 32, 32>}, {pipeline_mode = #tpu.pipeline_mode<synchronous>, transform_indices = @transform_8, window_bounds = array<i64: 1, 32>}, {pipeline_mode = #tpu.pipeline_mode<synchronous>, transform_indices = @transform_9, window_bounds = array<i64: 32, 32>}, {pipeline_mode = #tpu.pipeline_mode<synchronous>, transform_indices = @transform_10, window_bounds = array<i64: 1, 32>}, {pipeline_mode = #tpu.pipeline_mode<synchronous>, transform_indices = @transform_11, window_bounds = array<i64: 32, 512>}, {pipeline_mode = #tpu.pipeline_mode<synchronous>, transform_indices = @transform_12, window_bounds = array<i64: 1, 512>}, {transform_indices = @transform_13, window_bounds = array<i64: 16, 512>}]} {
    %c0 = arith.constant 0 : index
    %c0_0 = arith.constant 0 : index
    %c0_1 = arith.constant 0 : index
    %c0_2 = arith.constant 0 : index
    %0 = vector.load %arg1[%c0, %c0_0, %c0_1, %c0_2] : memref<8x8x16x128xbf16, #tpu.memory_space<vmem>>, vector<8x8x16x128xbf16>
    %1 = vector.shape_cast %0 : vector<8x8x16x128xbf16> to vector<4x2x4x2x16x128xbf16>
    %cst = arith.constant 0.000000e+00 : f32
    %2 = vector.broadcast %cst : f32 to vector<144x128xf32>
    %3 = vector.extract_strided_slice %1 {offsets = [0, 0, 0, 0, 0, 0], sizes = [3, 1, 3, 1, 16, 128], strides = [1, 1, 1, 1, 1, 1]} : vector<4x2x4x2x16x128xbf16> to vector<3x1x3x1x16x128xbf16>
    %4 = vector.shape_cast %3 : vector<3x1x3x1x16x128xbf16> to vector<3x3x16x128xbf16>
    %c0_3 = arith.constant 0 : index
    %c0_4 = arith.constant 0 : index
    %5 = vector.load %arg2[%c0_3, %c0_4] : memref<2048x128xbf16, #tpu.memory_space<vmem>>, vector<128x128xbf16>
    %6 = vector.shape_cast %4 : vector<3x3x16x128xbf16> to vector<144x128xbf16>
    %cst_5 = arith.constant dense<0.000000e+00> : vector<144x128xf32>
    %7 = tpu.matmul %6, %5, %cst_5 {dimension_numbers = #tpu.dot_dimension_numbers<[1], [0], [0], [1], [0, 0, 1, 1], [], []>} : vector<144x128xbf16>, vector<128x128xbf16>, vector<144x128xf32> -> vector<144x128xf32>
    %8 = arith.addf %2, %7 : vector<144x128xf32>
    %9 = vector.extract_strided_slice %1 {offsets = [0, 0, 0, 1, 0, 0], sizes = [3, 1, 3, 1, 16, 128], strides = [1, 1, 1, 1, 1, 1]} : vector<4x2x4x2x16x128xbf16> to vector<3x1x3x1x16x128xbf16>
    %10 = vector.shape_cast %9 : vector<3x1x3x1x16x128xbf16> to vector<3x3x16x128xbf16>
    %c128 = arith.constant 128 : index
    %c0_6 = arith.constant 0 : index
    %11 = vector.load %arg2[%c128, %c0_6] : memref<2048x128xbf16, #tpu.memory_space<vmem>>, vector<128x128xbf16>
    %12 = vector.shape_cast %10 : vector<3x3x16x128xbf16> to vector<144x128xbf16>
    %cst_7 = arith.constant dense<0.000000e+00> : vector<144x128xf32>
    %13 = tpu.matmul %12, %11, %cst_7 {dimension_numbers = #tpu.dot_dimension_numbers<[1], [0], [0], [1], [0, 0, 1, 1], [], []>} : vector<144x128xbf16>, vector<128x128xbf16>, vector<144x128xf32> -> vector<144x128xf32>
    %14 = arith.addf %8, %13 : vector<144x128xf32>
    %15 = vector.extract_strided_slice %1 {offsets = [0, 0, 1, 0, 0, 0], sizes = [3, 1, 3, 1, 16, 128], strides = [1, 1, 1, 1, 1, 1]} : vector<4x2x4x2x16x128xbf16> to vector<3x1x3x1x16x128xbf16>
    %16 = vector.shape_cast %15 : vector<3x1x3x1x16x128xbf16> to vector<3x3x16x128xbf16>
    %c256 = arith.constant 256 : index
    %c0_8 = arith.constant 0 : index
    %17 = vector.load %arg2[%c256, %c0_8] : memref<2048x128xbf16, #tpu.memory_space<vmem>>, vector<128x128xbf16>
    %18 = vector.shape_cast %16 : vector<3x3x16x128xbf16> to vector<144x128xbf16>
    %cst_9 = arith.constant dense<0.000000e+00> : vector<144x128xf32>
    %19 = tpu.matmul %18, %17, %cst_9 {dimension_numbers = #tpu.dot_dimension_numbers<[1], [0], [0], [1], [0, 0, 1, 1], [], []>} : vector<144x128xbf16>, vector<128x128xbf16>, vector<144x128xf32> -> vector<144x128xf32>
    %20 = arith.addf %14, %19 : vector<144x128xf32>
    %21 = vector.extract_strided_slice %1 {offsets = [0, 0, 1, 1, 0, 0], sizes = [3, 1, 3, 1, 16, 128], strides = [1, 1, 1, 1, 1, 1]} : vector<4x2x4x2x16x128xbf16> to vector<3x1x3x1x16x128xbf16>
    %22 = vector.shape_cast %21 : vector<3x1x3x1x16x128xbf16> to vector<3x3x16x128xbf16>
    %c384 = arith.constant 384 : index
    %c0_10 = arith.constant 0 : index
    %23 = vector.load %arg2[%c384, %c0_10] : memref<2048x128xbf16, #tpu.memory_space<vmem>>, vector<128x128xbf16>
    %24 = vector.shape_cast %22 : vector<3x3x16x128xbf16> to vector<144x128xbf16>
    %cst_11 = arith.constant dense<0.000000e+00> : vector<144x128xf32>
    %25 = tpu.matmul %24, %23, %cst_11 {dimension_numbers = #tpu.dot_dimension_numbers<[1], [0], [0], [1], [0, 0, 1, 1], [], []>} : vector<144x128xbf16>, vector<128x128xbf16>, vector<144x128xf32> -> vector<144x128xf32>
    %26 = arith.addf %20, %25 : vector<144x128xf32>
    %27 = vector.extract_strided_slice %1 {offsets = [0, 1, 0, 0, 0, 0], sizes = [3, 1, 3, 1, 16, 128], strides = [1, 1, 1, 1, 1, 1]} : vector<4x2x4x2x16x128xbf16> to vector<3x1x3x1x16x128xbf16>
    %28 = vector.shape_cast %27 : vector<3x1x3x1x16x128xbf16> to vector<3x3x16x128xbf16>
    %c512 = arith.constant 512 : index
    %c0_12 = arith.constant 0 : index
    %29 = vector.load %arg2[%c512, %c0_12] : memref<2048x128xbf16, #tpu.memory_space<vmem>>, vector<128x128xbf16>
    %30 = vector.shape_cast %28 : vector<3x3x16x128xbf16> to vector<144x128xbf16>
    %cst_13 = arith.constant dense<0.000000e+00> : vector<144x128xf32>
    %31 = tpu.matmul %30, %29, %cst_13 {dimension_numbers = #tpu.dot_dimension_numbers<[1], [0], [0], [1], [0, 0, 1, 1], [], []>} : vector<144x128xbf16>, vector<128x128xbf16>, vector<144x128xf32> -> vector<144x128xf32>
    %32 = arith.addf %26, %31 : vector<144x128xf32>
    %33 = vector.extract_strided_slice %1 {offsets = [0, 1, 0, 1, 0, 0], sizes = [3, 1, 3, 1, 16, 128], strides = [1, 1, 1, 1, 1, 1]} : vector<4x2x4x2x16x128xbf16> to vector<3x1x3x1x16x128xbf16>
    %34 = vector.shape_cast %33 : vector<3x1x3x1x16x128xbf16> to vector<3x3x16x128xbf16>
    %c640 = arith.constant 640 : index
    %c0_14 = arith.constant 0 : index
    %35 = vector.load %arg2[%c640, %c0_14] : memref<2048x128xbf16, #tpu.memory_space<vmem>>, vector<128x128xbf16>
    %36 = vector.shape_cast %34 : vector<3x3x16x128xbf16> to vector<144x128xbf16>
    %cst_15 = arith.constant dense<0.000000e+00> : vector<144x128xf32>
    %37 = tpu.matmul %36, %35, %cst_15 {dimension_numbers = #tpu.dot_dimension_numbers<[1], [0], [0], [1], [0, 0, 1, 1], [], []>} : vector<144x128xbf16>, vector<128x128xbf16>, vector<144x128xf32> -> vector<144x128xf32>
    %38 = arith.addf %32, %37 : vector<144x128xf32>
    %39 = vector.extract_strided_slice %1 {offsets = [0, 1, 1, 0, 0, 0], sizes = [3, 1, 3, 1, 16, 128], strides = [1, 1, 1, 1, 1, 1]} : vector<4x2x4x2x16x128xbf16> to vector<3x1x3x1x16x128xbf16>
    %40 = vector.shape_cast %39 : vector<3x1x3x1x16x128xbf16> to vector<3x3x16x128xbf16>
    %c768 = arith.constant 768 : index
    %c0_16 = arith.constant 0 : index
    %41 = vector.load %arg2[%c768, %c0_16] : memref<2048x128xbf16, #tpu.memory_space<vmem>>, vector<128x128xbf16>
    %42 = vector.shape_cast %40 : vector<3x3x16x128xbf16> to vector<144x128xbf16>
    %cst_17 = arith.constant dense<0.000000e+00> : vector<144x128xf32>
    %43 = tpu.matmul %42, %41, %cst_17 {dimension_numbers = #tpu.dot_dimension_numbers<[1], [0], [0], [1], [0, 0, 1, 1], [], []>} : vector<144x128xbf16>, vector<128x128xbf16>, vector<144x128xf32> -> vector<144x128xf32>
    %44 = arith.addf %38, %43 : vector<144x128xf32>
    %45 = vector.extract_strided_slice %1 {offsets = [0, 1, 1, 1, 0, 0], sizes = [3, 1, 3, 1, 16, 128], strides = [1, 1, 1, 1, 1, 1]} : vector<4x2x4x2x16x128xbf16> to vector<3x1x3x1x16x128xbf16>
    %46 = vector.shape_cast %45 : vector<3x1x3x1x16x128xbf16> to vector<3x3x16x128xbf16>
    %c896 = arith.constant 896 : index
    %c0_18 = arith.constant 0 : index
    %47 = vector.load %arg2[%c896, %c0_18] : memref<2048x128xbf16, #tpu.memory_space<vmem>>, vector<128x128xbf16>
    %48 = vector.shape_cast %46 : vector<3x3x16x128xbf16> to vector<144x128xbf16>
    %cst_19 = arith.constant dense<0.000000e+00> : vector<144x128xf32>
    %49 = tpu.matmul %48, %47, %cst_19 {dimension_numbers = #tpu.dot_dimension_numbers<[1], [0], [0], [1], [0, 0, 1, 1], [], []>} : vector<144x128xbf16>, vector<128x128xbf16>, vector<144x128xf32> -> vector<144x128xf32>
    %50 = arith.addf %44, %49 : vector<144x128xf32>
    %51 = vector.extract_strided_slice %1 {offsets = [1, 0, 0, 0, 0, 0], sizes = [3, 1, 3, 1, 16, 128], strides = [1, 1, 1, 1, 1, 1]} : vector<4x2x4x2x16x128xbf16> to vector<3x1x3x1x16x128xbf16>
    %52 = vector.shape_cast %51 : vector<3x1x3x1x16x128xbf16> to vector<3x3x16x128xbf16>
    %c1024 = arith.constant 1024 : index
    %c0_20 = arith.constant 0 : index
    %53 = vector.load %arg2[%c1024, %c0_20] : memref<2048x128xbf16, #tpu.memory_space<vmem>>, vector<128x128xbf16>
    %54 = vector.shape_cast %52 : vector<3x3x16x128xbf16> to vector<144x128xbf16>
    %cst_21 = arith.constant dense<0.000000e+00> : vector<144x128xf32>
    %55 = tpu.matmul %54, %53, %cst_21 {dimension_numbers = #tpu.dot_dimension_numbers<[1], [0], [0], [1], [0, 0, 1, 1], [], []>} : vector<144x128xbf16>, vector<128x128xbf16>, vector<144x128xf32> -> vector<144x128xf32>
    %56 = arith.addf %50, %55 : vector<144x128xf32>
    %57 = vector.extract_strided_slice %1 {offsets = [1, 0, 0, 1, 0, 0], sizes = [3, 1, 3, 1, 16, 128], strides = [1, 1, 1, 1, 1, 1]} : vector<4x2x4x2x16x128xbf16> to vector<3x1x3x1x16x128xbf16>
    %58 = vector.shape_cast %57 : vector<3x1x3x1x16x128xbf16> to vector<3x3x16x128xbf16>
    %c1152 = arith.constant 1152 : index
    %c0_22 = arith.constant 0 : index
    %59 = vector.load %arg2[%c1152, %c0_22] : memref<2048x128xbf16, #tpu.memory_space<vmem>>, vector<128x128xbf16>
    %60 = vector.shape_cast %58 : vector<3x3x16x128xbf16> to vector<144x128xbf16>
    %cst_23 = arith.constant dense<0.000000e+00> : vector<144x128xf32>
    %61 = tpu.matmul %60, %59, %cst_23 {dimension_numbers = #tpu.dot_dimension_numbers<[1], [0], [0], [1], [0, 0, 1, 1], [], []>} : vector<144x128xbf16>, vector<128x128xbf16>, vector<144x128xf32> -> vector<144x128xf32>
    %62 = arith.addf %56, %61 : vector<144x128xf32>
    %63 = vector.extract_strided_slice %1 {offsets = [1, 0, 1, 0, 0, 0], sizes = [3, 1, 3, 1, 16, 128], strides = [1, 1, 1, 1, 1, 1]} : vector<4x2x4x2x16x128xbf16> to vector<3x1x3x1x16x128xbf16>
    %64 = vector.shape_cast %63 : vector<3x1x3x1x16x128xbf16> to vector<3x3x16x128xbf16>
    %c1280 = arith.constant 1280 : index
    %c0_24 = arith.constant 0 : index
    %65 = vector.load %arg2[%c1280, %c0_24] : memref<2048x128xbf16, #tpu.memory_space<vmem>>, vector<128x128xbf16>
    %66 = vector.shape_cast %64 : vector<3x3x16x128xbf16> to vector<144x128xbf16>
    %cst_25 = arith.constant dense<0.000000e+00> : vector<144x128xf32>
    %67 = tpu.matmul %66, %65, %cst_25 {dimension_numbers = #tpu.dot_dimension_numbers<[1], [0], [0], [1], [0, 0, 1, 1], [], []>} : vector<144x128xbf16>, vector<128x128xbf16>, vector<144x128xf32> -> vector<144x128xf32>
    %68 = arith.addf %62, %67 : vector<144x128xf32>
    %69 = vector.extract_strided_slice %1 {offsets = [1, 0, 1, 1, 0, 0], sizes = [3, 1, 3, 1, 16, 128], strides = [1, 1, 1, 1, 1, 1]} : vector<4x2x4x2x16x128xbf16> to vector<3x1x3x1x16x128xbf16>
    %70 = vector.shape_cast %69 : vector<3x1x3x1x16x128xbf16> to vector<3x3x16x128xbf16>
    %c1408 = arith.constant 1408 : index
    %c0_26 = arith.constant 0 : index
    %71 = vector.load %arg2[%c1408, %c0_26] : memref<2048x128xbf16, #tpu.memory_space<vmem>>, vector<128x128xbf16>
    %72 = vector.shape_cast %70 : vector<3x3x16x128xbf16> to vector<144x128xbf16>
    %cst_27 = arith.constant dense<0.000000e+00> : vector<144x128xf32>
    %73 = tpu.matmul %72, %71, %cst_27 {dimension_numbers = #tpu.dot_dimension_numbers<[1], [0], [0], [1], [0, 0, 1, 1], [], []>} : vector<144x128xbf16>, vector<128x128xbf16>, vector<144x128xf32> -> vector<144x128xf32>
    %74 = arith.addf %68, %73 : vector<144x128xf32>
    %75 = vector.extract_strided_slice %1 {offsets = [1, 1, 0, 0, 0, 0], sizes = [3, 1, 3, 1, 16, 128], strides = [1, 1, 1, 1, 1, 1]} : vector<4x2x4x2x16x128xbf16> to vector<3x1x3x1x16x128xbf16>
    %76 = vector.shape_cast %75 : vector<3x1x3x1x16x128xbf16> to vector<3x3x16x128xbf16>
    %c1536 = arith.constant 1536 : index
    %c0_28 = arith.constant 0 : index
    %77 = vector.load %arg2[%c1536, %c0_28] : memref<2048x128xbf16, #tpu.memory_space<vmem>>, vector<128x128xbf16>
    %78 = vector.shape_cast %76 : vector<3x3x16x128xbf16> to vector<144x128xbf16>
    %cst_29 = arith.constant dense<0.000000e+00> : vector<144x128xf32>
    %79 = tpu.matmul %78, %77, %cst_29 {dimension_numbers = #tpu.dot_dimension_numbers<[1], [0], [0], [1], [0, 0, 1, 1], [], []>} : vector<144x128xbf16>, vector<128x128xbf16>, vector<144x128xf32> -> vector<144x128xf32>
    %80 = arith.addf %74, %79 : vector<144x128xf32>
    %81 = vector.extract_strided_slice %1 {offsets = [1, 1, 0, 1, 0, 0], sizes = [3, 1, 3, 1, 16, 128], strides = [1, 1, 1, 1, 1, 1]} : vector<4x2x4x2x16x128xbf16> to vector<3x1x3x1x16x128xbf16>
    %82 = vector.shape_cast %81 : vector<3x1x3x1x16x128xbf16> to vector<3x3x16x128xbf16>
    %c1664 = arith.constant 1664 : index
    %c0_30 = arith.constant 0 : index
    %83 = vector.load %arg2[%c1664, %c0_30] : memref<2048x128xbf16, #tpu.memory_space<vmem>>, vector<128x128xbf16>
    %84 = vector.shape_cast %82 : vector<3x3x16x128xbf16> to vector<144x128xbf16>
    %cst_31 = arith.constant dense<0.000000e+00> : vector<144x128xf32>
    %85 = tpu.matmul %84, %83, %cst_31 {dimension_numbers = #tpu.dot_dimension_numbers<[1], [0], [0], [1], [0, 0, 1, 1], [], []>} : vector<144x128xbf16>, vector<128x128xbf16>, vector<144x128xf32> -> vector<144x128xf32>
    %86 = arith.addf %80, %85 : vector<144x128xf32>
    %87 = vector.extract_strided_slice %1 {offsets = [1, 1, 1, 0, 0, 0], sizes = [3, 1, 3, 1, 16, 128], strides = [1, 1, 1, 1, 1, 1]} : vector<4x2x4x2x16x128xbf16> to vector<3x1x3x1x16x128xbf16>
    %88 = vector.shape_cast %87 : vector<3x1x3x1x16x128xbf16> to vector<3x3x16x128xbf16>
    %c1792 = arith.constant 1792 : index
    %c0_32 = arith.constant 0 : index
    %89 = vector.load %arg2[%c1792, %c0_32] : memref<2048x128xbf16, #tpu.memory_space<vmem>>, vector<128x128xbf16>
    %90 = vector.shape_cast %88 : vector<3x3x16x128xbf16> to vector<144x128xbf16>
    %cst_33 = arith.constant dense<0.000000e+00> : vector<144x128xf32>
    %91 = tpu.matmul %90, %89, %cst_33 {dimension_numbers = #tpu.dot_dimension_numbers<[1], [0], [0], [1], [0, 0, 1, 1], [], []>} : vector<144x128xbf16>, vector<128x128xbf16>, vector<144x128xf32> -> vector<144x128xf32>
    %92 = arith.addf %86, %91 : vector<144x128xf32>
    %93 = vector.extract_strided_slice %1 {offsets = [1, 1, 1, 1, 0, 0], sizes = [3, 1, 3, 1, 16, 128], strides = [1, 1, 1, 1, 1, 1]} : vector<4x2x4x2x16x128xbf16> to vector<3x1x3x1x16x128xbf16>
    %94 = vector.shape_cast %93 : vector<3x1x3x1x16x128xbf16> to vector<3x3x16x128xbf16>
    %c1920 = arith.constant 1920 : index
    %c0_34 = arith.constant 0 : index
    %95 = vector.load %arg2[%c1920, %c0_34] : memref<2048x128xbf16, #tpu.memory_space<vmem>>, vector<128x128xbf16>
    %96 = vector.shape_cast %94 : vector<3x3x16x128xbf16> to vector<144x128xbf16>
    %cst_35 = arith.constant dense<0.000000e+00> : vector<144x128xf32>
    %97 = tpu.matmul %96, %95, %cst_35 {dimension_numbers = #tpu.dot_dimension_numbers<[1], [0], [0], [1], [0, 0, 1, 1], [], []>} : vector<144x128xbf16>, vector<128x128xbf16>, vector<144x128xf32> -> vector<144x128xf32>
    %98 = arith.addf %92, %97 : vector<144x128xf32>
    %c0_36 = arith.constant 0 : index
    %c0_37 = arith.constant 0 : index
    %99 = vector.load %arg3[%c0_36, %c0_37] : memref<1x128xf32, #tpu.memory_space<vmem>>, vector<1x128xf32>
    %100 = vector.broadcast %99 : vector<1x128xf32> to vector<144x128xf32>
    %101 = arith.addf %98, %100 : vector<144x128xf32>
    %cst_38 = arith.constant 0.000000e+00 : f32
    %102 = vector.broadcast %cst_38 : f32 to vector<144x128xf32>
    %103 = arith.maximumf %101, %102 : vector<144x128xf32>
    %104 = arith.truncf %103 : vector<144x128xf32> to vector<144x128xbf16>
    %105 = vector.shape_cast %104 : vector<144x128xbf16> to vector<3x3x16x128xbf16>
    %cst_39 = arith.constant 0.000000e+00 : f32
    %106 = vector.broadcast %cst_39 : f32 to vector<16x128xf32>
    %107 = vector.extract_strided_slice %105 {offsets = [0, 0, 0, 0], sizes = [1, 1, 16, 128], strides = [1, 1, 1, 1]} : vector<3x3x16x128xbf16> to vector<1x1x16x128xbf16>
    %c0_40 = arith.constant 0 : index
    %c0_41 = arith.constant 0 : index
    %108 = vector.load %arg4[%c0_40, %c0_41] : memref<1152x128xbf16, #tpu.memory_space<vmem>>, vector<128x128xbf16>
    %109 = vector.shape_cast %107 : vector<1x1x16x128xbf16> to vector<16x128xbf16>
    %cst_42 = arith.constant dense<0.000000e+00> : vector<16x128xf32>
    %110 = tpu.matmul %109, %108, %cst_42 {dimension_numbers = #tpu.dot_dimension_numbers<[1], [0], [0], [1], [0, 0, 1, 1], [], []>} : vector<16x128xbf16>, vector<128x128xbf16>, vector<16x128xf32> -> vector<16x128xf32>
    %111 = arith.addf %106, %110 : vector<16x128xf32>
    %112 = vector.extract_strided_slice %105 {offsets = [0, 1, 0, 0], sizes = [1, 1, 16, 128], strides = [1, 1, 1, 1]} : vector<3x3x16x128xbf16> to vector<1x1x16x128xbf16>
    %c128_43 = arith.constant 128 : index
    %c0_44 = arith.constant 0 : index
    %113 = vector.load %arg4[%c128_43, %c0_44] : memref<1152x128xbf16, #tpu.memory_space<vmem>>, vector<128x128xbf16>
    %114 = vector.shape_cast %112 : vector<1x1x16x128xbf16> to vector<16x128xbf16>
    %cst_45 = arith.constant dense<0.000000e+00> : vector<16x128xf32>
    %115 = tpu.matmul %114, %113, %cst_45 {dimension_numbers = #tpu.dot_dimension_numbers<[1], [0], [0], [1], [0, 0, 1, 1], [], []>} : vector<16x128xbf16>, vector<128x128xbf16>, vector<16x128xf32> -> vector<16x128xf32>
    %116 = arith.addf %111, %115 : vector<16x128xf32>
    %117 = vector.extract_strided_slice %105 {offsets = [0, 2, 0, 0], sizes = [1, 1, 16, 128], strides = [1, 1, 1, 1]} : vector<3x3x16x128xbf16> to vector<1x1x16x128xbf16>
    %c256_46 = arith.constant 256 : index
    %c0_47 = arith.constant 0 : index
    %118 = vector.load %arg4[%c256_46, %c0_47] : memref<1152x128xbf16, #tpu.memory_space<vmem>>, vector<128x128xbf16>
    %119 = vector.shape_cast %117 : vector<1x1x16x128xbf16> to vector<16x128xbf16>
    %cst_48 = arith.constant dense<0.000000e+00> : vector<16x128xf32>
    %120 = tpu.matmul %119, %118, %cst_48 {dimension_numbers = #tpu.dot_dimension_numbers<[1], [0], [0], [1], [0, 0, 1, 1], [], []>} : vector<16x128xbf16>, vector<128x128xbf16>, vector<16x128xf32> -> vector<16x128xf32>
    %121 = arith.addf %116, %120 : vector<16x128xf32>
    %122 = vector.extract_strided_slice %105 {offsets = [1, 0, 0, 0], sizes = [1, 1, 16, 128], strides = [1, 1, 1, 1]} : vector<3x3x16x128xbf16> to vector<1x1x16x128xbf16>
    %c384_49 = arith.constant 384 : index
    %c0_50 = arith.constant 0 : index
    %123 = vector.load %arg4[%c384_49, %c0_50] : memref<1152x128xbf16, #tpu.memory_space<vmem>>, vector<128x128xbf16>
    %124 = vector.shape_cast %122 : vector<1x1x16x128xbf16> to vector<16x128xbf16>
    %cst_51 = arith.constant dense<0.000000e+00> : vector<16x128xf32>
    %125 = tpu.matmul %124, %123, %cst_51 {dimension_numbers = #tpu.dot_dimension_numbers<[1], [0], [0], [1], [0, 0, 1, 1], [], []>} : vector<16x128xbf16>, vector<128x128xbf16>, vector<16x128xf32> -> vector<16x128xf32>
    %126 = arith.addf %121, %125 : vector<16x128xf32>
    %127 = vector.extract_strided_slice %105 {offsets = [1, 1, 0, 0], sizes = [1, 1, 16, 128], strides = [1, 1, 1, 1]} : vector<3x3x16x128xbf16> to vector<1x1x16x128xbf16>
    %c512_52 = arith.constant 512 : index
    %c0_53 = arith.constant 0 : index
    %128 = vector.load %arg4[%c512_52, %c0_53] : memref<1152x128xbf16, #tpu.memory_space<vmem>>, vector<128x128xbf16>
    %129 = vector.shape_cast %127 : vector<1x1x16x128xbf16> to vector<16x128xbf16>
    %cst_54 = arith.constant dense<0.000000e+00> : vector<16x128xf32>
    %130 = tpu.matmul %129, %128, %cst_54 {dimension_numbers = #tpu.dot_dimension_numbers<[1], [0], [0], [1], [0, 0, 1, 1], [], []>} : vector<16x128xbf16>, vector<128x128xbf16>, vector<16x128xf32> -> vector<16x128xf32>
    %131 = arith.addf %126, %130 : vector<16x128xf32>
    %132 = vector.extract_strided_slice %105 {offsets = [1, 2, 0, 0], sizes = [1, 1, 16, 128], strides = [1, 1, 1, 1]} : vector<3x3x16x128xbf16> to vector<1x1x16x128xbf16>
    %c640_55 = arith.constant 640 : index
    %c0_56 = arith.constant 0 : index
    %133 = vector.load %arg4[%c640_55, %c0_56] : memref<1152x128xbf16, #tpu.memory_space<vmem>>, vector<128x128xbf16>
    %134 = vector.shape_cast %132 : vector<1x1x16x128xbf16> to vector<16x128xbf16>
    %cst_57 = arith.constant dense<0.000000e+00> : vector<16x128xf32>
    %135 = tpu.matmul %134, %133, %cst_57 {dimension_numbers = #tpu.dot_dimension_numbers<[1], [0], [0], [1], [0, 0, 1, 1], [], []>} : vector<16x128xbf16>, vector<128x128xbf16>, vector<16x128xf32> -> vector<16x128xf32>
    %136 = arith.addf %131, %135 : vector<16x128xf32>
    %137 = vector.extract_strided_slice %105 {offsets = [2, 0, 0, 0], sizes = [1, 1, 16, 128], strides = [1, 1, 1, 1]} : vector<3x3x16x128xbf16> to vector<1x1x16x128xbf16>
    %c768_58 = arith.constant 768 : index
    %c0_59 = arith.constant 0 : index
    %138 = vector.load %arg4[%c768_58, %c0_59] : memref<1152x128xbf16, #tpu.memory_space<vmem>>, vector<128x128xbf16>
    %139 = vector.shape_cast %137 : vector<1x1x16x128xbf16> to vector<16x128xbf16>
    %cst_60 = arith.constant dense<0.000000e+00> : vector<16x128xf32>
    %140 = tpu.matmul %139, %138, %cst_60 {dimension_numbers = #tpu.dot_dimension_numbers<[1], [0], [0], [1], [0, 0, 1, 1], [], []>} : vector<16x128xbf16>, vector<128x128xbf16>, vector<16x128xf32> -> vector<16x128xf32>
    %141 = arith.addf %136, %140 : vector<16x128xf32>
    %142 = vector.extract_strided_slice %105 {offsets = [2, 1, 0, 0], sizes = [1, 1, 16, 128], strides = [1, 1, 1, 1]} : vector<3x3x16x128xbf16> to vector<1x1x16x128xbf16>
    %c896_61 = arith.constant 896 : index
    %c0_62 = arith.constant 0 : index
    %143 = vector.load %arg4[%c896_61, %c0_62] : memref<1152x128xbf16, #tpu.memory_space<vmem>>, vector<128x128xbf16>
    %144 = vector.shape_cast %142 : vector<1x1x16x128xbf16> to vector<16x128xbf16>
    %cst_63 = arith.constant dense<0.000000e+00> : vector<16x128xf32>
    %145 = tpu.matmul %144, %143, %cst_63 {dimension_numbers = #tpu.dot_dimension_numbers<[1], [0], [0], [1], [0, 0, 1, 1], [], []>} : vector<16x128xbf16>, vector<128x128xbf16>, vector<16x128xf32> -> vector<16x128xf32>
    %146 = arith.addf %141, %145 : vector<16x128xf32>
    %147 = vector.extract_strided_slice %105 {offsets = [2, 2, 0, 0], sizes = [1, 1, 16, 128], strides = [1, 1, 1, 1]} : vector<3x3x16x128xbf16> to vector<1x1x16x128xbf16>
    %c1024_64 = arith.constant 1024 : index
    %c0_65 = arith.constant 0 : index
    %148 = vector.load %arg4[%c1024_64, %c0_65] : memref<1152x128xbf16, #tpu.memory_space<vmem>>, vector<128x128xbf16>
    %149 = vector.shape_cast %147 : vector<1x1x16x128xbf16> to vector<16x128xbf16>
    %cst_66 = arith.constant dense<0.000000e+00> : vector<16x128xf32>
    %150 = tpu.matmul %149, %148, %cst_66 {dimension_numbers = #tpu.dot_dimension_numbers<[1], [0], [0], [1], [0, 0, 1, 1], [], []>} : vector<16x128xbf16>, vector<128x128xbf16>, vector<16x128xf32> -> vector<16x128xf32>
    %151 = arith.addf %146, %150 : vector<16x128xf32>
    %c0_67 = arith.constant 0 : index
    %c0_68 = arith.constant 0 : index
    %152 = vector.load %arg5[%c0_67, %c0_68] : memref<1x128xf32, #tpu.memory_space<vmem>>, vector<1x128xf32>
    %153 = vector.broadcast %152 : vector<1x128xf32> to vector<16x128xf32>
    %154 = arith.addf %151, %153 : vector<16x128xf32>
    %cst_69 = arith.constant 0.000000e+00 : f32
    %155 = vector.broadcast %cst_69 : f32 to vector<16x128xf32>
    %156 = arith.maximumf %154, %155 : vector<16x128xf32>
    %157 = arith.truncf %156 : vector<16x128xf32> to vector<16x128xbf16>
    %158 = vector.shape_cast %157 : vector<16x128xbf16> to vector<1x1x16x128xbf16>
    %cst_70 = arith.constant 0.000000e+00 : f32
    %159 = vector.broadcast %cst_70 : f32 to vector<16x32xf32>
    %160 = vector.shape_cast %158 : vector<1x1x16x128xbf16> to vector<16x128xbf16>
    %c0_71 = arith.constant 0 : index
    %c0_72 = arith.constant 0 : index
    %161 = vector.load %arg6[%c0_71, %c0_72] : memref<128x32xbf16, #tpu.memory_space<vmem>>, vector<128x32xbf16>
    %cst_73 = arith.constant dense<0.000000e+00> : vector<16x32xf32>
    %162 = tpu.matmul %160, %161, %cst_73 {dimension_numbers = #tpu.dot_dimension_numbers<[1], [0], [0], [1], [0, 0, 1, 1], [], []>} : vector<16x128xbf16>, vector<128x32xbf16>, vector<16x32xf32> -> vector<16x32xf32>
    %163 = arith.addf %159, %162 : vector<16x32xf32>
    %c0_74 = arith.constant 0 : index
    %c0_75 = arith.constant 0 : index
    %164 = vector.load %arg7[%c0_74, %c0_75] : memref<1x32xf32, #tpu.memory_space<vmem>>, vector<1x32xf32>
    %165 = vector.broadcast %164 : vector<1x32xf32> to vector<16x32xf32>
    %166 = arith.addf %163, %165 : vector<16x32xf32>
    %167 = arith.truncf %166 : vector<16x32xf32> to vector<16x32xbf16>
    %c0_76 = arith.constant 0 : index
    %c0_77 = arith.constant 0 : index
    %168 = vector.load %arg8[%c0_76, %c0_77] : memref<32x32xbf16, #tpu.memory_space<vmem>>, vector<32x32xbf16>
    %cst_78 = arith.constant dense<0.000000e+00> : vector<16x32xf32>
    %169 = tpu.matmul %167, %168, %cst_78 {dimension_numbers = #tpu.dot_dimension_numbers<[1], [0], [0], [1], [0, 0, 1, 1], [], []>} : vector<16x32xbf16>, vector<32x32xbf16>, vector<16x32xf32> -> vector<16x32xf32>
    %c0_79 = arith.constant 0 : index
    %c0_80 = arith.constant 0 : index
    %170 = vector.load %arg9[%c0_79, %c0_80] : memref<1x32xf32, #tpu.memory_space<vmem>>, vector<1x32xf32>
    %171 = vector.broadcast %170 : vector<1x32xf32> to vector<16x32xf32>
    %172 = arith.addf %169, %171 : vector<16x32xf32>
    %cst_81 = arith.constant 0.000000e+00 : f32
    %173 = vector.broadcast %cst_81 : f32 to vector<16x32xf32>
    %174 = arith.maximumf %172, %173 : vector<16x32xf32>
    %175 = arith.truncf %174 : vector<16x32xf32> to vector<16x32xbf16>
    %c0_82 = arith.constant 0 : index
    %c0_83 = arith.constant 0 : index
    %176 = vector.load %arg10[%c0_82, %c0_83] : memref<32x32xbf16, #tpu.memory_space<vmem>>, vector<32x32xbf16>
    %cst_84 = arith.constant dense<0.000000e+00> : vector<16x32xf32>
    %177 = tpu.matmul %175, %176, %cst_84 {dimension_numbers = #tpu.dot_dimension_numbers<[1], [0], [0], [1], [0, 0, 1, 1], [], []>} : vector<16x32xbf16>, vector<32x32xbf16>, vector<16x32xf32> -> vector<16x32xf32>
    %c0_85 = arith.constant 0 : index
    %c0_86 = arith.constant 0 : index
    %178 = vector.load %arg11[%c0_85, %c0_86] : memref<1x32xf32, #tpu.memory_space<vmem>>, vector<1x32xf32>
    %179 = vector.broadcast %178 : vector<1x32xf32> to vector<16x32xf32>
    %180 = arith.addf %177, %179 : vector<16x32xf32>
    %cst_87 = arith.constant 0.000000e+00 : f32
    %181 = vector.broadcast %cst_87 : f32 to vector<16x32xf32>
    %182 = arith.maximumf %180, %181 : vector<16x32xf32>
    %183 = arith.truncf %182 : vector<16x32xf32> to vector<16x32xbf16>
    %c0_88 = arith.constant 0 : index
    %c0_89 = arith.constant 0 : index
    %184 = vector.load %arg12[%c0_88, %c0_89] : memref<32x512xbf16, #tpu.memory_space<vmem>>, vector<32x512xbf16>
    %cst_90 = arith.constant dense<0.000000e+00> : vector<16x512xf32>
    %185 = tpu.matmul %183, %184, %cst_90 {dimension_numbers = #tpu.dot_dimension_numbers<[1], [0], [0], [1], [0, 0, 1, 1], [], []>} : vector<16x32xbf16>, vector<32x512xbf16>, vector<16x512xf32> -> vector<16x512xf32>
    %c0_91 = arith.constant 0 : index
    %c0_92 = arith.constant 0 : index
    %186 = vector.load %arg13[%c0_91, %c0_92] : memref<1x512xf32, #tpu.memory_space<vmem>>, vector<1x512xf32>
    %187 = vector.broadcast %186 : vector<1x512xf32> to vector<16x512xf32>
    %188 = arith.addf %185, %187 : vector<16x512xf32>
    %189 = vector.extract_strided_slice %188 {offsets = [0, 0], sizes = [16, 128], strides = [1, 1]} : vector<16x512xf32> to vector<16x128xf32>
    %cst_93 = arith.constant dense<0xFF800000> : vector<16xf32>
    %190 = vector.multi_reduction <maximumf>, %189, %cst_93 [1] : vector<16x128xf32> to vector<16xf32>
    %191 = vector.shape_cast %190 : vector<16xf32> to vector<16x1xf32>
    %192 = vector.broadcast %191 : vector<16x1xf32> to vector<16x128xf32>
    %193 = arith.subf %189, %192 : vector<16x128xf32>
    %194 = math.exp %193 : vector<16x128xf32>
    %cst_94 = arith.constant dense<0.000000e+00> : vector<16xf32>
    %195 = vector.multi_reduction <add>, %194, %cst_94 [1] : vector<16x128xf32> to vector<16xf32>
    %196 = vector.shape_cast %195 : vector<16xf32> to vector<16x1xf32>
    %cst_95 = arith.constant 1.000000e+00 : f32
    %197 = vector.broadcast %cst_95 : f32 to vector<16x1xf32>
    %198 = arith.divf %197, %196 : vector<16x1xf32>
    %199 = vector.broadcast %198 : vector<16x1xf32> to vector<16x128xf32>
    %200 = arith.mulf %194, %199 : vector<16x128xf32>
    %c0_96 = arith.constant 0 : index
    %c0_97 = arith.constant 0 : index
    %201 = vector.load %arg14[%c0_96, %c0_97] : memref<16x512xf32, #tpu.memory_space<vmem>>, vector<16x128xf32>
    tpu.vector_store %arg14[%c0_96, %c0_97], %200 {strides = array<i32>} : memref<16x512xf32, #tpu.memory_space<vmem>>, vector<16x128xf32>,
    %202 = vector.extract_strided_slice %188 {offsets = [0, 128], sizes = [16, 128], strides = [1, 1]} : vector<16x512xf32> to vector<16x128xf32>
    %cst_98 = arith.constant dense<0xFF800000> : vector<16xf32>
    %203 = vector.multi_reduction <maximumf>, %202, %cst_98 [1] : vector<16x128xf32> to vector<16xf32>
    %204 = vector.shape_cast %203 : vector<16xf32> to vector<16x1xf32>
    %205 = vector.broadcast %204 : vector<16x1xf32> to vector<16x128xf32>
    %206 = arith.subf %202, %205 : vector<16x128xf32>
    %207 = math.exp %206 : vector<16x128xf32>
    %cst_99 = arith.constant dense<0.000000e+00> : vector<16xf32>
    %208 = vector.multi_reduction <add>, %207, %cst_99 [1] : vector<16x128xf32> to vector<16xf32>
    %209 = vector.shape_cast %208 : vector<16xf32> to vector<16x1xf32>
    %cst_100 = arith.constant 1.000000e+00 : f32
    %210 = vector.broadcast %cst_100 : f32 to vector<16x1xf32>
    %211 = arith.divf %210, %209 : vector<16x1xf32>
    %212 = vector.broadcast %211 : vector<16x1xf32> to vector<16x128xf32>
    %213 = arith.mulf %207, %212 : vector<16x128xf32>
    %c0_101 = arith.constant 0 : index
    %c128_102 = arith.constant 128 : index
    %214 = vector.load %arg14[%c0_101, %c128_102] : memref<16x512xf32, #tpu.memory_space<vmem>>, vector<16x128xf32>
    tpu.vector_store %arg14[%c0_101, %c128_102], %213 {strides = array<i32>} : memref<16x512xf32, #tpu.memory_space<vmem>>, vector<16x128xf32>,
    %215 = vector.extract_strided_slice %188 {offsets = [0, 256], sizes = [16, 128], strides = [1, 1]} : vector<16x512xf32> to vector<16x128xf32>
    %cst_103 = arith.constant dense<0xFF800000> : vector<16xf32>
    %216 = vector.multi_reduction <maximumf>, %215, %cst_103 [1] : vector<16x128xf32> to vector<16xf32>
    %217 = vector.shape_cast %216 : vector<16xf32> to vector<16x1xf32>
    %218 = vector.broadcast %217 : vector<16x1xf32> to vector<16x128xf32>
    %219 = arith.subf %215, %218 : vector<16x128xf32>
    %220 = math.exp %219 : vector<16x128xf32>
    %cst_104 = arith.constant dense<0.000000e+00> : vector<16xf32>
    %221 = vector.multi_reduction <add>, %220, %cst_104 [1] : vector<16x128xf32> to vector<16xf32>
    %222 = vector.shape_cast %221 : vector<16xf32> to vector<16x1xf32>
    %cst_105 = arith.constant 1.000000e+00 : f32
    %223 = vector.broadcast %cst_105 : f32 to vector<16x1xf32>
    %224 = arith.divf %223, %222 : vector<16x1xf32>
    %225 = vector.broadcast %224 : vector<16x1xf32> to vector<16x128xf32>
    %226 = arith.mulf %220, %225 : vector<16x128xf32>
    %c0_106 = arith.constant 0 : index
    %c256_107 = arith.constant 256 : index
    %227 = vector.load %arg14[%c0_106, %c256_107] : memref<16x512xf32, #tpu.memory_space<vmem>>, vector<16x128xf32>
    tpu.vector_store %arg14[%c0_106, %c256_107], %226 {strides = array<i32>} : memref<16x512xf32, #tpu.memory_space<vmem>>, vector<16x128xf32>,
    %228 = vector.extract_strided_slice %188 {offsets = [0, 384], sizes = [16, 128], strides = [1, 1]} : vector<16x512xf32> to vector<16x128xf32>
    %cst_108 = arith.constant dense<0xFF800000> : vector<16xf32>
    %229 = vector.multi_reduction <maximumf>, %228, %cst_108 [1] : vector<16x128xf32> to vector<16xf32>
    %230 = vector.shape_cast %229 : vector<16xf32> to vector<16x1xf32>
    %231 = vector.broadcast %230 : vector<16x1xf32> to vector<16x128xf32>
    %232 = arith.subf %228, %231 : vector<16x128xf32>
    %233 = math.exp %232 : vector<16x128xf32>
    %cst_109 = arith.constant dense<0.000000e+00> : vector<16xf32>
    %234 = vector.multi_reduction <add>, %233, %cst_109 [1] : vector<16x128xf32> to vector<16xf32>
    %235 = vector.shape_cast %234 : vector<16xf32> to vector<16x1xf32>
    %cst_110 = arith.constant 1.000000e+00 : f32
    %236 = vector.broadcast %cst_110 : f32 to vector<16x1xf32>
    %237 = arith.divf %236, %235 : vector<16x1xf32>
    %238 = vector.broadcast %237 : vector<16x1xf32> to vector<16x128xf32>
    %239 = arith.mulf %233, %238 : vector<16x128xf32>
    %c0_111 = arith.constant 0 : index
    %c384_112 = arith.constant 384 : index
    %240 = vector.load %arg14[%c0_111, %c384_112] : memref<16x512xf32, #tpu.memory_space<vmem>>, vector<16x128xf32>
    tpu.vector_store %arg14[%c0_111, %c384_112], %239 {strides = array<i32>} : memref<16x512xf32, #tpu.memory_space<vmem>>, vector<16x128xf32>,
    return
  }
  func.func @transform_0(%arg0: i32) -> (i32, i32, i32, i32) {
    %c0_i32 = arith.constant 0 : i32
    %c0_i32_0 = arith.constant 0 : i32
    %c0_i32_1 = arith.constant 0 : i32
    %c0_i32_2 = arith.constant 0 : i32
    return %c0_i32, %c0_i32_0, %arg0, %c0_i32_1 : i32, i32, i32, i32
  }
  func.func @transform_1(%arg0: i32) -> (i32, i32) {
    %c0_i32 = arith.constant 0 : i32
    %c0_i32_0 = arith.constant 0 : i32
    %c0_i32_1 = arith.constant 0 : i32
    return %c0_i32, %c0_i32_0 : i32, i32
  }
  func.func @transform_2(%arg0: i32) -> (i32, i32) {
    %c0_i32 = arith.constant 0 : i32
    %c0_i32_0 = arith.constant 0 : i32
    %c0_i32_1 = arith.constant 0 : i32
    return %c0_i32, %c0_i32_0 : i32, i32
  }
  func.func @transform_3(%arg0: i32) -> (i32, i32) {
    %c0_i32 = arith.constant 0 : i32
    %c0_i32_0 = arith.constant 0 : i32
    %c0_i32_1 = arith.constant 0 : i32
    return %c0_i32, %c0_i32_0 : i32, i32
  }
  func.func @transform_4(%arg0: i32) -> (i32, i32) {
    %c0_i32 = arith.constant 0 : i32
    %c0_i32_0 = arith.constant 0 : i32
    %c0_i32_1 = arith.constant 0 : i32
    return %c0_i32, %c0_i32_0 : i32, i32
  }
  func.func @transform_5(%arg0: i32) -> (i32, i32) {
    %c0_i32 = arith.constant 0 : i32
    %c0_i32_0 = arith.constant 0 : i32
    %c0_i32_1 = arith.constant 0 : i32
    return %c0_i32, %c0_i32_0 : i32, i32
  }
  func.func @transform_6(%arg0: i32) -> (i32, i32) {
    %c0_i32 = arith.constant 0 : i32
    %c0_i32_0 = arith.constant 0 : i32
    %c0_i32_1 = arith.constant 0 : i32
    return %c0_i32, %c0_i32_0 : i32, i32
  }
  func.func @transform_7(%arg0: i32) -> (i32, i32) {
    %c0_i32 = arith.constant 0 : i32
    %c0_i32_0 = arith.constant 0 : i32
    %c0_i32_1 = arith.constant 0 : i32
    return %c0_i32, %c0_i32_0 : i32, i32
  }
  func.func @transform_8(%arg0: i32) -> (i32, i32) {
    %c0_i32 = arith.constant 0 : i32
    %c0_i32_0 = arith.constant 0 : i32
    %c0_i32_1 = arith.constant 0 : i32
    return %c0_i32, %c0_i32_0 : i32, i32
  }
  func.func @transform_9(%arg0: i32) -> (i32, i32) {
    %c0_i32 = arith.constant 0 : i32
    %c0_i32_0 = arith.constant 0 : i32
    %c0_i32_1 = arith.constant 0 : i32
    return %c0_i32, %c0_i32_0 : i32, i32
  }
  func.func @transform_10(%arg0: i32) -> (i32, i32) {
    %c0_i32 = arith.constant 0 : i32
    %c0_i32_0 = arith.constant 0 : i32
    %c0_i32_1 = arith.constant 0 : i32
    return %c0_i32, %c0_i32_0 : i32, i32
  }
  func.func @transform_11(%arg0: i32) -> (i32, i32) {
    %c0_i32 = arith.constant 0 : i32
    %c0_i32_0 = arith.constant 0 : i32
    %c0_i32_1 = arith.constant 0 : i32
    return %c0_i32, %c0_i32_0 : i32, i32
  }
  func.func @transform_12(%arg0: i32) -> (i32, i32) {
    %c0_i32 = arith.constant 0 : i32
    %c0_i32_0 = arith.constant 0 : i32
    %c0_i32_1 = arith.constant 0 : i32
    return %c0_i32, %c0_i32_0 : i32, i32
  }
  func.func @transform_13(%arg0: i32) -> (i32, i32) {
    %c0_i32 = arith.constant 0 : i32
    %c0_i32_0 = arith.constant 0 : i32
    return %arg0, %c0_i32 : i32, i32
  }
}

</mosaic_0001>

<llo_original>
// kernel: categorical_agent_forward.2
$region0: #{categorical_agent_forward.2}
  #allocation0 [shape = 'u32[]', space=smem, size = 0x4, offset = 0x4, fixed_abs, tag = 'smem constant byte address 0x4 - core index']
  #allocation1 [shape = 'u32[144,128]{1,0:T(1,128)}', space=vmem, size = 0x12000, scoped, tag = 'internal scratch']
  %s0 = inlined_call_operand.vmem [shape: bf16[128,192], index: 0, kind: input, shape index: {}]
  %s1 = inlined_call_operand.vmem [shape: bf16[192,128], index: 1, kind: input, shape index: {}]
  %s2 = inlined_call_operand.vmem [shape: f32[1,128], index: 2, kind: input, shape index: {}]
  %s3 = inlined_call_operand.vmem [shape: bf16[128,128], index: 3, kind: output, shape index: {}]
  %s4 = sld [smem:[#allocation0]]
  $region45: #{categorical_agent_forward.2} parent=0
    _
  %s6 = ssub.s32 1, %s4
  %s7 = scalar_select 0, %s6, %s4
  loop: start=0, step=1, limit=4
  $region2: #{categorical_agent_forward.2} parent=0 // loop_pre_header
    _
  $region3: #{categorical_agent_forward.2} parent=0 // loop_header
    %s9 = sphi 0, %s13
    %p10 = scmp.ge.s32.totalorder %s9, 4
    %s19 = sphi 0, %s21
    %s22 = sphi 0, %s19
    %s23 = sphi 0, %s22
    %s39 = sphi 0, %s23
    %s43 = sphi 0, %s43
    %s45 = sphi 0, %s43
    %s46 = sphi 0, %s45
    %s60 = sphi 0, %s46
    %s64 = sphi 0, %s64
    %s66 = sphi 0, %s64
    %s67 = sphi 0, %s66
    %s81 = sphi 0, %s67
    %s87 = sphi 0, %s89
    %s90 = sphi 0, %s87
    %s91 = sphi 0, %s90
    %s107 = sphi 0, %s91
  $region4: #{categorical_agent_forward.2} parent=0 // loop_header_branch
    %12 = sbr.rel (%p10) target = $region8
  $region5: #{categorical_agent_forward.2} parent=0 // loop_body
    %s14 = ssub.s32 %s9, 1
    %s15 = ssub.s32 %s9, 2
    %s16 = sadd.s32 %s9, 1
    %s17 = ssub.s32 %s9, %s16
    %p18 = scmp.eq.s32.totalorder %s17, 0
    %s20 = sadd.s32 %s19, 1
    %s21 = scalar_select %p18, %s19, %s20
    %p24 = pneg %p18
    %p25 = scmp.eq.s32.totalorder %s9, 1
    %p26 = por %p24, %p25
    %p27 = scmp.ne.s32.totalorder %s19, %s22
    %p28 = scmp.eq.s32.totalorder %s9, 0
    %p29 = por %p27, %p28
    %p30 = scmp.ne.s32.totalorder %s19, %s22
    %p31 = scmp.eq.s32.totalorder %s14, 1
    %p32 = por %p30, %p31
    %p33 = scmp.ne.s32.totalorder %s22, %s23
    %p34 = scmp.eq.s32.totalorder %s14, 0
    %p35 = por %p33, %p34
    %p36 = scmp.ne.s32.totalorder %s22, %s23
    %p37 = scmp.eq.s32.totalorder %s15, 1
    %p38 = por %p36, %p37
    %p40 = scmp.ne.s32.totalorder %s23, %s39
    %p41 = scmp.eq.s32.totalorder %s15, 0
    %p42 = por %p40, %p41
    %s44 = sadd.s32 %s43, 1
    %p47 = scmp.eq.s32.totalorder %s9, 1
    %p48 = scmp.ne.s32.totalorder %s43, %s45
    %p49 = scmp.eq.s32.totalorder %s9, 0
    %p50 = por %p48, %p49
    %p51 = scmp.ne.s32.totalorder %s43, %s45
    %p52 = scmp.eq.s32.totalorder %s14, 1
    %p53 = por %p51, %p52
    %p54 = scmp.ne.s32.totalorder %s45, %s46
    %p55 = scmp.eq.s32.totalorder %s14, 0
    %p56 = por %p54, %p55
    %p57 = scmp.ne.s32.totalorder %s45, %s46
    %p58 = scmp.eq.s32.totalorder %s15, 1
    %p59 = por %p57, %p58
    %p61 = scmp.ne.s32.totalorder %s46, %s60
    %p62 = scmp.eq.s32.totalorder %s15, 0
    %p63 = por %p61, %p62
    %s65 = sadd.s32 %s64, 1
    %p68 = scmp.eq.s32.totalorder %s9, 1
    %p69 = scmp.ne.s32.totalorder %s64, %s66
    %p70 = scmp.eq.s32.totalorder %s9, 0
    %p71 = por %p69, %p70
    %p72 = scmp.ne.s32.totalorder %s64, %s66
    %p73 = scmp.eq.s32.totalorder %s14, 1
    %p74 = por %p72, %p73
    %p75 = scmp.ne.s32.totalorder %s66, %s67
    %p76 = scmp.eq.s32.totalorder %s14, 0
    %p77 = por %p75, %p76
    %p78 = scmp.ne.s32.totalorder %s66, %s67
    %p79 = scmp.eq.s32.totalorder %s15, 1
    %p80 = por %p78, %p79
    %p82 = scmp.ne.s32.totalorder %s67, %s81
    %p83 = scmp.eq.s32.totalorder %s15, 0
    %p84 = por %p82, %p83
    %s85 = ssub.s32 %s9, %s16
    %p86 = scmp.eq.s32.totalorder %s85, 0
    %s88 = sadd.s32 %s87, 1
    %s89 = scalar_select %p86, %s87, %s88
    %p92 = pneg %p86
    %p93 = scmp.eq.s32.totalorder %s9, 1
    %p94 = por %p92, %p93
    %p95 = scmp.ne.s32.totalorder %s87, %s90
    %p96 = scmp.eq.s32.totalorder %s9, 0
    %p97 = por %p95, %p96
    %p98 = scmp.ne.s32.totalorder %s87, %s90
    %p99 = scmp.eq.s32.totalorder %s14, 1
    %p100 = por %p98, %p99
    %p101 = scmp.ne.s32.totalorder %s90, %s91
    %p102 = scmp.eq.s32.totalorder %s14, 0
    %p103 = por %p101, %p102
    %p104 = scmp.ne.s32.totalorder %s90, %s91
    %p105 = scmp.eq.s32.totalorder %s15, 1
    %p106 = por %p104, %p105
    %p108 = scmp.ne.s32.totalorder %s91, %s107
    %p109 = scmp.eq.s32.totalorder %s15, 0
    %p110 = por %p108, %p109
    %p111 = scmp.le.s32.totalorder 1, %s9
    %p112 = scmp.lt.s32.totalorder %s9, 3
    %p113 = pnand %p111, %p112
    %p114 = pneg %p113
    // Predicated region
    $region9: #{categorical_agent_forward.2} parent=5 // pred_check
      _
    $region10: #{categorical_agent_forward.2} parent=5 // pred_check_branch
      %116 = sbr.rel (%p113) target = $region12
    $region11: #{categorical_agent_forward.2} parent=5 // pred_region
      %s117 = ssub.s32 %s9, 1
      // Predicated region
      $region13: #{categorical_agent_forward.2} parent=11 // pred_check
        %p118 = pneg %p56
      $region14: #{categorical_agent_forward.2} parent=11 // pred_check_branch
        %120 = sbr.rel (%p118) target = $region16
      $region15: #{categorical_agent_forward.2} parent=11 // pred_region
        _
      $region16: #{categorical_agent_forward.2} parent=11 // pred_fallthru
        _
      // Predicated region
      $region17: #{categorical_agent_forward.2} parent=11 // pred_check
        %p121 = pneg %p77
      $region18: #{categorical_agent_forward.2} parent=11 // pred_check_branch
        %123 = sbr.rel (%p121) target = $region20
      $region19: #{categorical_agent_forward.2} parent=11 // pred_region
        _
      $region20: #{categorical_agent_forward.2} parent=11 // pred_fallthru
        _
    $region12: #{categorical_agent_forward.2} parent=5 // pred_fallthru
      _
    %p124 = scmp.lt.s32.totalorder %s9, 2
    // Predicated region
    $region21: #{categorical_agent_forward.2} parent=5 // pred_check
      %p125 = pneg %p124
    $region22: #{categorical_agent_forward.2} parent=5 // pred_check_branch
      %127 = sbr.rel (%p125) target = $region24
    $region23: #{categorical_agent_forward.2} parent=5 // pred_region
      // Predicated region
      $region25: #{categorical_agent_forward.2} parent=23 // pred_check
        %p128 = pneg %p29
      $region26: #{categorical_agent_forward.2} parent=23 // pred_check_branch
        %130 = sbr.rel (%p128) target = $region28
      $region27: #{categorical_agent_forward.2} parent=23 // pred_region
        %s131 = smul.u32 8, %s9
        %p132 = scmp.lt.s32.totalorder %s131, 15
        %s133 = scalar_select %p132, %s131, 15
        %s134 = smul.addr %s133, 2
        %s135 = smul.addr %s134, 4
        %s136 = scalar_lea.vmem %s0, %s135
        %s137 = smul.u32 8, %s9
      $region28: #{categorical_agent_forward.2} parent=23 // pred_fallthru
        _
    $region24: #{categorical_agent_forward.2} parent=5 // pred_fallthru
      _
    %p138 = scmp.le.s32.totalorder 1, %s9
    %p139 = scmp.lt.s32.totalorder %s9, 3
    %p140 = pnand %p138, %p139
    %p141 = pneg %p140
    // Predicated region
    $region29: #{categorical_agent_forward.2} parent=5 // pred_check
      _
    $region30: #{categorical_agent_forward.2} parent=5 // pred_check_branch
      %143 = sbr.rel (%p140) target = $region32
    $region31: #{categorical_agent_forward.2} parent=5 // pred_region
      %s144 = ssub.s32 %s9, 1
      %s145 = smul.u32 8, %s14
      %p146 = scmp.lt.s32.totalorder %s145, 15
      %s147 = scalar_select %p146, %s145, 15
      %s148 = smul.addr %s147, 2
      %s149 = smul.addr %s148, 4
      %s150 = scalar_lea.vmem %s0, %s149
      %p151 = pneg %p35
      %p152 = pneg %p32
      %p153 = pneg %p56
      %p154 = pneg %p53
      %p155 = pneg %p77
      %p156 = pneg %p74
      %p157 = pneg %p103
      %p158 = pneg %p100
      %s159 = smul.u32 8, %s14
      %p160 = scmp.lt.s32.totalorder %s159, 15
      %s161 = scalar_select %p160, %s159, 15
      %s162 = smul.addr %s161, 4
      %s163 = scalar_lea.vmem %s3, %s162
      %s164 = smul.u32 8, %s14
      %p165 = scmp.lt.s32.totalorder %s164, 15
      %s166 = scalar_select %p165, %s164, 15
      %s167 = smul.addr %s166, 2
      %s168 = smul.addr %s167, 4
      %s169 = scalar_lea.vmem %s0, %s168
      %s170 = smul.u32 8, %s14
      %s171 = smul.u32 8, %s14
      %p172 = scmp.lt.s32.totalorder %s171, 15
      %s173 = scalar_select %p172, %s171, 15
      %s174 = smul.addr %s173, 4
      %s175 = scalar_lea.vmem %s3, %s174
      %s176 = smul.u32 8, %s14
      %v178 = vld [vmem:[%s169] sm:$0xff]
      %v179 = vld [vmem:[%s169 + $0x8] sm:$0xff]
      %v180 = vld [vmem:[%s169 + $0x10] sm:$0xff]
      %v181 = vld [vmem:[%s169 + $0x18] sm:$0xff]
      %v182 = vld [vmem:[%s169 + $0x20] sm:$0xff]
      %v183 = vld [vmem:[%s169 + $0x28] sm:$0xff]
      %v184 = vld [vmem:[%s169 + $0x30] sm:$0xff]
      %v185 = vld [vmem:[%s169 + $0x38] sm:$0xff]
      %v186 = vld [vmem:[%s1] sm:$0xf]
      %v187 = vld [vmem:[%s1 + $0x4] sm:$0xf]
      %v188 = vld [vmem:[%s1 + $0x8] sm:$0xf]
      %v189 = vld [vmem:[%s1 + $0xc] sm:$0xf]
      %v190 = vld [vmem:[%s1 + $0x10] sm:$0xf]
      %v191 = vld [vmem:[%s1 + $0x14] sm:$0xf]
      %v192 = vld [vmem:[%s1 + $0x18] sm:$0xf]
      %v193 = vld [vmem:[%s1 + $0x1c] sm:$0xf]
      %v194 = vld [vmem:[%s1 + $0x20] sm:$0xf]
      %v195 = vld [vmem:[%s1 + $0x24] sm:$0xf]
      %v196 = vld [vmem:[%s1 + $0x28] sm:$0xf]
      %v197 = vld [vmem:[%s1 + $0x2c] sm:$0xf]
      %v198 = vld [vmem:[%s1 + $0x30] sm:$0xf]
      %v199 = vld [vmem:[%s1 + $0x34] sm:$0xf]
      %v200 = vld [vmem:[%s1 + $0x38] sm:$0xf]
      %v201 = vld [vmem:[%s1 + $0x3c] sm:$0xf]
      %v202 = vld [vmem:[%s1 + $0x40] sm:$0xf]
      %v203 = vld [vmem:[%s1 + $0x44] sm:$0xf]
      %v204 = vld [vmem:[%s1 + $0x48] sm:$0xf]
      %v205 = vld [vmem:[%s1 + $0x4c] sm:$0xf]
      %v206 = vld [vmem:[%s1 + $0x50] sm:$0xf]
      %v207 = vld [vmem:[%s1 + $0x54] sm:$0xf]
      %v208 = vld [vmem:[%s1 + $0x58] sm:$0xf]
      %v209 = vld [vmem:[%s1 + $0x5c] sm:$0xf]
      %v210 = vld [vmem:[%s2] sm:$0x1]
      %v212 = vlaneseq
      %v213 = vshrl.u32 %v212, 7
      %v214 = vsub.s32 0, %v213
      %v215 = vrot.slane %v210, %v214
      %v225 = vunpack.c.l.b16 %v178
      %v226 = vunpack.c.h.b16 %v178
      %v227 = vunpack.c.l.b16 %v179
      %v228 = vunpack.c.h.b16 %v179
      %v229 = vunpack.c.l.b16 %v180
      %v230 = vunpack.c.h.b16 %v180
      %v231 = vunpack.c.l.b16 %v181
      %v232 = vunpack.c.h.b16 %v181
      %v233 = vunpack.c.l.b16 %v182
      %v234 = vunpack.c.h.b16 %v182
      %v235 = vunpack.c.l.b16 %v183
      %v236 = vunpack.c.h.b16 %v183
      %v237 = vunpack.c.l.b16 %v184
      %v238 = vunpack.c.h.b16 %v184
      %v239 = vunpack.c.l.b16 %v185
      %v240 = vunpack.c.h.b16 %v185
      %v241 = vpack.c.b16 %v227, %v225
      %v242 = vpack.c.b16 %v228, %v226
      %v243 = vpack.c.b16 %v231, %v229
      %v244 = vpack.c.b16 %v232, %v230
      %v245 = vpack.c.b16 %v235, %v233
      %v246 = vpack.c.b16 %v236, %v234
      %v247 = vpack.c.b16 %v239, %v237
      %v248 = vpack.c.b16 %v240, %v238
      %v277 = vunpack.c.l.b16 %v186
      %v278 = vunpack.c.l.b16 %v187
      %v279 = vunpack.c.l.b16 %v188
      %v280 = vunpack.c.l.b16 %v189
      %v281 = vunpack.c.l.b16 %v190
      %v282 = vunpack.c.l.b16 %v191
      %v283 = vunpack.c.l.b16 %v192
      %v284 = vunpack.c.l.b16 %v193
      %v285 = vunpack.c.l.b16 %v194
      %v286 = vunpack.c.l.b16 %v195
      %v287 = vunpack.c.l.b16 %v196
      %v288 = vunpack.c.l.b16 %v197
      %v289 = vunpack.c.l.b16 %v198
      %v290 = vunpack.c.l.b16 %v199
      %v291 = vunpack.c.l.b16 %v200
      %v292 = vunpack.c.l.b16 %v201
      %v293 = vunpack.c.l.b16 %v202
      %v294 = vunpack.c.l.b16 %v203
      %v295 = vunpack.c.l.b16 %v204
      %v296 = vunpack.c.l.b16 %v205
      %v297 = vunpack.c.l.b16 %v206
      %v298 = vunpack.c.l.b16 %v207
      %v299 = vunpack.c.l.b16 %v208
      %v300 = vunpack.c.l.b16 %v209
      %v301 = vpack.c.b16 %v278, %v277
      %v302 = vpack.c.b16 %v280, %v279
      %v303 = vpack.c.b16 %v282, %v281
      %v304 = vpack.c.b16 %v284, %v283
      %v305 = vpack.c.b16 %v286, %v285
      %v306 = vpack.c.b16 %v288, %v287
      %v307 = vpack.c.b16 %v290, %v289
      %v308 = vpack.c.b16 %v292, %v291
      %v309 = vpack.c.b16 %v294, %v293
      %v310 = vpack.c.b16 %v296, %v295
      %v311 = vpack.c.b16 %v298, %v297
      %v312 = vpack.c.b16 %v300, %v299
      %vm325 = vcmask 523264
      %v327 = vsel %vm325, %v242, 0
      %v330 = vsel %vm325, %v244, 0
      %v333 = vsel %vm325, %v246, 0
      %v336 = vsel %vm325, %v248, 0
      %338 = vmatprep.subr.bf16.mxu0 0
      %339 = vmatpush1.bf16.msra.mxu0 %v301
      %340 = vmatprep.subr.bf16.mxu0 0
      %341 = vmatpush1.bf16.msra.mxu0 %v302
      %342 = vmatprep.subr.bf16.mxu0 0
      %343 = vmatpush1.bf16.msra.mxu0 %v303
      %344 = vmatprep.subr.bf16.mxu0 0
      %345 = vmatpush1.bf16.msra.mxu0 %v304
      %346 = vmatprep.subr.bf16.mxu0 0
      %347 = vmatpush1.bf16.msra.mxu0 %v305
      %348 = vmatprep.subr.bf16.mxu0 0
      %349 = vmatpush1.bf16.msra.mxu0 %v306
      %350 = vmatprep.subr.bf16.mxu0 0
      %351 = vmatpush1.bf16.msra.mxu0 %v307
      %352 = vmatprep.subr.bf16.mxu0 0
      %353 = vmatpush1.bf16.msra.mxu0 %v308
      %354 = vmatprep.subr.bf16.mxu0 0
      %355 = vmatpush1.bf16.msra.mxu0 %v309
      %356 = vmatprep.subr.bf16.mxu0 0
      %357 = vmatpush1.bf16.msra.mxu0 %v310
      %358 = vmatprep.subr.bf16.mxu0 0
      %359 = vmatpush1.bf16.msra.mxu0 %v311
      %360 = vmatprep.subr.bf16.mxu0 0
      %361 = vmatpush1.bf16.msra.mxu0 %v312
      %362 = vmatprep.subr.bf16.mxu0 0
      %363 = vmatpush1.bf16.msra.mxu0 0
      %364 = vmatprep.subr.bf16.mxu0 0
      %365 = vmatpush1.bf16.msra.mxu0 0
      %366 = vmatprep.subr.bf16.mxu0 0
      %367 = vmatpush1.bf16.msra.mxu0 0
      %368 = vmatprep.subr.bf16.mxu0 0
      %369 = vmatpush1.bf16.msra.mxu0 0
      %370 = vmatprep.mubr.bf16.mxu0 %v327
      %371 = vmatmul.mubr.bf16.gmra.mrb[0].mxu0 %v241
      %v372 = vpop.f32.mrb[0].mxu0
      %v373 = vadd.f32 %v215, %v372
      %v374 = vpop.f32.mrb[0].mxu0
      %v375 = vpop.f32.mrb[0].mxu0
      %v376 = vadd.f32 %v215, %v375
      %v377 = vpop.f32.mrb[0].mxu0
      %378 = vmatprep.mubr.bf16.mxu0 %v330
      %379 = vmatmul.mubr.bf16.gmra.mrb[0].mxu0 %v243
      %v380 = vpop.f32.mrb[0].mxu0
      %v381 = vadd.f32 %v215, %v380
      %v382 = vpop.f32.mrb[0].mxu0
      %v383 = vpop.f32.mrb[0].mxu0
      %v384 = vadd.f32 %v215, %v383
      %v385 = vpop.f32.mrb[0].mxu0
      %386 = vmatprep.mubr.bf16.mxu0 %v333
      %387 = vmatmul.mubr.bf16.gmra.mrb[0].mxu0 %v245
      %v388 = vpop.f32.mrb[0].mxu0
      %v389 = vadd.f32 %v215, %v388
      %v390 = vpop.f32.mrb[0].mxu0
      %v391 = vpop.f32.mrb[0].mxu0
      %v392 = vadd.f32 %v215, %v391
      %v393 = vpop.f32.mrb[0].mxu0
      %394 = vmatprep.mubr.bf16.mxu0 %v336
      %395 = vmatmul.mubr.bf16.gmra.mrb[0].mxu0 %v247
      %v396 = vpop.f32.mrb[0].mxu0
      %v397 = vadd.f32 %v215, %v396
      %v398 = vpop.f32.mrb[0].mxu0
      %v399 = vpop.f32.mrb[0].mxu0
      %v400 = vadd.f32 %v215, %v399
      %v401 = vpop.f32.mrb[0].mxu0
      %402 = vdwg.mxu0
      %v403 = vmax.f32 %v373, 0.0
      %v404 = vmax.f32 %v376, 0.0
      %v405 = vmax.f32 %v381, 0.0
      %v406 = vmax.f32 %v384, 0.0
      %v407 = vmax.f32 %v389, 0.0
      %v408 = vmax.f32 %v392, 0.0
      %v409 = vmax.f32 %v397, 0.0
      %v410 = vmax.f32 %v400, 0.0
      %v411 = vpack.c.bf16 %v404, %v403
      %v412 = vpack.c.bf16 %v406, %v405
      %v413 = vpack.c.bf16 %v408, %v407
      %v414 = vpack.c.bf16 %v410, %v409
      %v419 = vunpack.c.l.b16 %v411
      %v420 = vunpack.c.h.b16 %v411
      %v421 = vunpack.c.l.b16 %v412
      %v422 = vunpack.c.h.b16 %v412
      %v423 = vunpack.c.l.b16 %v413
      %v424 = vunpack.c.h.b16 %v413
      %v425 = vunpack.c.l.b16 %v414
      %v426 = vunpack.c.h.b16 %v414
      %v427 = vpack.c.b16 %v419, %v419
      %v428 = vpack.c.b16 %v420, %v420
      %v429 = vpack.c.b16 %v421, %v421
      %v430 = vpack.c.b16 %v422, %v422
      %v431 = vpack.c.b16 %v423, %v423
      %v432 = vpack.c.b16 %v424, %v424
      %v433 = vpack.c.b16 %v425, %v425
      %v434 = vpack.c.b16 %v426, %v426
      %443 = vst [vmem:[%s175] sm:$0xf] %v427
      %444 = vst [vmem:[%s175 + $0x4] sm:$0xf] %v428
      %445 = vst [vmem:[%s175 + $0x8] sm:$0xf] %v429
      %446 = vst [vmem:[%s175 + $0xc] sm:$0xf] %v430
      %447 = vst [vmem:[%s175 + $0x10] sm:$0xf] %v431
      %448 = vst [vmem:[%s175 + $0x14] sm:$0xf] %v432
      %449 = vst [vmem:[%s175 + $0x18] sm:$0xf] %v433
      %450 = vst [vmem:[%s175 + $0x1c] sm:$0xf] %v434
      %s451 = smul.u32 8, %s14
      %p452 = scmp.lt.s32.totalorder %s451, 15
      %s453 = scalar_select %p452, %s451, 15
      %s454 = smul.addr %s453, 4
      %s455 = scalar_lea.vmem %s3, %s454
      // Predicated region
      $region33: #{categorical_agent_forward.2} parent=31 // pred_check
        %p456 = pneg %p100
      $region34: #{categorical_agent_forward.2} parent=31 // pred_check_branch
        %458 = sbr.rel (%p456) target = $region36
      $region35: #{categorical_agent_forward.2} parent=31 // pred_region
        %s459 = smul.u32 8, %s14
      $region36: #{categorical_agent_forward.2} parent=31 // pred_fallthru
        _
    $region32: #{categorical_agent_forward.2} parent=5 // pred_fallthru
      _
    %p460 = scmp.le.s32.totalorder 2, %s9
    // Predicated region
    $region37: #{categorical_agent_forward.2} parent=5 // pred_check
      %p461 = pneg %p460
    $region38: #{categorical_agent_forward.2} parent=5 // pred_check_branch
      %463 = sbr.rel (%p461) target = $region40
    $region39: #{categorical_agent_forward.2} parent=5 // pred_region
      %s464 = ssub.s32 %s9, 2
      // Predicated region
      $region41: #{categorical_agent_forward.2} parent=39 // pred_check
        %p465 = pneg %p106
      $region42: #{categorical_agent_forward.2} parent=39 // pred_check_branch
        %467 = sbr.rel (%p465) target = $region44
      $region43: #{categorical_agent_forward.2} parent=39 // pred_region
        %s468 = smul.u32 8, %s15
        %p469 = scmp.lt.s32.totalorder %s468, 15
        %s470 = scalar_select %p469, %s468, 15
        %s471 = smul.addr %s470, 4
        %s472 = scalar_lea.vmem %s3, %s471
      $region44: #{categorical_agent_forward.2} parent=39 // pred_fallthru
        _
    $region40: #{categorical_agent_forward.2} parent=5 // pred_fallthru
      _
  $region6: #{categorical_agent_forward.2} parent=0 // loop_footer
    %s13 = sadd.s32 1, %s9
  $region7: #{categorical_agent_forward.2} parent=0 // loop_footer_branch
    %8 = sbr.rel target = $region3
  $region8: #{categorical_agent_forward.2} parent=0 // loop_exit
    _

// kernel: categorical_agent_forward.3
$region0: #{categorical_agent_forward.3}
  #allocation0 [shape = 'u32[]', space=smem, size = 0x4, offset = 0x4, fixed_abs, tag = 'smem constant byte address 0x4 - core index']
  #allocation1 [shape = 'u32[144,128]{1,0:T(1,128)}', space=vmem, size = 0x12000, scoped, tag = 'internal scratch']
  %s0 = inlined_call_operand.vmem [shape: bf16[8,8,16,128], index: 0, kind: input, shape index: {}]
  %s1 = inlined_call_operand.vmem [shape: bf16[2048,128], index: 1, kind: input, shape index: {}]
  %s2 = inlined_call_operand.vmem [shape: f32[1,128], index: 2, kind: input, shape index: {}]
  %s3 = inlined_call_operand.vmem [shape: bf16[1152,128], index: 3, kind: input, shape index: {}]
  %s4 = inlined_call_operand.vmem [shape: f32[1,128], index: 4, kind: input, shape index: {}]
  %s5 = inlined_call_operand.vmem [shape: bf16[128,32], index: 5, kind: input, shape index: {}]
  %s6 = inlined_call_operand.vmem [shape: f32[1,32], index: 6, kind: input, shape index: {}]
  %s7 = inlined_call_operand.vmem [shape: bf16[32,32], index: 7, kind: input, shape index: {}]
  %s8 = inlined_call_operand.vmem [shape: f32[1,32], index: 8, kind: input, shape index: {}]
  %s9 = inlined_call_operand.vmem [shape: bf16[32,32], index: 9, kind: input, shape index: {}]
  %s10 = inlined_call_operand.vmem [shape: f32[1,32], index: 10, kind: input, shape index: {}]
  %s11 = inlined_call_operand.vmem [shape: bf16[32,512], index: 11, kind: input, shape index: {}]
  %s12 = inlined_call_operand.vmem [shape: f32[1,512], index: 12, kind: input, shape index: {}]
  %s13 = inlined_call_operand.vmem [shape: f32[16,512], index: 13, kind: output, shape index: {}]
  %s14 = sld [smem:[#allocation0]]
  $region62: #{categorical_agent_forward.3} parent=0
    _
  %s16 = ssub.s32 1, %s14
  %s17 = scalar_select 0, %s16, %s14
  // Predicated region
  $region2: #{categorical_agent_forward.3} parent=0 // pred_check
    _
  $region3: #{categorical_agent_forward.3} parent=0 // pred_check_branch
    %19 = sbr.rel (0) target = $region5
  $region4: #{categorical_agent_forward.3} parent=0 // pred_region
    _
  $region5: #{categorical_agent_forward.3} parent=0 // pred_fallthru
    _
  // Predicated region
  $region6: #{categorical_agent_forward.3} parent=0 // pred_check
    _
  $region7: #{categorical_agent_forward.3} parent=0 // pred_check_branch
    %21 = sbr.rel (0) target = $region9
  $region8: #{categorical_agent_forward.3} parent=0 // pred_region
    _
  $region9: #{categorical_agent_forward.3} parent=0 // pred_fallthru
    _
  // Predicated region
  $region10: #{categorical_agent_forward.3} parent=0 // pred_check
    _
  $region11: #{categorical_agent_forward.3} parent=0 // pred_check_branch
    %23 = sbr.rel (0) target = $region13
  $region12: #{categorical_agent_forward.3} parent=0 // pred_region
    _
  $region13: #{categorical_agent_forward.3} parent=0 // pred_fallthru
    _
  // Predicated region
  $region14: #{categorical_agent_forward.3} parent=0 // pred_check
    _
  $region15: #{categorical_agent_forward.3} parent=0 // pred_check_branch
    %25 = sbr.rel (0) target = $region17
  $region16: #{categorical_agent_forward.3} parent=0 // pred_region
    _
  $region17: #{categorical_agent_forward.3} parent=0 // pred_fallthru
    _
  // Predicated region
  $region18: #{categorical_agent_forward.3} parent=0 // pred_check
    _
  $region19: #{categorical_agent_forward.3} parent=0 // pred_check_branch
    %27 = sbr.rel (0) target = $region21
  $region20: #{categorical_agent_forward.3} parent=0 // pred_region
    _
  $region21: #{categorical_agent_forward.3} parent=0 // pred_fallthru
    _
  // Predicated region
  $region22: #{categorical_agent_forward.3} parent=0 // pred_check
    _
  $region23: #{categorical_agent_forward.3} parent=0 // pred_check_branch
    %29 = sbr.rel (0) target = $region25
  $region24: #{categorical_agent_forward.3} parent=0 // pred_region
    _
  $region25: #{categorical_agent_forward.3} parent=0 // pred_fallthru
    _
  // Predicated region
  $region26: #{categorical_agent_forward.3} parent=0 // pred_check
    _
  $region27: #{categorical_agent_forward.3} parent=0 // pred_check_branch
    %31 = sbr.rel (0) target = $region29
  $region28: #{categorical_agent_forward.3} parent=0 // pred_region
    _
  $region29: #{categorical_agent_forward.3} parent=0 // pred_fallthru
    _
  // Predicated region
  $region30: #{categorical_agent_forward.3} parent=0 // pred_check
    _
  $region31: #{categorical_agent_forward.3} parent=0 // pred_check_branch
    %33 = sbr.rel (0) target = $region33
  $region32: #{categorical_agent_forward.3} parent=0 // pred_region
    _
  $region33: #{categorical_agent_forward.3} parent=0 // pred_fallthru
    _
  // Predicated region
  $region34: #{categorical_agent_forward.3} parent=0 // pred_check
    _
  $region35: #{categorical_agent_forward.3} parent=0 // pred_check_branch
    %35 = sbr.rel (0) target = $region37
  $region36: #{categorical_agent_forward.3} parent=0 // pred_region
    _
  $region37: #{categorical_agent_forward.3} parent=0 // pred_fallthru
    _
  // Predicated region
  $region38: #{categorical_agent_forward.3} parent=0 // pred_check
    _
  $region39: #{categorical_agent_forward.3} parent=0 // pred_check_branch
    %37 = sbr.rel (0) target = $region41
  $region40: #{categorical_agent_forward.3} parent=0 // pred_region
    _
  $region41: #{categorical_agent_forward.3} parent=0 // pred_fallthru
    _
  // Predicated region
  $region42: #{categorical_agent_forward.3} parent=0 // pred_check
    _
  $region43: #{categorical_agent_forward.3} parent=0 // pred_check_branch
    %39 = sbr.rel (0) target = $region45
  $region44: #{categorical_agent_forward.3} parent=0 // pred_region
    _
  $region45: #{categorical_agent_forward.3} parent=0 // pred_fallthru
    _
  // Predicated region
  $region46: #{categorical_agent_forward.3} parent=0 // pred_check
    _
  $region47: #{categorical_agent_forward.3} parent=0 // pred_check_branch
    %41 = sbr.rel (0) target = $region49
  $region48: #{categorical_agent_forward.3} parent=0 // pred_region
    _
  $region49: #{categorical_agent_forward.3} parent=0 // pred_fallthru
    _
  // Predicated region
  $region50: #{categorical_agent_forward.3} parent=0 // pred_check
    _
  $region51: #{categorical_agent_forward.3} parent=0 // pred_check_branch
    %43 = sbr.rel (0) target = $region53
  $region52: #{categorical_agent_forward.3} parent=0 // pred_region
    _
  $region53: #{categorical_agent_forward.3} parent=0 // pred_fallthru
    _
  %v45 = vld [vmem:[%s0] sm:$0xf]
  %v46 = vld [vmem:[%s0 + $0x4] sm:$0xf]
  %v47 = vld [vmem:[%s0 + $0x8] sm:$0xf]
  %v48 = vld [vmem:[%s0 + $0xc] sm:$0xf]
  %v49 = vld [vmem:[%s0 + $0x10] sm:$0xf]
  %v50 = vld [vmem:[%s0 + $0x14] sm:$0xf]
  %v51 = vld [vmem:[%s0 + $0x18] sm:$0xf]
  %v52 = vld [vmem:[%s0 + $0x1c] sm:$0xf]
  %v53 = vld [vmem:[%s0 + $0x20] sm:$0xf]
  %v54 = vld [vmem:[%s0 + $0x24] sm:$0xf]
  %v55 = vld [vmem:[%s0 + $0x28] sm:$0xf]
  %v56 = vld [vmem:[%s0 + $0x2c] sm:$0xf]
  %v57 = vld [vmem:[%s0 + $0x30] sm:$0xf]
  %v58 = vld [vmem:[%s0 + $0x34] sm:$0xf]
  %v59 = vld [vmem:[%s0 + $0x38] sm:$0xf]
  %v60 = vld [vmem:[%s0 + $0x3c] sm:$0xf]
  %v61 = vld [vmem:[%s0 + $0x40] sm:$0xf]
  %v62 = vld [vmem:[%s0 + $0x44] sm:$0xf]
  %v63 = vld [vmem:[%s0 + $0x48] sm:$0xf]
  %v64 = vld [vmem:[%s0 + $0x4c] sm:$0xf]
  %v65 = vld [vmem:[%s0 + $0x50] sm:$0xf]
  %v66 = vld [vmem:[%s0 + $0x54] sm:$0xf]
  %v67 = vld [vmem:[%s0 + $0x58] sm:$0xf]
  %v68 = vld [vmem:[%s0 + $0x5c] sm:$0xf]
  %v69 = vld [vmem:[%s0 + $0x60] sm:$0xf]
  %v70 = vld [vmem:[%s0 + $0x64] sm:$0xf]
  %v71 = vld [vmem:[%s0 + $0x68] sm:$0xf]
  %v72 = vld [vmem:[%s0 + $0x6c] sm:$0xf]
  %v73 = vld [vmem:[%s0 + $0x70] sm:$0xf]
  %v74 = vld [vmem:[%s0 + $0x74] sm:$0xf]
  %v75 = vld [vmem:[%s0 + $0x78] sm:$0xf]
  %v76 = vld [vmem:[%s0 + $0x7c] sm:$0xf]
  %v77 = vld [vmem:[%s0 + $0x80] sm:$0xf]
  %v78 = vld [vmem:[%s0 + $0x84] sm:$0xf]
  %v79 = vld [vmem:[%s0 + $0x88] sm:$0xf]
  %v80 = vld [vmem:[%s0 + $0x8c] sm:$0xf]
  %v81 = vld [vmem:[%s0 + $0x90] sm:$0xf]
  %v82 = vld [vmem:[%s0 + $0x94] sm:$0xf]
  %v83 = vld [vmem:[%s0 + $0x98] sm:$0xf]
  %v84 = vld [vmem:[%s0 + $0x9c] sm:$0xf]
  %v85 = vld [vmem:[%s0 + $0xa0] sm:$0xf]
  %v86 = vld [vmem:[%s0 + $0xa4] sm:$0xf]
  %v87 = vld [vmem:[%s0 + $0xa8] sm:$0xf]
  %v88 = vld [vmem:[%s0 + $0xac] sm:$0xf]
  %v89 = vld [vmem:[%s0 + $0xb0] sm:$0xf]
  %v90 = vld [vmem:[%s0 + $0xb4] sm:$0xf]
  %v91 = vld [vmem:[%s0 + $0xb8] sm:$0xf]
  %v92 = vld [vmem:[%s0 + $0xbc] sm:$0xf]
  %v93 = vld [vmem:[%s0 + $0xc0] sm:$0xf]
  %v94 = vld [vmem:[%s0 + $0xc4] sm:$0xf]
  %v95 = vld [vmem:[%s0 + $0xc8] sm:$0xf]
  %v96 = vld [vmem:[%s0 + $0xcc] sm:$0xf]
  %v97 = vld [vmem:[%s0 + $0xd0] sm:$0xf]
  %v98 = vld [vmem:[%s0 + $0xd4] sm:$0xf]
  %v99 = vld [vmem:[%s0 + $0xd8] sm:$0xf]
  %v100 = vld [vmem:[%s0 + $0xdc] sm:$0xf]
  %v101 = vld [vmem:[%s0 + $0xe0] sm:$0xf]
  %v102 = vld [vmem:[%s0 + $0xe4] sm:$0xf]
  %v103 = vld [vmem:[%s0 + $0xe8] sm:$0xf]
  %v104 = vld [vmem:[%s0 + $0xec] sm:$0xf]
  %v105 = vld [vmem:[%s0 + $0xf0] sm:$0xf]
  %v106 = vld [vmem:[%s0 + $0xf4] sm:$0xf]
  %v107 = vld [vmem:[%s0 + $0xf8] sm:$0xf]
  %v108 = vld [vmem:[%s0 + $0xfc] sm:$0xf]
  %v109 = vld [vmem:[%s0 + $0x100] sm:$0xf]
  %v110 = vld [vmem:[%s0 + $0x104] sm:$0xf]
  %v111 = vld [vmem:[%s0 + $0x108] sm:$0xf]
  %v112 = vld [vmem:[%s0 + $0x10c] sm:$0xf]
  %v113 = vld [vmem:[%s0 + $0x110] sm:$0xf]
  %v114 = vld [vmem:[%s0 + $0x114] sm:$0xf]
  %v115 = vld [vmem:[%s0 + $0x118] sm:$0xf]
  %v116 = vld [vmem:[%s0 + $0x11c] sm:$0xf]
  %v117 = vld [vmem:[%s0 + $0x120] sm:$0xf]
  %v118 = vld [vmem:[%s0 + $0x124] sm:$0xf]
  %v119 = vld [vmem:[%s0 + $0x128] sm:$0xf]
  %v120 = vld [vmem:[%s0 + $0x12c] sm:$0xf]
  %v121 = vld [vmem:[%s0 + $0x130] sm:$0xf]
  %v122 = vld [vmem:[%s0 + $0x134] sm:$0xf]
  %v123 = vld [vmem:[%s0 + $0x138] sm:$0xf]
  %v124 = vld [vmem:[%s0 + $0x13c] sm:$0xf]
  %v125 = vld [vmem:[%s0 + $0x140] sm:$0xf]
  %v126 = vld [vmem:[%s0 + $0x144] sm:$0xf]
  %v127 = vld [vmem:[%s0 + $0x148] sm:$0xf]
  %v128 = vld [vmem:[%s0 + $0x14c] sm:$0xf]
  %v129 = vld [vmem:[%s0 + $0x150] sm:$0xf]
  %v130 = vld [vmem:[%s0 + $0x154] sm:$0xf]
  %v131 = vld [vmem:[%s0 + $0x158] sm:$0xf]
  %v132 = vld [vmem:[%s0 + $0x15c] sm:$0xf]
  %v133 = vld [vmem:[%s0 + $0x160] sm:$0xf]
  %v134 = vld [vmem:[%s0 + $0x164] sm:$0xf]
  %v135 = vld [vmem:[%s0 + $0x168] sm:$0xf]
  %v136 = vld [vmem:[%s0 + $0x16c] sm:$0xf]
  %v137 = vld [vmem:[%s0 + $0x170] sm:$0xf]
  %v138 = vld [vmem:[%s0 + $0x174] sm:$0xf]
  %v139 = vld [vmem:[%s0 + $0x178] sm:$0xf]
  %v140 = vld [vmem:[%s0 + $0x17c] sm:$0xf]
  %v141 = vld [vmem:[%s0 + $0x180] sm:$0xf]
  %v142 = vld [vmem:[%s0 + $0x184] sm:$0xf]
  %v143 = vld [vmem:[%s0 + $0x188] sm:$0xf]
  %v144 = vld [vmem:[%s0 + $0x18c] sm:$0xf]
  %v145 = vld [vmem:[%s0 + $0x190] sm:$0xf]
  %v146 = vld [vmem:[%s0 + $0x194] sm:$0xf]
  %v147 = vld [vmem:[%s0 + $0x198] sm:$0xf]
  %v148 = vld [vmem:[%s0 + $0x19c] sm:$0xf]
  %v149 = vld [vmem:[%s0 + $0x1a0] sm:$0xf]
  %v150 = vld [vmem:[%s0 + $0x1a4] sm:$0xf]
  %v151 = vld [vmem:[%s0 + $0x1a8] sm:$0xf]
  %v152 = vld [vmem:[%s0 + $0x1ac] sm:$0xf]
  %v153 = vld [vmem:[%s0 + $0x1b0] sm:$0xf]
  %v154 = vld [vmem:[%s0 + $0x1b4] sm:$0xf]
  %v155 = vld [vmem:[%s0 + $0x1b8] sm:$0xf]
  %v156 = vld [vmem:[%s0 + $0x1bc] sm:$0xf]
  %v157 = vld [vmem:[%s0 + $0x1c0] sm:$0xf]
  %v158 = vld [vmem:[%s0 + $0x1c4] sm:$0xf]
  %v159 = vld [vmem:[%s0 + $0x1c8] sm:$0xf]
  %v160 = vld [vmem:[%s0 + $0x1cc] sm:$0xf]
  %v161 = vld [vmem:[%s0 + $0x1d0] sm:$0xf]
  %v162 = vld [vmem:[%s0 + $0x1d4] sm:$0xf]
  %v163 = vld [vmem:[%s0 + $0x1d8] sm:$0xf]
  %v164 = vld [vmem:[%s0 + $0x1dc] sm:$0xf]
  %v165 = vld [vmem:[%s0 + $0x1e0] sm:$0xf]
  %v166 = vld [vmem:[%s0 + $0x1e4] sm:$0xf]
  %v167 = vld [vmem:[%s0 + $0x1e8] sm:$0xf]
  %v168 = vld [vmem:[%s0 + $0x1ec] sm:$0xf]
  %v169 = vld [vmem:[%s0 + $0x1f0] sm:$0xf]
  %v170 = vld [vmem:[%s0 + $0x1f4] sm:$0xf]
  %v171 = vld [vmem:[%s0 + $0x1f8] sm:$0xf]
  %v172 = vld [vmem:[%s0 + $0x1fc] sm:$0xf]
  %v173 = vld [vmem:[%s1] sm:$0xf]
  %v174 = vld [vmem:[%s1 + $0x4] sm:$0xf]
  %v175 = vld [vmem:[%s1 + $0x8] sm:$0xf]
  %v176 = vld [vmem:[%s1 + $0xc] sm:$0xf]
  %v177 = vld [vmem:[%s1 + $0x10] sm:$0xf]
  %v178 = vld [vmem:[%s1 + $0x14] sm:$0xf]
  %v179 = vld [vmem:[%s1 + $0x18] sm:$0xf]
  %v180 = vld [vmem:[%s1 + $0x1c] sm:$0xf]
  %v181 = vld [vmem:[%s1 + $0x20] sm:$0xf]
  %v182 = vld [vmem:[%s1 + $0x24] sm:$0xf]
  %v183 = vld [vmem:[%s1 + $0x28] sm:$0xf]
  %v184 = vld [vmem:[%s1 + $0x2c] sm:$0xf]
  %v185 = vld [vmem:[%s1 + $0x30] sm:$0xf]
  %v186 = vld [vmem:[%s1 + $0x34] sm:$0xf]
  %v187 = vld [vmem:[%s1 + $0x38] sm:$0xf]
  %v188 = vld [vmem:[%s1 + $0x3c] sm:$0xf]
  %v189 = vld [vmem:[%s1 + $0x40] sm:$0xf]
  %v190 = vld [vmem:[%s1 + $0x44] sm:$0xf]
  %v191 = vld [vmem:[%s1 + $0x48] sm:$0xf]
  %v192 = vld [vmem:[%s1 + $0x4c] sm:$0xf]
  %v193 = vld [vmem:[%s1 + $0x50] sm:$0xf]
  %v194 = vld [vmem:[%s1 + $0x54] sm:$0xf]
  %v195 = vld [vmem:[%s1 + $0x58] sm:$0xf]
  %v196 = vld [vmem:[%s1 + $0x5c] sm:$0xf]
  %v197 = vld [vmem:[%s1 + $0x60] sm:$0xf]
  %v198 = vld [vmem:[%s1 + $0x64] sm:$0xf]
  %v199 = vld [vmem:[%s1 + $0x68] sm:$0xf]
  %v200 = vld [vmem:[%s1 + $0x6c] sm:$0xf]
  %v201 = vld [vmem:[%s1 + $0x70] sm:$0xf]
  %v202 = vld [vmem:[%s1 + $0x74] sm:$0xf]
  %v203 = vld [vmem:[%s1 + $0x78] sm:$0xf]
  %v204 = vld [vmem:[%s1 + $0x7c] sm:$0xf]
  %v223 = vunpack.c.l.b16 %v47
  %v224 = vunpack.c.l.b16 %v48
  %v225 = vunpack.c.l.b16 %v51
  %v226 = vunpack.c.l.b16 %v52
  %v227 = vunpack.c.l.b16 %v55
  %v228 = vunpack.c.l.b16 %v56
  %v229 = vunpack.c.l.b16 %v79
  %v230 = vunpack.c.l.b16 %v80
  %v231 = vunpack.c.l.b16 %v83
  %v232 = vunpack.c.l.b16 %v84
  %v233 = vunpack.c.l.b16 %v87
  %v234 = vunpack.c.l.b16 %v88
  %v235 = vunpack.c.l.b16 %v111
  %v236 = vunpack.c.l.b16 %v112
  %v237 = vunpack.c.l.b16 %v115
  %v238 = vunpack.c.l.b16 %v116
  %v239 = vunpack.c.l.b16 %v119
  %v240 = vunpack.c.l.b16 %v120
  %v241 = vpack.c.b16 %v224, %v223
  %v242 = vpack.c.b16 %v226, %v225
  %v243 = vpack.c.b16 %v228, %v227
  %v244 = vpack.c.b16 %v230, %v229
  %v245 = vpack.c.b16 %v232, %v231
  %v246 = vpack.c.b16 %v234, %v233
  %v247 = vpack.c.b16 %v236, %v235
  %v248 = vpack.c.b16 %v238, %v237
  %v249 = vpack.c.b16 %v240, %v239
  %v275 = vunpack.c.l.b16 %v189
  %v276 = vunpack.c.l.b16 %v190
  %v277 = vunpack.c.l.b16 %v191
  %v278 = vunpack.c.l.b16 %v192
  %v279 = vunpack.c.l.b16 %v193
  %v280 = vunpack.c.l.b16 %v194
  %v281 = vunpack.c.l.b16 %v195
  %v282 = vunpack.c.l.b16 %v196
  %v283 = vunpack.c.l.b16 %v197
  %v284 = vunpack.c.l.b16 %v198
  %v285 = vunpack.c.l.b16 %v199
  %v286 = vunpack.c.l.b16 %v200
  %v287 = vunpack.c.l.b16 %v201
  %v288 = vunpack.c.l.b16 %v202
  %v289 = vunpack.c.l.b16 %v203
  %v290 = vunpack.c.l.b16 %v204
  %v291 = vpack.c.b16 %v276, %v275
  %v292 = vpack.c.b16 %v278, %v277
  %v293 = vpack.c.b16 %v280, %v279
  %v294 = vpack.c.b16 %v282, %v281
  %v295 = vpack.c.b16 %v284, %v283
  %v296 = vpack.c.b16 %v286, %v285
  %v297 = vpack.c.b16 %v288, %v287
  %v298 = vpack.c.b16 %v290, %v289
  %307 = vmatprep.subr.bf16.mxu0 0
  %308 = vmatpush1.bf16.msra.mxu0 %v291
  %309 = vmatprep.subr.bf16.mxu0 0
  %310 = vmatpush1.bf16.msra.mxu0 %v292
  %311 = vmatprep.subr.bf16.mxu0 0
  %312 = vmatpush1.bf16.msra.mxu0 %v293
  %313 = vmatprep.subr.bf16.mxu0 0
  %314 = vmatpush1.bf16.msra.mxu0 %v294
  %315 = vmatprep.subr.bf16.mxu0 0
  %316 = vmatpush1.bf16.msra.mxu0 %v295
  %317 = vmatprep.subr.bf16.mxu0 0
  %318 = vmatpush1.bf16.msra.mxu0 %v296
  %319 = vmatprep.subr.bf16.mxu0 0
  %320 = vmatpush1.bf16.msra.mxu0 %v297
  %321 = vmatprep.subr.bf16.mxu0 0
  %322 = vmatpush1.bf16.msra.mxu0 %v298
  %323 = vmatprep.subr.bf16.mxu0 0
  %324 = vmatpush1.bf16.msra.mxu0 0
  %325 = vmatprep.subr.bf16.mxu0 0
  %326 = vmatpush1.bf16.msra.mxu0 0
  %327 = vmatprep.subr.bf16.mxu0 0
  %328 = vmatpush1.bf16.msra.mxu0 0
  %329 = vmatprep.subr.bf16.mxu0 0
  %330 = vmatpush1.bf16.msra.mxu0 0
  %331 = vmatprep.subr.bf16.mxu0 0
  %332 = vmatpush1.bf16.msra.mxu0 0
  %333 = vmatprep.subr.bf16.mxu0 0
  %334 = vmatpush1.bf16.msra.mxu0 0
  %335 = vmatprep.subr.bf16.mxu0 0
  %336 = vmatpush1.bf16.msra.mxu0 0
  %337 = vmatprep.subr.bf16.mxu0 0
  %338 = vmatpush1.bf16.msra.mxu0 0
  %339 = vmatprep.mubr.bf16.mxu0 0
  %340 = vmatmul.mubr.bf16.gmra.mrb[0].mxu0 %v241
  %v341 = vpop.f32.mrb[0].mxu0
  %v342 = vadd.f32 0.0, %v341
  %v343 = vpop.f32.mrb[0].mxu0
  %v344 = vpop.f32.mrb[0].mxu0
  %v345 = vadd.f32 0.0, %v344
  %v346 = vpop.f32.mrb[0].mxu0
  %347 = vmatprep.mubr.bf16.mxu0 0
  %348 = vmatmul.mubr.bf16.gmra.mrb[0].mxu0 %v242
  %v349 = vpop.f32.mrb[0].mxu0
  %v350 = vadd.f32 0.0, %v349
  %v351 = vpop.f32.mrb[0].mxu0
  %v352 = vpop.f32.mrb[0].mxu0
  %v353 = vadd.f32 0.0, %v352
  %v354 = vpop.f32.mrb[0].mxu0
  %355 = vmatprep.mubr.bf16.mxu0 0
  %356 = vmatmul.mubr.bf16.gmra.mrb[0].mxu0 %v243
  %v357 = vpop.f32.mrb[0].mxu0
  %v358 = vadd.f32 0.0, %v357
  %v359 = vpop.f32.mrb[0].mxu0
  %v360 = vpop.f32.mrb[0].mxu0
  %v361 = vadd.f32 0.0, %v360
  %v362 = vpop.f32.mrb[0].mxu0
  %363 = vmatprep.mubr.bf16.mxu0 0
  %364 = vmatmul.mubr.bf16.gmra.mrb[0].mxu0 %v244
  %v365 = vpop.f32.mrb[0].mxu0
  %v366 = vadd.f32 0.0, %v365
  %v367 = vpop.f32.mrb[0].mxu0
  %v368 = vpop.f32.mrb[0].mxu0
  %v369 = vadd.f32 0.0, %v368
  %v370 = vpop.f32.mrb[0].mxu0
  %371 = vmatprep.mubr.bf16.mxu0 0
  %372 = vmatmul.mubr.bf16.gmra.mrb[0].mxu0 %v245
  %v373 = vpop.f32.mrb[0].mxu0
  %v374 = vadd.f32 0.0, %v373
  %v375 = vpop.f32.mrb[0].mxu0
  %v376 = vpop.f32.mrb[0].mxu0
  %v377 = vadd.f32 0.0, %v376
  %v378 = vpop.f32.mrb[0].mxu0
  %379 = vmatprep.mubr.bf16.mxu0 0
  %380 = vmatmul.mubr.bf16.gmra.mrb[0].mxu0 %v246
  %v381 = vpop.f32.mrb[0].mxu0
  %v382 = vadd.f32 0.0, %v381
  %v383 = vpop.f32.mrb[0].mxu0
  %v384 = vpop.f32.mrb[0].mxu0
  %v385 = vadd.f32 0.0, %v384
  %v386 = vpop.f32.mrb[0].mxu0
  %387 = vmatprep.mubr.bf16.mxu0 0
  %388 = vmatmul.mubr.bf16.gmra.mrb[0].mxu0 %v247
  %v389 = vpop.f32.mrb[0].mxu0
  %v390 = vadd.f32 0.0, %v389
  %v391 = vpop.f32.mrb[0].mxu0
  %v392 = vpop.f32.mrb[0].mxu0
  %v393 = vadd.f32 0.0, %v392
  %v394 = vpop.f32.mrb[0].mxu0
  %395 = vmatprep.mubr.bf16.mxu0 0
  %396 = vmatmul.mubr.bf16.gmra.mrb[0].mxu0 %v248
  %v397 = vpop.f32.mrb[0].mxu0
  %v398 = vadd.f32 0.0, %v397
  %v399 = vpop.f32.mrb[0].mxu0
  %v400 = vpop.f32.mrb[0].mxu0
  %v401 = vadd.f32 0.0, %v400
  %v402 = vpop.f32.mrb[0].mxu0
  %403 = vmatprep.mubr.bf16.mxu0 0
  %404 = vmatmul.mubr.bf16.gmra.mrb[0].mxu0 %v249
  %v405 = vpop.f32.mrb[0].mxu0
  %v406 = vadd.f32 0.0, %v405
  %v407 = vpop.f32.mrb[0].mxu0
  %v408 = vpop.f32.mrb[0].mxu0
  %v409 = vadd.f32 0.0, %v408
  %v410 = vpop.f32.mrb[0].mxu0
  %411 = vdwg.mxu0
  %v430 = vunpack.c.l.b16 %v45
  %v431 = vunpack.c.l.b16 %v46
  %v432 = vunpack.c.l.b16 %v49
  %v433 = vunpack.c.l.b16 %v50
  %v434 = vunpack.c.l.b16 %v53
  %v435 = vunpack.c.l.b16 %v54
  %v436 = vunpack.c.l.b16 %v77
  %v437 = vunpack.c.l.b16 %v78
  %v438 = vunpack.c.l.b16 %v81
  %v439 = vunpack.c.l.b16 %v82
  %v440 = vunpack.c.l.b16 %v85
  %v441 = vunpack.c.l.b16 %v86
  %v442 = vunpack.c.l.b16 %v109
  %v443 = vunpack.c.l.b16 %v110
  %v444 = vunpack.c.l.b16 %v113
  %v445 = vunpack.c.l.b16 %v114
  %v446 = vunpack.c.l.b16 %v117
  %v447 = vunpack.c.l.b16 %v118
  %v448 = vpack.c.b16 %v431, %v430
  %v449 = vpack.c.b16 %v433, %v432
  %v450 = vpack.c.b16 %v435, %v434
  %v451 = vpack.c.b16 %v437, %v436
  %v452 = vpack.c.b16 %v439, %v438
  %v453 = vpack.c.b16 %v441, %v440
  %v454 = vpack.c.b16 %v443, %v442
  %v455 = vpack.c.b16 %v445, %v444
  %v456 = vpack.c.b16 %v447, %v446
  %v482 = vunpack.c.l.b16 %v173
  %v483 = vunpack.c.l.b16 %v174
  %v484 = vunpack.c.l.b16 %v175
  %v485 = vunpack.c.l.b16 %v176
  %v486 = vunpack.c.l.b16 %v177
  %v487 = vunpack.c.l.b16 %v178
  %v488 = vunpack.c.l.b16 %v179
  %v489 = vunpack.c.l.b16 %v180
  %v490 = vunpack.c.l.b16 %v181
  %v491 = vunpack.c.l.b16 %v182
  %v492 = vunpack.c.l.b16 %v183
  %v493 = vunpack.c.l.b16 %v184
  %v494 = vunpack.c.l.b16 %v185
  %v495 = vunpack.c.l.b16 %v186
  %v496 = vunpack.c.l.b16 %v187
  %v497 = vunpack.c.l.b16 %v188
  %v498 = vpack.c.b16 %v483, %v482
  %v499 = vpack.c.b16 %v485, %v484
  %v500 = vpack.c.b16 %v487, %v486
  %v501 = vpack.c.b16 %v489, %v488
  %v502 = vpack.c.b16 %v491, %v490
  %v503 = vpack.c.b16 %v493, %v492
  %v504 = vpack.c.b16 %v495, %v494
  %v505 = vpack.c.b16 %v497, %v496
  %514 = vmatprep.subr.bf16.mxu0 0
  %515 = vmatpush1.bf16.msra.mxu0 %v498
  %516 = vmatprep.subr.bf16.mxu0 0
  %517 = vmatpush1.bf16.msra.mxu0 %v499
  %518 = vmatprep.subr.bf16.mxu0 0
  %519 = vmatpush1.bf16.msra.mxu0 %v500
  %520 = vmatprep.subr.bf16.mxu0 0
  %521 = vmatpush1.bf16.msra.mxu0 %v501
  %522 = vmatprep.subr.bf16.mxu0 0
  %523 = vmatpush1.bf16.msra.mxu0 %v502
  %524 = vmatprep.subr.bf16.mxu0 0
  %525 = vmatpush1.bf16.msra.mxu0 %v503
  %526 = vmatprep.subr.bf16.mxu0 0
  %527 = vmatpush1.bf16.msra.mxu0 %v504
  %528 = vmatprep.subr.bf16.mxu0 0
  %529 = vmatpush1.bf16.msra.mxu0 %v505
  %530 = vmatprep.subr.bf16.mxu0 0
  %531 = vmatpush1.bf16.msra.mxu0 0
  %532 = vmatprep.subr.bf16.mxu0 0
  %533 = vmatpush1.bf16.msra.mxu0 0
  %534 = vmatprep.subr.bf16.mxu0 0
  %535 = vmatpush1.bf16.msra.mxu0 0
  %536 = vmatprep.subr.bf16.mxu0 0
  %537 = vmatpush1.bf16.msra.mxu0 0
  %538 = vmatprep.subr.bf16.mxu0 0
  %539 = vmatpush1.bf16.msra.mxu0 0
  %540 = vmatprep.subr.bf16.mxu0 0
  %541 = vmatpush1.bf16.msra.mxu0 0
  %542 = vmatprep.subr.bf16.mxu0 0
  %543 = vmatpush1.bf16.msra.mxu0 0
  %544 = vmatprep.subr.bf16.mxu0 0
  %545 = vmatpush1.bf16.msra.mxu0 0
  %546 = vmatprep.mubr.bf16.mxu0 0
  %547 = vmatmul.mubr.bf16.gmra.mrb[0].mxu0 %v448
  %v548 = vpop.f32.mrb[0].mxu0
  %v549 = vadd.f32 %v342, %v548
  %v550 = vpop.f32.mrb[0].mxu0
  %v551 = vpop.f32.mrb[0].mxu0
  %v552 = vadd.f32 %v345, %v551
  %v553 = vpop.f32.mrb[0].mxu0
  %554 = vmatprep.mubr.bf16.mxu0 0
  %555 = vmatmul.mubr.bf16.gmra.mrb[0].mxu0 %v449
  %v556 = vpop.f32.mrb[0].mxu0
  %v557 = vadd.f32 %v350, %v556
  %v558 = vpop.f32.mrb[0].mxu0
  %v559 = vpop.f32.mrb[0].mxu0
  %v560 = vadd.f32 %v353, %v559
  %v561 = vpop.f32.mrb[0].mxu0
  %562 = vmatprep.mubr.bf16.mxu0 0
  %563 = vmatmul.mubr.bf16.gmra.mrb[0].mxu0 %v450
  %v564 = vpop.f32.mrb[0].mxu0
  %v565 = vadd.f32 %v358, %v564
  %v566 = vpop.f32.mrb[0].mxu0
  %v567 = vpop.f32.mrb[0].mxu0
  %v568 = vadd.f32 %v361, %v567
  %v569 = vpop.f32.mrb[0].mxu0
  %570 = vmatprep.mubr.bf16.mxu0 0
  %571 = vmatmul.mubr.bf16.gmra.mrb[0].mxu0 %v451
  %v572 = vpop.f32.mrb[0].mxu0
  %v573 = vadd.f32 %v366, %v572
  %v574 = vpop.f32.mrb[0].mxu0
  %v575 = vpop.f32.mrb[0].mxu0
  %v576 = vadd.f32 %v369, %v575
  %v577 = vpop.f32.mrb[0].mxu0
  %578 = vmatprep.mubr.bf16.mxu0 0
  %579 = vmatmul.mubr.bf16.gmra.mrb[0].mxu0 %v452
  %v580 = vpop.f32.mrb[0].mxu0
  %v581 = vadd.f32 %v374, %v580
  %v582 = vpop.f32.mrb[0].mxu0
  %v583 = vpop.f32.mrb[0].mxu0
  %v584 = vadd.f32 %v377, %v583
  %v585 = vpop.f32.mrb[0].mxu0
  %586 = vmatprep.mubr.bf16.mxu0 0
  %587 = vmatmul.mubr.bf16.gmra.mrb[0].mxu0 %v453
  %v588 = vpop.f32.mrb[0].mxu0
  %v589 = vadd.f32 %v382, %v588
  %v590 = vpop.f32.mrb[0].mxu0
  %v591 = vpop.f32.mrb[0].mxu0
  %v592 = vadd.f32 %v385, %v591
  %v593 = vpop.f32.mrb[0].mxu0
  %594 = vmatprep.mubr.bf16.mxu0 0
  %595 = vmatmul.mubr.bf16.gmra.mrb[0].mxu0 %v454
  %v596 = vpop.f32.mrb[0].mxu0
  %v597 = vadd.f32 %v390, %v596
  %v598 = vpop.f32.mrb[0].mxu0
  %v599 = vpop.f32.mrb[0].mxu0
  %v600 = vadd.f32 %v393, %v599
  %v601 = vpop.f32.mrb[0].mxu0
  %602 = vmatprep.mubr.bf16.mxu0 0
  %603 = vmatmul.mubr.bf16.gmra.mrb[0].mxu0 %v455
  %v604 = vpop.f32.mrb[0].mxu0
  %v605 = vadd.f32 %v398, %v604
  %v606 = vpop.f32.mrb[0].mxu0
  %v607 = vpop.f32.mrb[0].mxu0
  %v608 = vadd.f32 %v401, %v607
  %v609 = vpop.f32.mrb[0].mxu0
  %610 = vmatprep.mubr.bf16.mxu0 0
  %611 = vmatmul.mubr.bf16.gmra.mrb[0].mxu0 %v456
  %v612 = vpop.f32.mrb[0].mxu0
  %v613 = vadd.f32 %v406, %v612
  %v614 = vpop.f32.mrb[0].mxu0
  %v615 = vpop.f32.mrb[0].mxu0
  %v616 = vadd.f32 %v409, %v615
  %v617 = vpop.f32.mrb[0].mxu0
  %618 = vdwg.mxu0
  %v619 = vld [vmem:[%s1 + $0x80] sm:$0xf]
  %v620 = vld [vmem:[%s1 + $0x84] sm:$0xf]
  %v621 = vld [vmem:[%s1 + $0x88] sm:$0xf]
  %v622 = vld [vmem:[%s1 + $0x8c] sm:$0xf]
  %v623 = vld [vmem:[%s1 + $0x90] sm:$0xf]
  %v624 = vld [vmem:[%s1 + $0x94] sm:$0xf]
  %v625 = vld [vmem:[%s1 + $0x98] sm:$0xf]
  %v626 = vld [vmem:[%s1 + $0x9c] sm:$0xf]
  %v627 = vld [vmem:[%s1 + $0xa0] sm:$0xf]
  %v628 = vld [vmem:[%s1 + $0xa4] sm:$0xf]
  %v629 = vld [vmem:[%s1 + $0xa8] sm:$0xf]
  %v630 = vld [vmem:[%s1 + $0xac] sm:$0xf]
  %v631 = vld [vmem:[%s1 + $0xb0] sm:$0xf]
  %v632 = vld [vmem:[%s1 + $0xb4] sm:$0xf]
  %v633 = vld [vmem:[%s1 + $0xb8] sm:$0xf]
  %v634 = vld [vmem:[%s1 + $0xbc] sm:$0xf]
  %v641 = vunpack.c.l.b16 %v57
  %v642 = vunpack.c.l.b16 %v58
  %v643 = vunpack.c.l.b16 %v89
  %v644 = vunpack.c.l.b16 %v90
  %v645 = vunpack.c.l.b16 %v121
  %v646 = vunpack.c.l.b16 %v122
  %v647 = vpack.c.b16 %v642, %v641
  %v648 = vpack.c.b16 %v644, %v643
  %v649 = vpack.c.b16 %v646, %v645
  %v669 = vunpack.c.l.b16 %v619
  %v670 = vunpack.c.l.b16 %v620
  %v671 = vunpack.c.l.b16 %v621
  %v672 = vunpack.c.l.b16 %v622
  %v673 = vunpack.c.l.b16 %v623
  %v674 = vunpack.c.l.b16 %v624
  %v675 = vunpack.c.l.b16 %v625
  %v676 = vunpack.c.l.b16 %v626
  %v677 = vunpack.c.l.b16 %v627
  %v678 = vunpack.c.l.b16 %v628
  %v679 = vunpack.c.l.b16 %v629
  %v680 = vunpack.c.l.b16 %v630
  %v681 = vunpack.c.l.b16 %v631
  %v682 = vunpack.c.l.b16 %v632
  %v683 = vunpack.c.l.b16 %v633
  %v684 = vunpack.c.l.b16 %v634
  %v685 = vpack.c.b16 %v670, %v669
  %v686 = vpack.c.b16 %v672, %v671
  %v687 = vpack.c.b16 %v674, %v673
  %v688 = vpack.c.b16 %v676, %v675
  %v689 = vpack.c.b16 %v678, %v677
  %v690 = vpack.c.b16 %v680, %v679
  %v691 = vpack.c.b16 %v682, %v681
  %v692 = vpack.c.b16 %v684, %v683
  %701 = vmatprep.subr.bf16.mxu0 0
  %702 = vmatpush1.bf16.msra.mxu0 %v685
  %703 = vmatprep.subr.bf16.mxu0 0
  %704 = vmatpush1.bf16.msra.mxu0 %v686
  %705 = vmatprep.subr.bf16.mxu0 0
  %706 = vmatpush1.bf16.msra.mxu0 %v687
  %707 = vmatprep.subr.bf16.mxu0 0
  %708 = vmatpush1.bf16.msra.mxu0 %v688
  %709 = vmatprep.subr.bf16.mxu0 0
  %710 = vmatpush1.bf16.msra.mxu0 %v689
  %711 = vmatprep.subr.bf16.mxu0 0
  %712 = vmatpush1.bf16.msra.mxu0 %v690
  %713 = vmatprep.subr.bf16.mxu0 0
  %714 = vmatpush1.bf16.msra.mxu0 %v691
  %715 = vmatprep.subr.bf16.mxu0 0
  %716 = vmatpush1.bf16.msra.mxu0 %v692
  %717 = vmatprep.subr.bf16.mxu0 0
  %718 = vmatpush1.bf16.msra.mxu0 0
  %719 = vmatprep.subr.bf16.mxu0 0
  %720 = vmatpush1.bf16.msra.mxu0 0
  %721 = vmatprep.subr.bf16.mxu0 0
  %722 = vmatpush1.bf16.msra.mxu0 0
  %723 = vmatprep.subr.bf16.mxu0 0
  %724 = vmatpush1.bf16.msra.mxu0 0
  %725 = vmatprep.subr.bf16.mxu0 0
  %726 = vmatpush1.bf16.msra.mxu0 0
  %727 = vmatprep.subr.bf16.mxu0 0
  %728 = vmatpush1.bf16.msra.mxu0 0
  %729 = vmatprep.subr.bf16.mxu0 0
  %730 = vmatpush1.bf16.msra.mxu0 0
  %731 = vmatprep.subr.bf16.mxu0 0
  %732 = vmatpush1.bf16.msra.mxu0 0
  %733 = vmatprep.mubr.bf16.mxu0 0
  %734 = vmatmul.mubr.bf16.gmra.mrb[0].mxu0 %v449
  %v735 = vpop.f32.mrb[0].mxu0
  %v736 = vadd.f32 0.0, %v735
  %v737 = vpop.f32.mrb[0].mxu0
  %v738 = vpop.f32.mrb[0].mxu0
  %v739 = vadd.f32 0.0, %v738
  %v740 = vpop.f32.mrb[0].mxu0
  %741 = vmatprep.mubr.bf16.mxu0 0
  %742 = vmatmul.mubr.bf16.gmra.mrb[0].mxu0 %v450
  %v743 = vpop.f32.mrb[0].mxu0
  %v744 = vadd.f32 0.0, %v743
  %v745 = vpop.f32.mrb[0].mxu0
  %v746 = vpop.f32.mrb[0].mxu0
  %v747 = vadd.f32 0.0, %v746
  %v748 = vpop.f32.mrb[0].mxu0
  %749 = vmatprep.mubr.bf16.mxu0 0
  %750 = vmatmul.mubr.bf16.gmra.mrb[0].mxu0 %v647
  %v751 = vpop.f32.mrb[0].mxu0
  %v752 = vadd.f32 0.0, %v751
  %v753 = vpop.f32.mrb[0].mxu0
  %v754 = vpop.f32.mrb[0].mxu0
  %v755 = vadd.f32 0.0, %v754
  %v756 = vpop.f32.mrb[0].mxu0
  %757 = vmatprep.mubr.bf16.mxu0 0
  %758 = vmatmul.mubr.bf16.gmra.mrb[0].mxu0 %v452
  %v759 = vpop.f32.mrb[0].mxu0
  %v760 = vadd.f32 0.0, %v759
  %v761 = vpop.f32.mrb[0].mxu0
  %v762 = vpop.f32.mrb[0].mxu0
  %v763 = vadd.f32 0.0, %v762
  %v764 = vpop.f32.mrb[0].mxu0
  %765 = vmatprep.mubr.bf16.mxu0 0
  %766 = vmatmul.mubr.bf16.gmra.mrb[0].mxu0 %v453
  %v767 = vpop.f32.mrb[0].mxu0
  %v768 = vadd.f32 0.0, %v767
  %v769 = vpop.f32.mrb[0].mxu0
  %v770 = vpop.f32.mrb[0].mxu0
  %v771 = vadd.f32 0.0, %v770
  %v772 = vpop.f32.mrb[0].mxu0
  %773 = vmatprep.mubr.bf16.mxu0 0
  %774 = vmatmul.mubr.bf16.gmra.mrb[0].mxu0 %v648
  %v775 = vpop.f32.mrb[0].mxu0
  %v776 = vadd.f32 0.0, %v775
  %v777 = vpop.f32.mrb[0].mxu0
  %v778 = vpop.f32.mrb[0].mxu0
  %v779 = vadd.f32 0.0, %v778
  %v780 = vpop.f32.mrb[0].mxu0
  %781 = vmatprep.mubr.bf16.mxu0 0
  %782 = vmatmul.mubr.bf16.gmra.mrb[0].mxu0 %v455
  %v783 = vpop.f32.mrb[0].mxu0
  %v784 = vadd.f32 0.0, %v783
  %v785 = vpop.f32.mrb[0].mxu0
  %v786 = vpop.f32.mrb[0].mxu0
  %v787 = vadd.f32 0.0, %v786
  %v788 = vpop.f32.mrb[0].mxu0
  %789 = vmatprep.mubr.bf16.mxu0 0
  %790 = vmatmul.mubr.bf16.gmra.mrb[0].mxu0 %v456
  %v791 = vpop.f32.mrb[0].mxu0
  %v792 = vadd.f32 0.0, %v791
  %v793 = vpop.f32.mrb[0].mxu0
  %v794 = vpop.f32.mrb[0].mxu0
  %v795 = vadd.f32 0.0, %v794
  %v796 = vpop.f32.mrb[0].mxu0
  %797 = vmatprep.mubr.bf16.mxu0 0
  %798 = vmatmul.mubr.bf16.gmra.mrb[0].mxu0 %v649
  %v799 = vpop.f32.mrb[0].mxu0
  %v800 = vadd.f32 0.0, %v799
  %v801 = vpop.f32.mrb[0].mxu0
  %v802 = vpop.f32.mrb[0].mxu0
  %v803 = vadd.f32 0.0, %v802
  %v804 = vpop.f32.mrb[0].mxu0
  %805 = vdwg.mxu0
  %v806 = vadd.f32 %v549, %v736
  %v807 = vadd.f32 %v552, %v739
  %v808 = vadd.f32 %v557, %v744
  %v809 = vadd.f32 %v560, %v747
  %v810 = vadd.f32 %v565, %v752
  %v811 = vadd.f32 %v568, %v755
  %v812 = vadd.f32 %v573, %v760
  %v813 = vadd.f32 %v576, %v763
  %v814 = vadd.f32 %v581, %v768
  %v815 = vadd.f32 %v584, %v771
  %v816 = vadd.f32 %v589, %v776
  %v817 = vadd.f32 %v592, %v779
  %v818 = vadd.f32 %v597, %v784
  %v819 = vadd.f32 %v600, %v787
  %v820 = vadd.f32 %v605, %v792
  %v821 = vadd.f32 %v608, %v795
  %v822 = vadd.f32 %v613, %v800
  %v823 = vadd.f32 %v616, %v803
  %v824 = vld [vmem:[%s1 + $0xc0] sm:$0xf]
  %v825 = vld [vmem:[%s1 + $0xc4] sm:$0xf]
  %v826 = vld [vmem:[%s1 + $0xc8] sm:$0xf]
  %v827 = vld [vmem:[%s1 + $0xcc] sm:$0xf]
  %v828 = vld [vmem:[%s1 + $0xd0] sm:$0xf]
  %v829 = vld [vmem:[%s1 + $0xd4] sm:$0xf]
  %v830 = vld [vmem:[%s1 + $0xd8] sm:$0xf]
  %v831 = vld [vmem:[%s1 + $0xdc] sm:$0xf]
  %v832 = vld [vmem:[%s1 + $0xe0] sm:$0xf]
  %v833 = vld [vmem:[%s1 + $0xe4] sm:$0xf]
  %v834 = vld [vmem:[%s1 + $0xe8] sm:$0xf]
  %v835 = vld [vmem:[%s1 + $0xec] sm:$0xf]
  %v836 = vld [vmem:[%s1 + $0xf0] sm:$0xf]
  %v837 = vld [vmem:[%s1 + $0xf4] sm:$0xf]
  %v838 = vld [vmem:[%s1 + $0xf8] sm:$0xf]
  %v839 = vld [vmem:[%s1 + $0xfc] sm:$0xf]
  %v846 = vunpack.c.l.b16 %v59
  %v847 = vunpack.c.l.b16 %v60
  %v848 = vunpack.c.l.b16 %v91
  %v849 = vunpack.c.l.b16 %v92
  %v850 = vunpack.c.l.b16 %v123
  %v851 = vunpack.c.l.b16 %v124
  %v852 = vpack.c.b16 %v847, %v846
  %v853 = vpack.c.b16 %v849, %v848
  %v854 = vpack.c.b16 %v851, %v850
  %v874 = vunpack.c.l.b16 %v824
  %v875 = vunpack.c.l.b16 %v825
  %v876 = vunpack.c.l.b16 %v826
  %v877 = vunpack.c.l.b16 %v827
  %v878 = vunpack.c.l.b16 %v828
  %v879 = vunpack.c.l.b16 %v829
  %v880 = vunpack.c.l.b16 %v830
  %v881 = vunpack.c.l.b16 %v831
  %v882 = vunpack.c.l.b16 %v832
  %v883 = vunpack.c.l.b16 %v833
  %v884 = vunpack.c.l.b16 %v834
  %v885 = vunpack.c.l.b16 %v835
  %v886 = vunpack.c.l.b16 %v836
  %v887 = vunpack.c.l.b16 %v837
  %v888 = vunpack.c.l.b16 %v838
  %v889 = vunpack.c.l.b16 %v839
  %v890 = vpack.c.b16 %v875, %v874
  %v891 = vpack.c.b16 %v877, %v876
  %v892 = vpack.c.b16 %v879, %v878
  %v893 = vpack.c.b16 %v881, %v880
  %v894 = vpack.c.b16 %v883, %v882
  %v895 = vpack.c.b16 %v885, %v884
  %v896 = vpack.c.b16 %v887, %v886
  %v897 = vpack.c.b16 %v889, %v888
  %906 = vmatprep.subr.bf16.mxu0 0
  %907 = vmatpush1.bf16.msra.mxu0 %v890
  %908 = vmatprep.subr.bf16.mxu0 0
  %909 = vmatpush1.bf16.msra.mxu0 %v891
  %910 = vmatprep.subr.bf16.mxu0 0
  %911 = vmatpush1.bf16.msra.mxu0 %v892
  %912 = vmatprep.subr.bf16.mxu0 0
  %913 = vmatpush1.bf16.msra.mxu0 %v893
  %914 = vmatprep.subr.bf16.mxu0 0
  %915 = vmatpush1.bf16.msra.mxu0 %v894
  %916 = vmatprep.subr.bf16.mxu0 0
  %917 = vmatpush1.bf16.msra.mxu0 %v895
  %918 = vmatprep.subr.bf16.mxu0 0
  %919 = vmatpush1.bf16.msra.mxu0 %v896
  %920 = vmatprep.subr.bf16.mxu0 0
  %921 = vmatpush1.bf16.msra.mxu0 %v897
  %922 = vmatprep.subr.bf16.mxu0 0
  %923 = vmatpush1.bf16.msra.mxu0 0
  %924 = vmatprep.subr.bf16.mxu0 0
  %925 = vmatpush1.bf16.msra.mxu0 0
  %926 = vmatprep.subr.bf16.mxu0 0
  %927 = vmatpush1.bf16.msra.mxu0 0
  %928 = vmatprep.subr.bf16.mxu0 0
  %929 = vmatpush1.bf16.msra.mxu0 0
  %930 = vmatprep.subr.bf16.mxu0 0
  %931 = vmatpush1.bf16.msra.mxu0 0
  %932 = vmatprep.subr.bf16.mxu0 0
  %933 = vmatpush1.bf16.msra.mxu0 0
  %934 = vmatprep.subr.bf16.mxu0 0
  %935 = vmatpush1.bf16.msra.mxu0 0
  %936 = vmatprep.subr.bf16.mxu0 0
  %937 = vmatpush1.bf16.msra.mxu0 0
  %938 = vmatprep.mubr.bf16.mxu0 0
  %939 = vmatmul.mubr.bf16.gmra.mrb[0].mxu0 %v242
  %v940 = vpop.f32.mrb[0].mxu0
  %v941 = vadd.f32 0.0, %v940
  %v942 = vpop.f32.mrb[0].mxu0
  %v943 = vpop.f32.mrb[0].mxu0
  %v944 = vadd.f32 0.0, %v943
  %v945 = vpop.f32.mrb[0].mxu0
  %946 = vmatprep.mubr.bf16.mxu0 0
  %947 = vmatmul.mubr.bf16.gmra.mrb[0].mxu0 %v243
  %v948 = vpop.f32.mrb[0].mxu0
  %v949 = vadd.f32 0.0, %v948
  %v950 = vpop.f32.mrb[0].mxu0
  %v951 = vpop.f32.mrb[0].mxu0
  %v952 = vadd.f32 0.0, %v951
  %v953 = vpop.f32.mrb[0].mxu0
  %954 = vmatprep.mubr.bf16.mxu0 0
  %955 = vmatmul.mubr.bf16.gmra.mrb[0].mxu0 %v852
  %v956 = vpop.f32.mrb[0].mxu0
  %v957 = vadd.f32 0.0, %v956
  %v958 = vpop.f32.mrb[0].mxu0
  %v959 = vpop.f32.mrb[0].mxu0
  %v960 = vadd.f32 0.0, %v959
  %v961 = vpop.f32.mrb[0].mxu0
  %962 = vmatprep.mubr.bf16.mxu0 0
  %963 = vmatmul.mubr.bf16.gmra.mrb[0].mxu0 %v245
  %v964 = vpop.f32.mrb[0].mxu0
  %v965 = vadd.f32 0.0, %v964
  %v966 = vpop.f32.mrb[0].mxu0
  %v967 = vpop.f32.mrb[0].mxu0
  %v968 = vadd.f32 0.0, %v967
  %v969 = vpop.f32.mrb[0].mxu0
  %970 = vmatprep.mubr.bf16.mxu0 0
  %971 = vmatmul.mubr.bf16.gmra.mrb[0].mxu0 %v246
  %v972 = vpop.f32.mrb[0].mxu0
  %v973 = vadd.f32 0.0, %v972
  %v974 = vpop.f32.mrb[0].mxu0
  %v975 = vpop.f32.mrb[0].mxu0
  %v976 = vadd.f32 0.0, %v975
  %v977 = vpop.f32.mrb[0].mxu0
  %978 = vmatprep.mubr.bf16.mxu0 0
  %979 = vmatmul.mubr.bf16.gmra.mrb[0].mxu0 %v853
  %v980 = vpop.f32.mrb[0].mxu0
  %v981 = vadd.f32 0.0, %v980
  %v982 = vpop.f32.mrb[0].mxu0
  %v983 = vpop.f32.mrb[0].mxu0
  %v984 = vadd.f32 0.0, %v983
  %v985 = vpop.f32.mrb[0].mxu0
  %986 = vmatprep.mubr.bf16.mxu0 0
  %987 = vmatmul.mubr.bf16.gmra.mrb[0].mxu0 %v248
  %v988 = vpop.f32.mrb[0].mxu0
  %v989 = vadd.f32 0.0, %v988
  %v990 = vpop.f32.mrb[0].mxu0
  %v991 = vpop.f32.mrb[0].mxu0
  %v992 = vadd.f32 0.0, %v991
  %v993 = vpop.f32.mrb[0].mxu0
  %994 = vmatprep.mubr.bf16.mxu0 0
  %995 = vmatmul.mubr.bf16.gmra.mrb[0].mxu0 %v249
  %v996 = vpop.f32.mrb[0].mxu0
  %v997 = vadd.f32 0.0, %v996
  %v998 = vpop.f32.mrb[0].mxu0
  %v999 = vpop.f32.mrb[0].mxu0
  %v1000 = vadd.f32 0.0, %v999
  %v1001 = vpop.f32.mrb[0].mxu0
  %1002 = vmatprep.mubr.bf16.mxu0 0
  %1003 = vmatmul.mubr.bf16.gmra.mrb[0].mxu0 %v854
  %v1004 = vpop.f32.mrb[0].mxu0
  %v1005 = vadd.f32 0.0, %v1004
  %v1006 = vpop.f32.mrb[0].mxu0
  %v1007 = vpop.f32.mrb[0].mxu0
  %v1008 = vadd.f32 0.0, %v1007
  %v1009 = vpop.f32.mrb[0].mxu0
  %1010 = vdwg.mxu0
  %v1011 = vadd.f32 %v806, %v941
  %v1012 = vadd.f32 %v807, %v944
  %v1013 = vadd.f32 %v808, %v949
  %v1014 = vadd.f32 %v809, %v952
  %v1015 = vadd.f32 %v810, %v957
  %v1016 = vadd.f32 %v811, %v960
  %v1017 = vadd.f32 %v812, %v965
  %v1018 = vadd.f32 %v813, %v968
  %v1019 = vadd.f32 %v814, %v973
  %v1020 = vadd.f32 %v815, %v976
  %v1021 = vadd.f32 %v816, %v981
  %v1022 = vadd.f32 %v817, %v984
  %v1023 = vadd.f32 %v818, %v989
  %v1024 = vadd.f32 %v819, %v992
  %v1025 = vadd.f32 %v820, %v997
  %v1026 = vadd.f32 %v821, %v1000
  %v1027 = vadd.f32 %v822, %v1005
  %v1028 = vadd.f32 %v823, %v1008
  %v1029 = vld [vmem:[%s1 + $0x100] sm:$0xf]
  %v1030 = vld [vmem:[%s1 + $0x104] sm:$0xf]
  %v1031 = vld [vmem:[%s1 + $0x108] sm:$0xf]
  %v1032 = vld [vmem:[%s1 + $0x10c] sm:$0xf]
  %v1033 = vld [vmem:[%s1 + $0x110] sm:$0xf]
  %v1034 = vld [vmem:[%s1 + $0x114] sm:$0xf]
  %v1035 = vld [vmem:[%s1 + $0x118] sm:$0xf]
  %v1036 = vld [vmem:[%s1 + $0x11c] sm:$0xf]
  %v1037 = vld [vmem:[%s1 + $0x120] sm:$0xf]
  %v1038 = vld [vmem:[%s1 + $0x124] sm:$0xf]
  %v1039 = vld [vmem:[%s1 + $0x128] sm:$0xf]
  %v1040 = vld [vmem:[%s1 + $0x12c] sm:$0xf]
  %v1041 = vld [vmem:[%s1 + $0x130] sm:$0xf]
  %v1042 = vld [vmem:[%s1 + $0x134] sm:$0xf]
  %v1043 = vld [vmem:[%s1 + $0x138] sm:$0xf]
  %v1044 = vld [vmem:[%s1 + $0x13c] sm:$0xf]
  %v1063 = vunpack.c.l.b16 %v61
  %v1064 = vunpack.c.l.b16 %v62
  %v1065 = vunpack.c.l.b16 %v65
  %v1066 = vunpack.c.l.b16 %v66
  %v1067 = vunpack.c.l.b16 %v69
  %v1068 = vunpack.c.l.b16 %v70
  %v1069 = vunpack.c.l.b16 %v93
  %v1070 = vunpack.c.l.b16 %v94
  %v1071 = vunpack.c.l.b16 %v97
  %v1072 = vunpack.c.l.b16 %v98
  %v1073 = vunpack.c.l.b16 %v101
  %v1074 = vunpack.c.l.b16 %v102
  %v1075 = vunpack.c.l.b16 %v125
  %v1076 = vunpack.c.l.b16 %v126
  %v1077 = vunpack.c.l.b16 %v129
  %v1078 = vunpack.c.l.b16 %v130
  %v1079 = vunpack.c.l.b16 %v133
  %v1080 = vunpack.c.l.b16 %v134
  %v1081 = vpack.c.b16 %v1064, %v1063
  %v1082 = vpack.c.b16 %v1066, %v1065
  %v1083 = vpack.c.b16 %v1068, %v1067
  %v1084 = vpack.c.b16 %v1070, %v1069
  %v1085 = vpack.c.b16 %v1072, %v1071
  %v1086 = vpack.c.b16 %v1074, %v1073
  %v1087 = vpack.c.b16 %v1076, %v1075
  %v1088 = vpack.c.b16 %v1078, %v1077
  %v1089 = vpack.c.b16 %v1080, %v1079
  %v1115 = vunpack.c.l.b16 %v1029
  %v1116 = vunpack.c.l.b16 %v1030
  %v1117 = vunpack.c.l.b16 %v1031
  %v1118 = vunpack.c.l.b16 %v1032
  %v1119 = vunpack.c.l.b16 %v1033
  %v1120 = vunpack.c.l.b16 %v1034
  %v1121 = vunpack.c.l.b16 %v1035
  %v1122 = vunpack.c.l.b16 %v1036
  %v1123 = vunpack.c.l.b16 %v1037
  %v1124 = vunpack.c.l.b16 %v1038
  %v1125 = vunpack.c.l.b16 %v1039
  %v1126 = vunpack.c.l.b16 %v1040
  %v1127 = vunpack.c.l.b16 %v1041
  %v1128 = vunpack.c.l.b16 %v1042
  %v1129 = vunpack.c.l.b16 %v1043
  %v1130 = vunpack.c.l.b16 %v1044
  %v1131 = vpack.c.b16 %v1116, %v1115
  %v1132 = vpack.c.b16 %v1118, %v1117
  %v1133 = vpack.c.b16 %v1120, %v1119
  %v1134 = vpack.c.b16 %v1122, %v1121
  %v1135 = vpack.c.b16 %v1124, %v1123
  %v1136 = vpack.c.b16 %v1126, %v1125
  %v1137 = vpack.c.b16 %v1128, %v1127
  %v1138 = vpack.c.b16 %v1130, %v1129
  %1147 = vmatprep.subr.bf16.mxu0 0
  %1148 = vmatpush1.bf16.msra.mxu0 %v1131
  %1149 = vmatprep.subr.bf16.mxu0 0
  %1150 = vmatpush1.bf16.msra.mxu0 %v1132
  %1151 = vmatprep.subr.bf16.mxu0 0
  %1152 = vmatpush1.bf16.msra.mxu0 %v1133
  %1153 = vmatprep.subr.bf16.mxu0 0
  %1154 = vmatpush1.bf16.msra.mxu0 %v1134
  %1155 = vmatprep.subr.bf16.mxu0 0
  %1156 = vmatpush1.bf16.msra.mxu0 %v1135
  %1157 = vmatprep.subr.bf16.mxu0 0
  %1158 = vmatpush1.bf16.msra.mxu0 %v1136
  %1159 = vmatprep.subr.bf16.mxu0 0
  %1160 = vmatpush1.bf16.msra.mxu0 %v1137
  %1161 = vmatprep.subr.bf16.mxu0 0
  %1162 = vmatpush1.bf16.msra.mxu0 %v1138
  %1163 = vmatprep.subr.bf16.mxu0 0
  %1164 = vmatpush1.bf16.msra.mxu0 0
  %1165 = vmatprep.subr.bf16.mxu0 0
  %1166 = vmatpush1.bf16.msra.mxu0 0
  %1167 = vmatprep.subr.bf16.mxu0 0
  %1168 = vmatpush1.bf16.msra.mxu0 0
  %1169 = vmatprep.subr.bf16.mxu0 0
  %1170 = vmatpush1.bf16.msra.mxu0 0
  %1171 = vmatprep.subr.bf16.mxu0 0
  %1172 = vmatpush1.bf16.msra.mxu0 0
  %1173 = vmatprep.subr.bf16.mxu0 0
  %1174 = vmatpush1.bf16.msra.mxu0 0
  %1175 = vmatprep.subr.bf16.mxu0 0
  %1176 = vmatpush1.bf16.msra.mxu0 0
  %1177 = vmatprep.subr.bf16.mxu0 0
  %1178 = vmatpush1.bf16.msra.mxu0 0
  %1179 = vmatprep.mubr.bf16.mxu0 0
  %1180 = vmatmul.mubr.bf16.gmra.mrb[0].mxu0 %v1081
  %v1181 = vpop.f32.mrb[0].mxu0
  %v1182 = vadd.f32 0.0, %v1181
  %v1183 = vpop.f32.mrb[0].mxu0
  %v1184 = vpop.f32.mrb[0].mxu0
  %v1185 = vadd.f32 0.0, %v1184
  %v1186 = vpop.f32.mrb[0].mxu0
  %1187 = vmatprep.mubr.bf16.mxu0 0
  %1188 = vmatmul.mubr.bf16.gmra.mrb[0].mxu0 %v1082
  %v1189 = vpop.f32.mrb[0].mxu0
  %v1190 = vadd.f32 0.0, %v1189
  %v1191 = vpop.f32.mrb[0].mxu0
  %v1192 = vpop.f32.mrb[0].mxu0
  %v1193 = vadd.f32 0.0, %v1192
  %v1194 = vpop.f32.mrb[0].mxu0
  %1195 = vmatprep.mubr.bf16.mxu0 0
  %1196 = vmatmul.mubr.bf16.gmra.mrb[0].mxu0 %v1083
  %v1197 = vpop.f32.mrb[0].mxu0
  %v1198 = vadd.f32 0.0, %v1197
  %v1199 = vpop.f32.mrb[0].mxu0
  %v1200 = vpop.f32.mrb[0].mxu0
  %v1201 = vadd.f32 0.0, %v1200
  %v1202 = vpop.f32.mrb[0].mxu0
  %1203 = vmatprep.mubr.bf16.mxu0 0
  %1204 = vmatmul.mubr.bf16.gmra.mrb[0].mxu0 %v1084
  %v1205 = vpop.f32.mrb[0].mxu0
  %v1206 = vadd.f32 0.0, %v1205
  %v1207 = vpop.f32.mrb[0].mxu0
  %v1208 = vpop.f32.mrb[0].mxu0
  %v1209 = vadd.f32 0.0, %v1208
  %v1210 = vpop.f32.mrb[0].mxu0
  %1211 = vmatprep.mubr.bf16.mxu0 0
  %1212 = vmatmul.mubr.bf16.gmra.mrb[0].mxu0 %v1085
  %v1213 = vpop.f32.mrb[0].mxu0
  %v1214 = vadd.f32 0.0, %v1213
  %v1215 = vpop.f32.mrb[0].mxu0
  %v1216 = vpop.f32.mrb[0].mxu0
  %v1217 = vadd.f32 0.0, %v1216
  %v1218 = vpop.f32.mrb[0].mxu0
  %1219 = vmatprep.mubr.bf16.mxu0 0
  %1220 = vmatmul.mubr.bf16.gmra.mrb[0].mxu0 %v1086
  %v1221 = vpop.f32.mrb[0].mxu0
  %v1222 = vadd.f32 0.0, %v1221
  %v1223 = vpop.f32.mrb[0].mxu0
  %v1224 = vpop.f32.mrb[0].mxu0
  %v1225 = vadd.f32 0.0, %v1224
  %v1226 = vpop.f32.mrb[0].mxu0
  %1227 = vmatprep.mubr.bf16.mxu0 0
  %1228 = vmatmul.mubr.bf16.gmra.mrb[0].mxu0 %v1087
  %v1229 = vpop.f32.mrb[0].mxu0
  %v1230 = vadd.f32 0.0, %v1229
  %v1231 = vpop.f32.mrb[0].mxu0
  %v1232 = vpop.f32.mrb[0].mxu0
  %v1233 = vadd.f32 0.0, %v1232
  %v1234 = vpop.f32.mrb[0].mxu0
  %1235 = vmatprep.mubr.bf16.mxu0 0
  %1236 = vmatmul.mubr.bf16.gmra.mrb[0].mxu0 %v1088
  %v1237 = vpop.f32.mrb[0].mxu0
  %v1238 = vadd.f32 0.0, %v1237
  %v1239 = vpop.f32.mrb[0].mxu0
  %v1240 = vpop.f32.mrb[0].mxu0
  %v1241 = vadd.f32 0.0, %v1240
  %v1242 = vpop.f32.mrb[0].mxu0
  %1243 = vmatprep.mubr.bf16.mxu0 0
  %1244 = vmatmul.mubr.bf16.gmra.mrb[0].mxu0 %v1089
  %v1245 = vpop.f32.mrb[0].mxu0
  %v1246 = vadd.f32 0.0, %v1245
  %v1247 = vpop.f32.mrb[0].mxu0
  %v1248 = vpop.f32.mrb[0].mxu0
  %v1249 = vadd.f32 0.0, %v1248
  %v1250 = vpop.f32.mrb[0].mxu0
  %1251 = vdwg.mxu0
  %v1252 = vadd.f32 %v1011, %v1182
  %v1253 = vadd.f32 %v1012, %v1185
  %v1254 = vadd.f32 %v1013, %v1190
  %v1255 = vadd.f32 %v1014, %v1193
  %v1256 = vadd.f32 %v1015, %v1198
  %v1257 = vadd.f32 %v1016, %v1201
  %v1258 = vadd.f32 %v1017, %v1206
  %v1259 = vadd.f32 %v1018, %v1209
  %v1260 = vadd.f32 %v1019, %v1214
  %v1261 = vadd.f32 %v1020, %v1217
  %v1262 = vadd.f32 %v1021, %v1222
  %v1263 = vadd.f32 %v1022, %v1225
  %v1264 = vadd.f32 %v1023, %v1230
  %v1265 = vadd.f32 %v1024, %v1233
  %v1266 = vadd.f32 %v1025, %v1238
  %v1267 = vadd.f32 %v1026, %v1241
  %v1268 = vadd.f32 %v1027, %v1246
  %v1269 = vadd.f32 %v1028, %v1249
  %v1270 = vld [vmem:[%s1 + $0x140] sm:$0xf]
  %v1271 = vld [vmem:[%s1 + $0x144] sm:$0xf]
  %v1272 = vld [vmem:[%s1 + $0x148] sm:$0xf]
  %v1273 = vld [vmem:[%s1 + $0x14c] sm:$0xf]
  %v1274 = vld [vmem:[%s1 + $0x150] sm:$0xf]
  %v1275 = vld [vmem:[%s1 + $0x154] sm:$0xf]
  %v1276 = vld [vmem:[%s1 + $0x158] sm:$0xf]
  %v1277 = vld [vmem:[%s1 + $0x15c] sm:$0xf]
  %v1278 = vld [vmem:[%s1 + $0x160] sm:$0xf]
  %v1279 = vld [vmem:[%s1 + $0x164] sm:$0xf]
  %v1280 = vld [vmem:[%s1 + $0x168] sm:$0xf]
  %v1281 = vld [vmem:[%s1 + $0x16c] sm:$0xf]
  %v1282 = vld [vmem:[%s1 + $0x170] sm:$0xf]
  %v1283 = vld [vmem:[%s1 + $0x174] sm:$0xf]
  %v1284 = vld [vmem:[%s1 + $0x178] sm:$0xf]
  %v1285 = vld [vmem:[%s1 + $0x17c] sm:$0xf]
  %v1304 = vunpack.c.l.b16 %v63
  %v1305 = vunpack.c.l.b16 %v64
  %v1306 = vunpack.c.l.b16 %v67
  %v1307 = vunpack.c.l.b16 %v68
  %v1308 = vunpack.c.l.b16 %v71
  %v1309 = vunpack.c.l.b16 %v72
  %v1310 = vunpack.c.l.b16 %v95
  %v1311 = vunpack.c.l.b16 %v96
  %v1312 = vunpack.c.l.b16 %v99
  %v1313 = vunpack.c.l.b16 %v100
  %v1314 = vunpack.c.l.b16 %v103
  %v1315 = vunpack.c.l.b16 %v104
  %v1316 = vunpack.c.l.b16 %v127
  %v1317 = vunpack.c.l.b16 %v128
  %v1318 = vunpack.c.l.b16 %v131
  %v1319 = vunpack.c.l.b16 %v132
  %v1320 = vunpack.c.l.b16 %v135
  %v1321 = vunpack.c.l.b16 %v136
  %v1322 = vpack.c.b16 %v1305, %v1304
  %v1323 = vpack.c.b16 %v1307, %v1306
  %v1324 = vpack.c.b16 %v1309, %v1308
  %v1325 = vpack.c.b16 %v1311, %v1310
  %v1326 = vpack.c.b16 %v1313, %v1312
  %v1327 = vpack.c.b16 %v1315, %v1314
  %v1328 = vpack.c.b16 %v1317, %v1316
  %v1329 = vpack.c.b16 %v1319, %v1318
  %v1330 = vpack.c.b16 %v1321, %v1320
  %v1356 = vunpack.c.l.b16 %v1270
  %v1357 = vunpack.c.l.b16 %v1271
  %v1358 = vunpack.c.l.b16 %v1272
  %v1359 = vunpack.c.l.b16 %v1273
  %v1360 = vunpack.c.l.b16 %v1274
  %v1361 = vunpack.c.l.b16 %v1275
  %v1362 = vunpack.c.l.b16 %v1276
  %v1363 = vunpack.c.l.b16 %v1277
  %v1364 = vunpack.c.l.b16 %v1278
  %v1365 = vunpack.c.l.b16 %v1279
  %v1366 = vunpack.c.l.b16 %v1280
  %v1367 = vunpack.c.l.b16 %v1281
  %v1368 = vunpack.c.l.b16 %v1282
  %v1369 = vunpack.c.l.b16 %v1283
  %v1370 = vunpack.c.l.b16 %v1284
  %v1371 = vunpack.c.l.b16 %v1285
  %v1372 = vpack.c.b16 %v1357, %v1356
  %v1373 = vpack.c.b16 %v1359, %v1358
  %v1374 = vpack.c.b16 %v1361, %v1360
  %v1375 = vpack.c.b16 %v1363, %v1362
  %v1376 = vpack.c.b16 %v1365, %v1364
  %v1377 = vpack.c.b16 %v1367, %v1366
  %v1378 = vpack.c.b16 %v1369, %v1368
  %v1379 = vpack.c.b16 %v1371, %v1370
  %1388 = vmatprep.subr.bf16.mxu0 0
  %1389 = vmatpush1.bf16.msra.mxu0 %v1372
  %1390 = vmatprep.subr.bf16.mxu0 0
  %1391 = vmatpush1.bf16.msra.mxu0 %v1373
  %1392 = vmatprep.subr.bf16.mxu0 0
  %1393 = vmatpush1.bf16.msra.mxu0 %v1374
  %1394 = vmatprep.subr.bf16.mxu0 0
  %1395 = vmatpush1.bf16.msra.mxu0 %v1375
  %1396 = vmatprep.subr.bf16.mxu0 0
  %1397 = vmatpush1.bf16.msra.mxu0 %v1376
  %1398 = vmatprep.subr.bf16.mxu0 0
  %1399 = vmatpush1.bf16.msra.mxu0 %v1377
  %1400 = vmatprep.subr.bf16.mxu0 0
  %1401 = vmatpush1.bf16.msra.mxu0 %v1378
  %1402 = vmatprep.subr.bf16.mxu0 0
  %1403 = vmatpush1.bf16.msra.mxu0 %v1379
  %1404 = vmatprep.subr.bf16.mxu0 0
  %1405 = vmatpush1.bf16.msra.mxu0 0
  %1406 = vmatprep.subr.bf16.mxu0 0
  %1407 = vmatpush1.bf16.msra.mxu0 0
  %1408 = vmatprep.subr.bf16.mxu0 0
  %1409 = vmatpush1.bf16.msra.mxu0 0
  %1410 = vmatprep.subr.bf16.mxu0 0
  %1411 = vmatpush1.bf16.msra.mxu0 0
  %1412 = vmatprep.subr.bf16.mxu0 0
  %1413 = vmatpush1.bf16.msra.mxu0 0
  %1414 = vmatprep.subr.bf16.mxu0 0
  %1415 = vmatpush1.bf16.msra.mxu0 0
  %1416 = vmatprep.subr.bf16.mxu0 0
  %1417 = vmatpush1.bf16.msra.mxu0 0
  %1418 = vmatprep.subr.bf16.mxu0 0
  %1419 = vmatpush1.bf16.msra.mxu0 0
  %1420 = vmatprep.mubr.bf16.mxu0 0
  %1421 = vmatmul.mubr.bf16.gmra.mrb[0].mxu0 %v1322
  %v1422 = vpop.f32.mrb[0].mxu0
  %v1423 = vadd.f32 0.0, %v1422
  %v1424 = vpop.f32.mrb[0].mxu0
  %v1425 = vpop.f32.mrb[0].mxu0
  %v1426 = vadd.f32 0.0, %v1425
  %v1427 = vpop.f32.mrb[0].mxu0
  %1428 = vmatprep.mubr.bf16.mxu0 0
  %1429 = vmatmul.mubr.bf16.gmra.mrb[0].mxu0 %v1323
  %v1430 = vpop.f32.mrb[0].mxu0
  %v1431 = vadd.f32 0.0, %v1430
  %v1432 = vpop.f32.mrb[0].mxu0
  %v1433 = vpop.f32.mrb[0].mxu0
  %v1434 = vadd.f32 0.0, %v1433
  %v1435 = vpop.f32.mrb[0].mxu0
  %1436 = vmatprep.mubr.bf16.mxu0 0
  %1437 = vmatmul.mubr.bf16.gmra.mrb[0].mxu0 %v1324
  %v1438 = vpop.f32.mrb[0].mxu0
  %v1439 = vadd.f32 0.0, %v1438
  %v1440 = vpop.f32.mrb[0].mxu0
  %v1441 = vpop.f32.mrb[0].mxu0
  %v1442 = vadd.f32 0.0, %v1441
  %v1443 = vpop.f32.mrb[0].mxu0
  %1444 = vmatprep.mubr.bf16.mxu0 0
  %1445 = vmatmul.mubr.bf16.gmra.mrb[0].mxu0 %v1325
  %v1446 = vpop.f32.mrb[0].mxu0
  %v1447 = vadd.f32 0.0, %v1446
  %v1448 = vpop.f32.mrb[0].mxu0
  %v1449 = vpop.f32.mrb[0].mxu0
  %v1450 = vadd.f32 0.0, %v1449
  %v1451 = vpop.f32.mrb[0].mxu0
  %1452 = vmatprep.mubr.bf16.mxu0 0
  %1453 = vmatmul.mubr.bf16.gmra.mrb[0].mxu0 %v1326
  %v1454 = vpop.f32.mrb[0].mxu0
  %v1455 = vadd.f32 0.0, %v1454
  %v1456 = vpop.f32.mrb[0].mxu0
  %v1457 = vpop.f32.mrb[0].mxu0
  %v1458 = vadd.f32 0.0, %v1457
  %v1459 = vpop.f32.mrb[0].mxu0
  %1460 = vmatprep.mubr.bf16.mxu0 0
  %1461 = vmatmul.mubr.bf16.gmra.mrb[0].mxu0 %v1327
  %v1462 = vpop.f32.mrb[0].mxu0
  %v1463 = vadd.f32 0.0, %v1462
  %v1464 = vpop.f32.mrb[0].mxu0
  %v1465 = vpop.f32.mrb[0].mxu0
  %v1466 = vadd.f32 0.0, %v1465
  %v1467 = vpop.f32.mrb[0].mxu0
  %1468 = vmatprep.mubr.bf16.mxu0 0
  %1469 = vmatmul.mubr.bf16.gmra.mrb[0].mxu0 %v1328
  %v1470 = vpop.f32.mrb[0].mxu0
  %v1471 = vadd.f32 0.0, %v1470
  %v1472 = vpop.f32.mrb[0].mxu0
  %v1473 = vpop.f32.mrb[0].mxu0
  %v1474 = vadd.f32 0.0, %v1473
  %v1475 = vpop.f32.mrb[0].mxu0
  %1476 = vmatprep.mubr.bf16.mxu0 0
  %1477 = vmatmul.mubr.bf16.gmra.mrb[0].mxu0 %v1329
  %v1478 = vpop.f32.mrb[0].mxu0
  %v1479 = vadd.f32 0.0, %v1478
  %v1480 = vpop.f32.mrb[0].mxu0
  %v1481 = vpop.f32.mrb[0].mxu0
  %v1482 = vadd.f32 0.0, %v1481
  %v1483 = vpop.f32.mrb[0].mxu0
  %1484 = vmatprep.mubr.bf16.mxu0 0
  %1485 = vmatmul.mubr.bf16.gmra.mrb[0].mxu0 %v1330
  %v1486 = vpop.f32.mrb[0].mxu0
  %v1487 = vadd.f32 0.0, %v1486
  %v1488 = vpop.f32.mrb[0].mxu0
  %v1489 = vpop.f32.mrb[0].mxu0
  %v1490 = vadd.f32 0.0, %v1489
  %v1491 = vpop.f32.mrb[0].mxu0
  %1492 = vdwg.mxu0
  %v1493 = vadd.f32 %v1252, %v1423
  %v1494 = vadd.f32 %v1253, %v1426
  %v1495 = vadd.f32 %v1254, %v1431
  %v1496 = vadd.f32 %v1255, %v1434
  %v1497 = vadd.f32 %v1256, %v1439
  %v1498 = vadd.f32 %v1257, %v1442
  %v1499 = vadd.f32 %v1258, %v1447
  %v1500 = vadd.f32 %v1259, %v1450
  %v1501 = vadd.f32 %v1260, %v1455
  %v1502 = vadd.f32 %v1261, %v1458
  %v1503 = vadd.f32 %v1262, %v1463
  %v1504 = vadd.f32 %v1263, %v1466
  %v1505 = vadd.f32 %v1264, %v1471
  %v1506 = vadd.f32 %v1265, %v1474
  %v1507 = vadd.f32 %v1266, %v1479
  %v1508 = vadd.f32 %v1267, %v1482
  %v1509 = vadd.f32 %v1268, %v1487
  %v1510 = vadd.f32 %v1269, %v1490
  %v1511 = vld [vmem:[%s1 + $0x180] sm:$0xf]
  %v1512 = vld [vmem:[%s1 + $0x184] sm:$0xf]
  %v1513 = vld [vmem:[%s1 + $0x188] sm:$0xf]
  %v1514 = vld [vmem:[%s1 + $0x18c] sm:$0xf]
  %v1515 = vld [vmem:[%s1 + $0x190] sm:$0xf]
  %v1516 = vld [vmem:[%s1 + $0x194] sm:$0xf]
  %v1517 = vld [vmem:[%s1 + $0x198] sm:$0xf]
  %v1518 = vld [vmem:[%s1 + $0x19c] sm:$0xf]
  %v1519 = vld [vmem:[%s1 + $0x1a0] sm:$0xf]
  %v1520 = vld [vmem:[%s1 + $0x1a4] sm:$0xf]
  %v1521 = vld [vmem:[%s1 + $0x1a8] sm:$0xf]
  %v1522 = vld [vmem:[%s1 + $0x1ac] sm:$0xf]
  %v1523 = vld [vmem:[%s1 + $0x1b0] sm:$0xf]
  %v1524 = vld [vmem:[%s1 + $0x1b4] sm:$0xf]
  %v1525 = vld [vmem:[%s1 + $0x1b8] sm:$0xf]
  %v1526 = vld [vmem:[%s1 + $0x1bc] sm:$0xf]
  %v1533 = vunpack.c.l.b16 %v73
  %v1534 = vunpack.c.l.b16 %v74
  %v1535 = vunpack.c.l.b16 %v105
  %v1536 = vunpack.c.l.b16 %v106
  %v1537 = vunpack.c.l.b16 %v137
  %v1538 = vunpack.c.l.b16 %v138
  %v1539 = vpack.c.b16 %v1534, %v1533
  %v1540 = vpack.c.b16 %v1536, %v1535
  %v1541 = vpack.c.b16 %v1538, %v1537
  %v1561 = vunpack.c.l.b16 %v1511
  %v1562 = vunpack.c.l.b16 %v1512
  %v1563 = vunpack.c.l.b16 %v1513
  %v1564 = vunpack.c.l.b16 %v1514
  %v1565 = vunpack.c.l.b16 %v1515
  %v1566 = vunpack.c.l.b16 %v1516
  %v1567 = vunpack.c.l.b16 %v1517
  %v1568 = vunpack.c.l.b16 %v1518
  %v1569 = vunpack.c.l.b16 %v1519
  %v1570 = vunpack.c.l.b16 %v1520
  %v1571 = vunpack.c.l.b16 %v1521
  %v1572 = vunpack.c.l.b16 %v1522
  %v1573 = vunpack.c.l.b16 %v1523
  %v1574 = vunpack.c.l.b16 %v1524
  %v1575 = vunpack.c.l.b16 %v1525
  %v1576 = vunpack.c.l.b16 %v1526
  %v1577 = vpack.c.b16 %v1562, %v1561
  %v1578 = vpack.c.b16 %v1564, %v1563
  %v1579 = vpack.c.b16 %v1566, %v1565
  %v1580 = vpack.c.b16 %v1568, %v1567
  %v1581 = vpack.c.b16 %v1570, %v1569
  %v1582 = vpack.c.b16 %v1572, %v1571
  %v1583 = vpack.c.b16 %v1574, %v1573
  %v1584 = vpack.c.b16 %v1576, %v1575
  %1593 = vmatprep.subr.bf16.mxu0 0
  %1594 = vmatpush1.bf16.msra.mxu0 %v1577
  %1595 = vmatprep.subr.bf16.mxu0 0
  %1596 = vmatpush1.bf16.msra.mxu0 %v1578
  %1597 = vmatprep.subr.bf16.mxu0 0
  %1598 = vmatpush1.bf16.msra.mxu0 %v1579
  %1599 = vmatprep.subr.bf16.mxu0 0
  %1600 = vmatpush1.bf16.msra.mxu0 %v1580
  %1601 = vmatprep.subr.bf16.mxu0 0
  %1602 = vmatpush1.bf16.msra.mxu0 %v1581
  %1603 = vmatprep.subr.bf16.mxu0 0
  %1604 = vmatpush1.bf16.msra.mxu0 %v1582
  %1605 = vmatprep.subr.bf16.mxu0 0
  %1606 = vmatpush1.bf16.msra.mxu0 %v1583
  %1607 = vmatprep.subr.bf16.mxu0 0
  %1608 = vmatpush1.bf16.msra.mxu0 %v1584
  %1609 = vmatprep.subr.bf16.mxu0 0
  %1610 = vmatpush1.bf16.msra.mxu0 0
  %1611 = vmatprep.subr.bf16.mxu0 0
  %1612 = vmatpush1.bf16.msra.mxu0 0
  %1613 = vmatprep.subr.bf16.mxu0 0
  %1614 = vmatpush1.bf16.msra.mxu0 0
  %1615 = vmatprep.subr.bf16.mxu0 0
  %1616 = vmatpush1.bf16.msra.mxu0 0
  %1617 = vmatprep.subr.bf16.mxu0 0
  %1618 = vmatpush1.bf16.msra.mxu0 0
  %1619 = vmatprep.subr.bf16.mxu0 0
  %1620 = vmatpush1.bf16.msra.mxu0 0
  %1621 = vmatprep.subr.bf16.mxu0 0
  %1622 = vmatpush1.bf16.msra.mxu0 0
  %1623 = vmatprep.subr.bf16.mxu0 0
  %1624 = vmatpush1.bf16.msra.mxu0 0
  %1625 = vmatprep.mubr.bf16.mxu0 0
  %1626 = vmatmul.mubr.bf16.gmra.mrb[0].mxu0 %v1082
  %v1627 = vpop.f32.mrb[0].mxu0
  %v1628 = vadd.f32 0.0, %v1627
  %v1629 = vpop.f32.mrb[0].mxu0
  %v1630 = vpop.f32.mrb[0].mxu0
  %v1631 = vadd.f32 0.0, %v1630
  %v1632 = vpop.f32.mrb[0].mxu0
  %1633 = vmatprep.mubr.bf16.mxu0 0
  %1634 = vmatmul.mubr.bf16.gmra.mrb[0].mxu0 %v1083
  %v1635 = vpop.f32.mrb[0].mxu0
  %v1636 = vadd.f32 0.0, %v1635
  %v1637 = vpop.f32.mrb[0].mxu0
  %v1638 = vpop.f32.mrb[0].mxu0
  %v1639 = vadd.f32 0.0, %v1638
  %v1640 = vpop.f32.mrb[0].mxu0
  %1641 = vmatprep.mubr.bf16.mxu0 0
  %1642 = vmatmul.mubr.bf16.gmra.mrb[0].mxu0 %v1539
  %v1643 = vpop.f32.mrb[0].mxu0
  %v1644 = vadd.f32 0.0, %v1643
  %v1645 = vpop.f32.mrb[0].mxu0
  %v1646 = vpop.f32.mrb[0].mxu0
  %v1647 = vadd.f32 0.0, %v1646
  %v1648 = vpop.f32.mrb[0].mxu0
  %1649 = vmatprep.mubr.bf16.mxu0 0
  %1650 = vmatmul.mubr.bf16.gmra.mrb[0].mxu0 %v1085
  %v1651 = vpop.f32.mrb[0].mxu0
  %v1652 = vadd.f32 0.0, %v1651
  %v1653 = vpop.f32.mrb[0].mxu0
  %v1654 = vpop.f32.mrb[0].mxu0
  %v1655 = vadd.f32 0.0, %v1654
  %v1656 = vpop.f32.mrb[0].mxu0
  %1657 = vmatprep.mubr.bf16.mxu0 0
  %1658 = vmatmul.mubr.bf16.gmra.mrb[0].mxu0 %v1086
  %v1659 = vpop.f32.mrb[0].mxu0
  %v1660 = vadd.f32 0.0, %v1659
  %v1661 = vpop.f32.mrb[0].mxu0
  %v1662 = vpop.f32.mrb[0].mxu0
  %v1663 = vadd.f32 0.0, %v1662
  %v1664 = vpop.f32.mrb[0].mxu0
  %1665 = vmatprep.mubr.bf16.mxu0 0
  %1666 = vmatmul.mubr.bf16.gmra.mrb[0].mxu0 %v1540
  %v1667 = vpop.f32.mrb[0].mxu0
  %v1668 = vadd.f32 0.0, %v1667
  %v1669 = vpop.f32.mrb[0].mxu0
  %v1670 = vpop.f32.mrb[0].mxu0
  %v1671 = vadd.f32 0.0, %v1670
  %v1672 = vpop.f32.mrb[0].mxu0
  %1673 = vmatprep.mubr.bf16.mxu0 0
  %1674 = vmatmul.mubr.bf16.gmra.mrb[0].mxu0 %v1088
  %v1675 = vpop.f32.mrb[0].mxu0
  %v1676 = vadd.f32 0.0, %v1675
  %v1677 = vpop.f32.mrb[0].mxu0
  %v1678 = vpop.f32.mrb[0].mxu0
  %v1679 = vadd.f32 0.0, %v1678
  %v1680 = vpop.f32.mrb[0].mxu0
  %1681 = vmatprep.mubr.bf16.mxu0 0
  %1682 = vmatmul.mubr.bf16.gmra.mrb[0].mxu0 %v1089
  %v1683 = vpop.f32.mrb[0].mxu0
  %v1684 = vadd.f32 0.0, %v1683
  %v1685 = vpop.f32.mrb[0].mxu0
  %v1686 = vpop.f32.mrb[0].mxu0
  %v1687 = vadd.f32 0.0, %v1686
  %v1688 = vpop.f32.mrb[0].mxu0
  %1689 = vmatprep.mubr.bf16.mxu0 0
  %1690 = vmatmul.mubr.bf16.gmra.mrb[0].mxu0 %v1541
  %v1691 = vpop.f32.mrb[0].mxu0
  %v1692 = vadd.f32 0.0, %v1691
  %v1693 = vpop.f32.mrb[0].mxu0
  %v1694 = vpop.f32.mrb[0].mxu0
  %v1695 = vadd.f32 0.0, %v1694
  %v1696 = vpop.f32.mrb[0].mxu0
  %1697 = vdwg.mxu0
  %v1698 = vadd.f32 %v1493, %v1628
  %v1699 = vadd.f32 %v1494, %v1631
  %v1700 = vadd.f32 %v1495, %v1636
  %v1701 = vadd.f32 %v1496, %v1639
  %v1702 = vadd.f32 %v1497, %v1644
  %v1703 = vadd.f32 %v1498, %v1647
  %v1704 = vadd.f32 %v1499, %v1652
  %v1705 = vadd.f32 %v1500, %v1655
  %v1706 = vadd.f32 %v1501, %v1660
  %v1707 = vadd.f32 %v1502, %v1663
  %v1708 = vadd.f32 %v1503, %v1668
  %v1709 = vadd.f32 %v1504, %v1671
  %v1710 = vadd.f32 %v1505, %v1676
  %v1711 = vadd.f32 %v1506, %v1679
  %v1712 = vadd.f32 %v1507, %v1684
  %v1713 = vadd.f32 %v1508, %v1687
  %v1714 = vadd.f32 %v1509, %v1692
  %v1715 = vadd.f32 %v1510, %v1695
  %v1716 = vld [vmem:[%s1 + $0x1c0] sm:$0xf]
  %v1717 = vld [vmem:[%s1 + $0x1c4] sm:$0xf]
  %v1718 = vld [vmem:[%s1 + $0x1c8] sm:$0xf]
  %v1719 = vld [vmem:[%s1 + $0x1cc] sm:$0xf]
  %v1720 = vld [vmem:[%s1 + $0x1d0] sm:$0xf]
  %v1721 = vld [vmem:[%s1 + $0x1d4] sm:$0xf]
  %v1722 = vld [vmem:[%s1 + $0x1d8] sm:$0xf]
  %v1723 = vld [vmem:[%s1 + $0x1dc] sm:$0xf]
  %v1724 = vld [vmem:[%s1 + $0x1e0] sm:$0xf]
  %v1725 = vld [vmem:[%s1 + $0x1e4] sm:$0xf]
  %v1726 = vld [vmem:[%s1 + $0x1e8] sm:$0xf]
  %v1727 = vld [vmem:[%s1 + $0x1ec] sm:$0xf]
  %v1728 = vld [vmem:[%s1 + $0x1f0] sm:$0xf]
  %v1729 = vld [vmem:[%s1 + $0x1f4] sm:$0xf]
  %v1730 = vld [vmem:[%s1 + $0x1f8] sm:$0xf]
  %v1731 = vld [vmem:[%s1 + $0x1fc] sm:$0xf]
  %v1738 = vunpack.c.l.b16 %v75
  %v1739 = vunpack.c.l.b16 %v76
  %v1740 = vunpack.c.l.b16 %v107
  %v1741 = vunpack.c.l.b16 %v108
  %v1742 = vunpack.c.l.b16 %v139
  %v1743 = vunpack.c.l.b16 %v140
  %v1744 = vpack.c.b16 %v1739, %v1738
  %v1745 = vpack.c.b16 %v1741, %v1740
  %v1746 = vpack.c.b16 %v1743, %v1742
  %v1766 = vunpack.c.l.b16 %v1716
  %v1767 = vunpack.c.l.b16 %v1717
  %v1768 = vunpack.c.l.b16 %v1718
  %v1769 = vunpack.c.l.b16 %v1719
  %v1770 = vunpack.c.l.b16 %v1720
  %v1771 = vunpack.c.l.b16 %v1721
  %v1772 = vunpack.c.l.b16 %v1722
  %v1773 = vunpack.c.l.b16 %v1723
  %v1774 = vunpack.c.l.b16 %v1724
  %v1775 = vunpack.c.l.b16 %v1725
  %v1776 = vunpack.c.l.b16 %v1726
  %v1777 = vunpack.c.l.b16 %v1727
  %v1778 = vunpack.c.l.b16 %v1728
  %v1779 = vunpack.c.l.b16 %v1729
  %v1780 = vunpack.c.l.b16 %v1730
  %v1781 = vunpack.c.l.b16 %v1731
  %v1782 = vpack.c.b16 %v1767, %v1766
  %v1783 = vpack.c.b16 %v1769, %v1768
  %v1784 = vpack.c.b16 %v1771, %v1770
  %v1785 = vpack.c.b16 %v1773, %v1772
  %v1786 = vpack.c.b16 %v1775, %v1774
  %v1787 = vpack.c.b16 %v1777, %v1776
  %v1788 = vpack.c.b16 %v1779, %v1778
  %v1789 = vpack.c.b16 %v1781, %v1780
  %1798 = vmatprep.subr.bf16.mxu0 0
  %1799 = vmatpush1.bf16.msra.mxu0 %v1782
  %1800 = vmatprep.subr.bf16.mxu0 0
  %1801 = vmatpush1.bf16.msra.mxu0 %v1783
  %1802 = vmatprep.subr.bf16.mxu0 0
  %1803 = vmatpush1.bf16.msra.mxu0 %v1784
  %1804 = vmatprep.subr.bf16.mxu0 0
  %1805 = vmatpush1.bf16.msra.mxu0 %v1785
  %1806 = vmatprep.subr.bf16.mxu0 0
  %1807 = vmatpush1.bf16.msra.mxu0 %v1786
  %1808 = vmatprep.subr.bf16.mxu0 0
  %1809 = vmatpush1.bf16.msra.mxu0 %v1787
  %1810 = vmatprep.subr.bf16.mxu0 0
  %1811 = vmatpush1.bf16.msra.mxu0 %v1788
  %1812 = vmatprep.subr.bf16.mxu0 0
  %1813 = vmatpush1.bf16.msra.mxu0 %v1789
  %1814 = vmatprep.subr.bf16.mxu0 0
  %1815 = vmatpush1.bf16.msra.mxu0 0
  %1816 = vmatprep.subr.bf16.mxu0 0
  %1817 = vmatpush1.bf16.msra.mxu0 0
  %1818 = vmatprep.subr.bf16.mxu0 0
  %1819 = vmatpush1.bf16.msra.mxu0 0
  %1820 = vmatprep.subr.bf16.mxu0 0
  %1821 = vmatpush1.bf16.msra.mxu0 0
  %1822 = vmatprep.subr.bf16.mxu0 0
  %1823 = vmatpush1.bf16.msra.mxu0 0
  %1824 = vmatprep.subr.bf16.mxu0 0
  %1825 = vmatpush1.bf16.msra.mxu0 0
  %1826 = vmatprep.subr.bf16.mxu0 0
  %1827 = vmatpush1.bf16.msra.mxu0 0
  %1828 = vmatprep.subr.bf16.mxu0 0
  %1829 = vmatpush1.bf16.msra.mxu0 0
  %1830 = vmatprep.mubr.bf16.mxu0 0
  %1831 = vmatmul.mubr.bf16.gmra.mrb[0].mxu0 %v1323
  %v1832 = vpop.f32.mrb[0].mxu0
  %v1833 = vadd.f32 0.0, %v1832
  %v1834 = vpop.f32.mrb[0].mxu0
  %v1835 = vpop.f32.mrb[0].mxu0
  %v1836 = vadd.f32 0.0, %v1835
  %v1837 = vpop.f32.mrb[0].mxu0
  %1838 = vmatprep.mubr.bf16.mxu0 0
  %1839 = vmatmul.mubr.bf16.gmra.mrb[0].mxu0 %v1324
  %v1840 = vpop.f32.mrb[0].mxu0
  %v1841 = vadd.f32 0.0, %v1840
  %v1842 = vpop.f32.mrb[0].mxu0
  %v1843 = vpop.f32.mrb[0].mxu0
  %v1844 = vadd.f32 0.0, %v1843
  %v1845 = vpop.f32.mrb[0].mxu0
  %1846 = vmatprep.mubr.bf16.mxu0 0
  %1847 = vmatmul.mubr.bf16.gmra.mrb[0].mxu0 %v1744
  %v1848 = vpop.f32.mrb[0].mxu0
  %v1849 = vadd.f32 0.0, %v1848
  %v1850 = vpop.f32.mrb[0].mxu0
  %v1851 = vpop.f32.mrb[0].mxu0
  %v1852 = vadd.f32 0.0, %v1851
  %v1853 = vpop.f32.mrb[0].mxu0
  %1854 = vmatprep.mubr.bf16.mxu0 0
  %1855 = vmatmul.mubr.bf16.gmra.mrb[0].mxu0 %v1326
  %v1856 = vpop.f32.mrb[0].mxu0
  %v1857 = vadd.f32 0.0, %v1856
  %v1858 = vpop.f32.mrb[0].mxu0
  %v1859 = vpop.f32.mrb[0].mxu0
  %v1860 = vadd.f32 0.0, %v1859
  %v1861 = vpop.f32.mrb[0].mxu0
  %1862 = vmatprep.mubr.bf16.mxu0 0
  %1863 = vmatmul.mubr.bf16.gmra.mrb[0].mxu0 %v1327
  %v1864 = vpop.f32.mrb[0].mxu0
  %v1865 = vadd.f32 0.0, %v1864
  %v1866 = vpop.f32.mrb[0].mxu0
  %v1867 = vpop.f32.mrb[0].mxu0
  %v1868 = vadd.f32 0.0, %v1867
  %v1869 = vpop.f32.mrb[0].mxu0
  %1870 = vmatprep.mubr.bf16.mxu0 0
  %1871 = vmatmul.mubr.bf16.gmra.mrb[0].mxu0 %v1745
  %v1872 = vpop.f32.mrb[0].mxu0
  %v1873 = vadd.f32 0.0, %v1872
  %v1874 = vpop.f32.mrb[0].mxu0
  %v1875 = vpop.f32.mrb[0].mxu0
  %v1876 = vadd.f32 0.0, %v1875
  %v1877 = vpop.f32.mrb[0].mxu0
  %1878 = vmatprep.mubr.bf16.mxu0 0
  %1879 = vmatmul.mubr.bf16.gmra.mrb[0].mxu0 %v1329
  %v1880 = vpop.f32.mrb[0].mxu0
  %v1881 = vadd.f32 0.0, %v1880
  %v1882 = vpop.f32.mrb[0].mxu0
  %v1883 = vpop.f32.mrb[0].mxu0
  %v1884 = vadd.f32 0.0, %v1883
  %v1885 = vpop.f32.mrb[0].mxu0
  %1886 = vmatprep.mubr.bf16.mxu0 0
  %1887 = vmatmul.mubr.bf16.gmra.mrb[0].mxu0 %v1330
  %v1888 = vpop.f32.mrb[0].mxu0
  %v1889 = vadd.f32 0.0, %v1888
  %v1890 = vpop.f32.mrb[0].mxu0
  %v1891 = vpop.f32.mrb[0].mxu0
  %v1892 = vadd.f32 0.0, %v1891
  %v1893 = vpop.f32.mrb[0].mxu0
  %1894 = vmatprep.mubr.bf16.mxu0 0
  %1895 = vmatmul.mubr.bf16.gmra.mrb[0].mxu0 %v1746
  %v1896 = vpop.f32.mrb[0].mxu0
  %v1897 = vadd.f32 0.0, %v1896
  %v1898 = vpop.f32.mrb[0].mxu0
  %v1899 = vpop.f32.mrb[0].mxu0
  %v1900 = vadd.f32 0.0, %v1899
  %v1901 = vpop.f32.mrb[0].mxu0
  %1902 = vdwg.mxu0
  %v1903 = vadd.f32 %v1698, %v1833
  %v1904 = vadd.f32 %v1699, %v1836
  %v1905 = vadd.f32 %v1700, %v1841
  %v1906 = vadd.f32 %v1701, %v1844
  %v1907 = vadd.f32 %v1702, %v1849
  %v1908 = vadd.f32 %v1703, %v1852
  %v1909 = vadd.f32 %v1704, %v1857
  %v1910 = vadd.f32 %v1705, %v1860
  %v1911 = vadd.f32 %v1706, %v1865
  %v1912 = vadd.f32 %v1707, %v1868
  %v1913 = vadd.f32 %v1708, %v1873
  %v1914 = vadd.f32 %v1709, %v1876
  %v1915 = vadd.f32 %v1710, %v1881
  %v1916 = vadd.f32 %v1711, %v1884
  %v1917 = vadd.f32 %v1712, %v1889
  %v1918 = vadd.f32 %v1713, %v1892
  %v1919 = vadd.f32 %v1714, %v1897
  %v1920 = vadd.f32 %v1715, %v1900
  %v1921 = vld [vmem:[%s1 + $0x200] sm:$0xf]
  %v1922 = vld [vmem:[%s1 + $0x204] sm:$0xf]
  %v1923 = vld [vmem:[%s1 + $0x208] sm:$0xf]
  %v1924 = vld [vmem:[%s1 + $0x20c] sm:$0xf]
  %v1925 = vld [vmem:[%s1 + $0x210] sm:$0xf]
  %v1926 = vld [vmem:[%s1 + $0x214] sm:$0xf]
  %v1927 = vld [vmem:[%s1 + $0x218] sm:$0xf]
  %v1928 = vld [vmem:[%s1 + $0x21c] sm:$0xf]
  %v1929 = vld [vmem:[%s1 + $0x220] sm:$0xf]
  %v1930 = vld [vmem:[%s1 + $0x224] sm:$0xf]
  %v1931 = vld [vmem:[%s1 + $0x228] sm:$0xf]
  %v1932 = vld [vmem:[%s1 + $0x22c] sm:$0xf]
  %v1933 = vld [vmem:[%s1 + $0x230] sm:$0xf]
  %v1934 = vld [vmem:[%s1 + $0x234] sm:$0xf]
  %v1935 = vld [vmem:[%s1 + $0x238] sm:$0xf]
  %v1936 = vld [vmem:[%s1 + $0x23c] sm:$0xf]
  %v1943 = vunpack.c.l.b16 %v141
  %v1944 = vunpack.c.l.b16 %v142
  %v1945 = vunpack.c.l.b16 %v145
  %v1946 = vunpack.c.l.b16 %v146
  %v1947 = vunpack.c.l.b16 %v149
  %v1948 = vunpack.c.l.b16 %v150
  %v1949 = vpack.c.b16 %v1944, %v1943
  %v1950 = vpack.c.b16 %v1946, %v1945
  %v1951 = vpack.c.b16 %v1948, %v1947
  %v1971 = vunpack.c.l.b16 %v1921
  %v1972 = vunpack.c.l.b16 %v1922
  %v1973 = vunpack.c.l.b16 %v1923
  %v1974 = vunpack.c.l.b16 %v1924
  %v1975 = vunpack.c.l.b16 %v1925
  %v1976 = vunpack.c.l.b16 %v1926
  %v1977 = vunpack.c.l.b16 %v1927
  %v1978 = vunpack.c.l.b16 %v1928
  %v1979 = vunpack.c.l.b16 %v1929
  %v1980 = vunpack.c.l.b16 %v1930
  %v1981 = vunpack.c.l.b16 %v1931
  %v1982 = vunpack.c.l.b16 %v1932
  %v1983 = vunpack.c.l.b16 %v1933
  %v1984 = vunpack.c.l.b16 %v1934
  %v1985 = vunpack.c.l.b16 %v1935
  %v1986 = vunpack.c.l.b16 %v1936
  %v1987 = vpack.c.b16 %v1972, %v1971
  %v1988 = vpack.c.b16 %v1974, %v1973
  %v1989 = vpack.c.b16 %v1976, %v1975
  %v1990 = vpack.c.b16 %v1978, %v1977
  %v1991 = vpack.c.b16 %v1980, %v1979
  %v1992 = vpack.c.b16 %v1982, %v1981
  %v1993 = vpack.c.b16 %v1984, %v1983
  %v1994 = vpack.c.b16 %v1986, %v1985
  %2003 = vmatprep.subr.bf16.mxu0 0
  %2004 = vmatpush1.bf16.msra.mxu0 %v1987
  %2005 = vmatprep.subr.bf16.mxu0 0
  %2006 = vmatpush1.bf16.msra.mxu0 %v1988
  %2007 = vmatprep.subr.bf16.mxu0 0
  %2008 = vmatpush1.bf16.msra.mxu0 %v1989
  %2009 = vmatprep.subr.bf16.mxu0 0
  %2010 = vmatpush1.bf16.msra.mxu0 %v1990
  %2011 = vmatprep.subr.bf16.mxu0 0
  %2012 = vmatpush1.bf16.msra.mxu0 %v1991
  %2013 = vmatprep.subr.bf16.mxu0 0
  %2014 = vmatpush1.bf16.msra.mxu0 %v1992
  %2015 = vmatprep.subr.bf16.mxu0 0
  %2016 = vmatpush1.bf16.msra.mxu0 %v1993
  %2017 = vmatprep.subr.bf16.mxu0 0
  %2018 = vmatpush1.bf16.msra.mxu0 %v1994
  %2019 = vmatprep.subr.bf16.mxu0 0
  %2020 = vmatpush1.bf16.msra.mxu0 0
  %2021 = vmatprep.subr.bf16.mxu0 0
  %2022 = vmatpush1.bf16.msra.mxu0 0
  %2023 = vmatprep.subr.bf16.mxu0 0
  %2024 = vmatpush1.bf16.msra.mxu0 0
  %2025 = vmatprep.subr.bf16.mxu0 0
  %2026 = vmatpush1.bf16.msra.mxu0 0
  %2027 = vmatprep.subr.bf16.mxu0 0
  %2028 = vmatpush1.bf16.msra.mxu0 0
  %2029 = vmatprep.subr.bf16.mxu0 0
  %2030 = vmatpush1.bf16.msra.mxu0 0
  %2031 = vmatprep.subr.bf16.mxu0 0
  %2032 = vmatpush1.bf16.msra.mxu0 0
  %2033 = vmatprep.subr.bf16.mxu0 0
  %2034 = vmatpush1.bf16.msra.mxu0 0
  %2035 = vmatprep.mubr.bf16.mxu0 0
  %2036 = vmatmul.mubr.bf16.gmra.mrb[0].mxu0 %v451
  %v2037 = vpop.f32.mrb[0].mxu0
  %v2038 = vadd.f32 0.0, %v2037
  %v2039 = vpop.f32.mrb[0].mxu0
  %v2040 = vpop.f32.mrb[0].mxu0
  %v2041 = vadd.f32 0.0, %v2040
  %v2042 = vpop.f32.mrb[0].mxu0
  %2043 = vmatprep.mubr.bf16.mxu0 0
  %2044 = vmatmul.mubr.bf16.gmra.mrb[0].mxu0 %v452
  %v2045 = vpop.f32.mrb[0].mxu0
  %v2046 = vadd.f32 0.0, %v2045
  %v2047 = vpop.f32.mrb[0].mxu0
  %v2048 = vpop.f32.mrb[0].mxu0
  %v2049 = vadd.f32 0.0, %v2048
  %v2050 = vpop.f32.mrb[0].mxu0
  %2051 = vmatprep.mubr.bf16.mxu0 0
  %2052 = vmatmul.mubr.bf16.gmra.mrb[0].mxu0 %v453
  %v2053 = vpop.f32.mrb[0].mxu0
  %v2054 = vadd.f32 0.0, %v2053
  %v2055 = vpop.f32.mrb[0].mxu0
  %v2056 = vpop.f32.mrb[0].mxu0
  %v2057 = vadd.f32 0.0, %v2056
  %v2058 = vpop.f32.mrb[0].mxu0
  %2059 = vmatprep.mubr.bf16.mxu0 0
  %2060 = vmatmul.mubr.bf16.gmra.mrb[0].mxu0 %v454
  %v2061 = vpop.f32.mrb[0].mxu0
  %v2062 = vadd.f32 0.0, %v2061
  %v2063 = vpop.f32.mrb[0].mxu0
  %v2064 = vpop.f32.mrb[0].mxu0
  %v2065 = vadd.f32 0.0, %v2064
  %v2066 = vpop.f32.mrb[0].mxu0
  %2067 = vmatprep.mubr.bf16.mxu0 0
  %2068 = vmatmul.mubr.bf16.gmra.mrb[0].mxu0 %v455
  %v2069 = vpop.f32.mrb[0].mxu0
  %v2070 = vadd.f32 0.0, %v2069
  %v2071 = vpop.f32.mrb[0].mxu0
  %v2072 = vpop.f32.mrb[0].mxu0
  %v2073 = vadd.f32 0.0, %v2072
  %v2074 = vpop.f32.mrb[0].mxu0
  %2075 = vmatprep.mubr.bf16.mxu0 0
  %2076 = vmatmul.mubr.bf16.gmra.mrb[0].mxu0 %v456
  %v2077 = vpop.f32.mrb[0].mxu0
  %v2078 = vadd.f32 0.0, %v2077
  %v2079 = vpop.f32.mrb[0].mxu0
  %v2080 = vpop.f32.mrb[0].mxu0
  %v2081 = vadd.f32 0.0, %v2080
  %v2082 = vpop.f32.mrb[0].mxu0
  %2083 = vmatprep.mubr.bf16.mxu0 0
  %2084 = vmatmul.mubr.bf16.gmra.mrb[0].mxu0 %v1949
  %v2085 = vpop.f32.mrb[0].mxu0
  %v2086 = vadd.f32 0.0, %v2085
  %v2087 = vpop.f32.mrb[0].mxu0
  %v2088 = vpop.f32.mrb[0].mxu0
  %v2089 = vadd.f32 0.0, %v2088
  %v2090 = vpop.f32.mrb[0].mxu0
  %2091 = vmatprep.mubr.bf16.mxu0 0
  %2092 = vmatmul.mubr.bf16.gmra.mrb[0].mxu0 %v1950
  %v2093 = vpop.f32.mrb[0].mxu0
  %v2094 = vadd.f32 0.0, %v2093
  %v2095 = vpop.f32.mrb[0].mxu0
  %v2096 = vpop.f32.mrb[0].mxu0
  %v2097 = vadd.f32 0.0, %v2096
  %v2098 = vpop.f32.mrb[0].mxu0
  %2099 = vmatprep.mubr.bf16.mxu0 0
  %2100 = vmatmul.mubr.bf16.gmra.mrb[0].mxu0 %v1951
  %v2101 = vpop.f32.mrb[0].mxu0
  %v2102 = vadd.f32 0.0, %v2101
  %v2103 = vpop.f32.mrb[0].mxu0
  %v2104 = vpop.f32.mrb[0].mxu0
  %v2105 = vadd.f32 0.0, %v2104
  %v2106 = vpop.f32.mrb[0].mxu0
  %2107 = vdwg.mxu0
  %v2108 = vadd.f32 %v1903, %v2038
  %v2109 = vadd.f32 %v1904, %v2041
  %v2110 = vadd.f32 %v1905, %v2046
  %v2111 = vadd.f32 %v1906, %v2049
  %v2112 = vadd.f32 %v1907, %v2054
  %v2113 = vadd.f32 %v1908, %v2057
  %v2114 = vadd.f32 %v1909, %v2062
  %v2115 = vadd.f32 %v1910, %v2065
  %v2116 = vadd.f32 %v1911, %v2070
  %v2117 = vadd.f32 %v1912, %v2073
  %v2118 = vadd.f32 %v1913, %v2078
  %v2119 = vadd.f32 %v1914, %v2081
  %v2120 = vadd.f32 %v1915, %v2086
  %v2121 = vadd.f32 %v1916, %v2089
  %v2122 = vadd.f32 %v1917, %v2094
  %v2123 = vadd.f32 %v1918, %v2097
  %v2124 = vadd.f32 %v1919, %v2102
  %v2125 = vadd.f32 %v1920, %v2105
  %v2126 = vld [vmem:[%s1 + $0x240] sm:$0xf]
  %v2127 = vld [vmem:[%s1 + $0x244] sm:$0xf]
  %v2128 = vld [vmem:[%s1 + $0x248] sm:$0xf]
  %v2129 = vld [vmem:[%s1 + $0x24c] sm:$0xf]
  %v2130 = vld [vmem:[%s1 + $0x250] sm:$0xf]
  %v2131 = vld [vmem:[%s1 + $0x254] sm:$0xf]
  %v2132 = vld [vmem:[%s1 + $0x258] sm:$0xf]
  %v2133 = vld [vmem:[%s1 + $0x25c] sm:$0xf]
  %v2134 = vld [vmem:[%s1 + $0x260] sm:$0xf]
  %v2135 = vld [vmem:[%s1 + $0x264] sm:$0xf]
  %v2136 = vld [vmem:[%s1 + $0x268] sm:$0xf]
  %v2137 = vld [vmem:[%s1 + $0x26c] sm:$0xf]
  %v2138 = vld [vmem:[%s1 + $0x270] sm:$0xf]
  %v2139 = vld [vmem:[%s1 + $0x274] sm:$0xf]
  %v2140 = vld [vmem:[%s1 + $0x278] sm:$0xf]
  %v2141 = vld [vmem:[%s1 + $0x27c] sm:$0xf]
  %v2148 = vunpack.c.l.b16 %v143
  %v2149 = vunpack.c.l.b16 %v144
  %v2150 = vunpack.c.l.b16 %v147
  %v2151 = vunpack.c.l.b16 %v148
  %v2152 = vunpack.c.l.b16 %v151
  %v2153 = vunpack.c.l.b16 %v152
  %v2154 = vpack.c.b16 %v2149, %v2148
  %v2155 = vpack.c.b16 %v2151, %v2150
  %v2156 = vpack.c.b16 %v2153, %v2152
  %v2176 = vunpack.c.l.b16 %v2126
  %v2177 = vunpack.c.l.b16 %v2127
  %v2178 = vunpack.c.l.b16 %v2128
  %v2179 = vunpack.c.l.b16 %v2129
  %v2180 = vunpack.c.l.b16 %v2130
  %v2181 = vunpack.c.l.b16 %v2131
  %v2182 = vunpack.c.l.b16 %v2132
  %v2183 = vunpack.c.l.b16 %v2133
  %v2184 = vunpack.c.l.b16 %v2134
  %v2185 = vunpack.c.l.b16 %v2135
  %v2186 = vunpack.c.l.b16 %v2136
  %v2187 = vunpack.c.l.b16 %v2137
  %v2188 = vunpack.c.l.b16 %v2138
  %v2189 = vunpack.c.l.b16 %v2139
  %v2190 = vunpack.c.l.b16 %v2140
  %v2191 = vunpack.c.l.b16 %v2141
  %v2192 = vpack.c.b16 %v2177, %v2176
  %v2193 = vpack.c.b16 %v2179, %v2178
  %v2194 = vpack.c.b16 %v2181, %v2180
  %v2195 = vpack.c.b16 %v2183, %v2182
  %v2196 = vpack.c.b16 %v2185, %v2184
  %v2197 = vpack.c.b16 %v2187, %v2186
  %v2198 = vpack.c.b16 %v2189, %v2188
  %v2199 = vpack.c.b16 %v2191, %v2190
  %2208 = vmatprep.subr.bf16.mxu0 0
  %2209 = vmatpush1.bf16.msra.mxu0 %v2192
  %2210 = vmatprep.subr.bf16.mxu0 0
  %2211 = vmatpush1.bf16.msra.mxu0 %v2193
  %2212 = vmatprep.subr.bf16.mxu0 0
  %2213 = vmatpush1.bf16.msra.mxu0 %v2194
  %2214 = vmatprep.subr.bf16.mxu0 0
  %2215 = vmatpush1.bf16.msra.mxu0 %v2195
  %2216 = vmatprep.subr.bf16.mxu0 0
  %2217 = vmatpush1.bf16.msra.mxu0 %v2196
  %2218 = vmatprep.subr.bf16.mxu0 0
  %2219 = vmatpush1.bf16.msra.mxu0 %v2197
  %2220 = vmatprep.subr.bf16.mxu0 0
  %2221 = vmatpush1.bf16.msra.mxu0 %v2198
  %2222 = vmatprep.subr.bf16.mxu0 0
  %2223 = vmatpush1.bf16.msra.mxu0 %v2199
  %2224 = vmatprep.subr.bf16.mxu0 0
  %2225 = vmatpush1.bf16.msra.mxu0 0
  %2226 = vmatprep.subr.bf16.mxu0 0
  %2227 = vmatpush1.bf16.msra.mxu0 0
  %2228 = vmatprep.subr.bf16.mxu0 0
  %2229 = vmatpush1.bf16.msra.mxu0 0
  %2230 = vmatprep.subr.bf16.mxu0 0
  %2231 = vmatpush1.bf16.msra.mxu0 0
  %2232 = vmatprep.subr.bf16.mxu0 0
  %2233 = vmatpush1.bf16.msra.mxu0 0
  %2234 = vmatprep.subr.bf16.mxu0 0
  %2235 = vmatpush1.bf16.msra.mxu0 0
  %2236 = vmatprep.subr.bf16.mxu0 0
  %2237 = vmatpush1.bf16.msra.mxu0 0
  %2238 = vmatprep.subr.bf16.mxu0 0
  %2239 = vmatpush1.bf16.msra.mxu0 0
  %2240 = vmatprep.mubr.bf16.mxu0 0
  %2241 = vmatmul.mubr.bf16.gmra.mrb[0].mxu0 %v244
  %v2242 = vpop.f32.mrb[0].mxu0
  %v2243 = vadd.f32 0.0, %v2242
  %v2244 = vpop.f32.mrb[0].mxu0
  %v2245 = vpop.f32.mrb[0].mxu0
  %v2246 = vadd.f32 0.0, %v2245
  %v2247 = vpop.f32.mrb[0].mxu0
  %2248 = vmatprep.mubr.bf16.mxu0 0
  %2249 = vmatmul.mubr.bf16.gmra.mrb[0].mxu0 %v245
  %v2250 = vpop.f32.mrb[0].mxu0
  %v2251 = vadd.f32 0.0, %v2250
  %v2252 = vpop.f32.mrb[0].mxu0
  %v2253 = vpop.f32.mrb[0].mxu0
  %v2254 = vadd.f32 0.0, %v2253
  %v2255 = vpop.f32.mrb[0].mxu0
  %2256 = vmatprep.mubr.bf16.mxu0 0
  %2257 = vmatmul.mubr.bf16.gmra.mrb[0].mxu0 %v246
  %v2258 = vpop.f32.mrb[0].mxu0
  %v2259 = vadd.f32 0.0, %v2258
  %v2260 = vpop.f32.mrb[0].mxu0
  %v2261 = vpop.f32.mrb[0].mxu0
  %v2262 = vadd.f32 0.0, %v2261
  %v2263 = vpop.f32.mrb[0].mxu0
  %2264 = vmatprep.mubr.bf16.mxu0 0
  %2265 = vmatmul.mubr.bf16.gmra.mrb[0].mxu0 %v247
  %v2266 = vpop.f32.mrb[0].mxu0
  %v2267 = vadd.f32 0.0, %v2266
  %v2268 = vpop.f32.mrb[0].mxu0
  %v2269 = vpop.f32.mrb[0].mxu0
  %v2270 = vadd.f32 0.0, %v2269
  %v2271 = vpop.f32.mrb[0].mxu0
  %2272 = vmatprep.mubr.bf16.mxu0 0
  %2273 = vmatmul.mubr.bf16.gmra.mrb[0].mxu0 %v248
  %v2274 = vpop.f32.mrb[0].mxu0
  %v2275 = vadd.f32 0.0, %v2274
  %v2276 = vpop.f32.mrb[0].mxu0
  %v2277 = vpop.f32.mrb[0].mxu0
  %v2278 = vadd.f32 0.0, %v2277
  %v2279 = vpop.f32.mrb[0].mxu0
  %2280 = vmatprep.mubr.bf16.mxu0 0
  %2281 = vmatmul.mubr.bf16.gmra.mrb[0].mxu0 %v249
  %v2282 = vpop.f32.mrb[0].mxu0
  %v2283 = vadd.f32 0.0, %v2282
  %v2284 = vpop.f32.mrb[0].mxu0
  %v2285 = vpop.f32.mrb[0].mxu0
  %v2286 = vadd.f32 0.0, %v2285
  %v2287 = vpop.f32.mrb[0].mxu0
  %2288 = vmatprep.mubr.bf16.mxu0 0
  %2289 = vmatmul.mubr.bf16.gmra.mrb[0].mxu0 %v2154
  %v2290 = vpop.f32.mrb[0].mxu0
  %v2291 = vadd.f32 0.0, %v2290
  %v2292 = vpop.f32.mrb[0].mxu0
  %v2293 = vpop.f32.mrb[0].mxu0
  %v2294 = vadd.f32 0.0, %v2293
  %v2295 = vpop.f32.mrb[0].mxu0
  %2296 = vmatprep.mubr.bf16.mxu0 0
  %2297 = vmatmul.mubr.bf16.gmra.mrb[0].mxu0 %v2155
  %v2298 = vpop.f32.mrb[0].mxu0
  %v2299 = vadd.f32 0.0, %v2298
  %v2300 = vpop.f32.mrb[0].mxu0
  %v2301 = vpop.f32.mrb[0].mxu0
  %v2302 = vadd.f32 0.0, %v2301
  %v2303 = vpop.f32.mrb[0].mxu0
  %2304 = vmatprep.mubr.bf16.mxu0 0
  %2305 = vmatmul.mubr.bf16.gmra.mrb[0].mxu0 %v2156
  %v2306 = vpop.f32.mrb[0].mxu0
  %v2307 = vadd.f32 0.0, %v2306
  %v2308 = vpop.f32.mrb[0].mxu0
  %v2309 = vpop.f32.mrb[0].mxu0
  %v2310 = vadd.f32 0.0, %v2309
  %v2311 = vpop.f32.mrb[0].mxu0
  %2312 = vdwg.mxu0
  %v2313 = vadd.f32 %v2108, %v2243
  %v2314 = vadd.f32 %v2109, %v2246
  %v2315 = vadd.f32 %v2110, %v2251
  %v2316 = vadd.f32 %v2111, %v2254
  %v2317 = vadd.f32 %v2112, %v2259
  %v2318 = vadd.f32 %v2113, %v2262
  %v2319 = vadd.f32 %v2114, %v2267
  %v2320 = vadd.f32 %v2115, %v2270
  %v2321 = vadd.f32 %v2116, %v2275
  %v2322 = vadd.f32 %v2117, %v2278
  %v2323 = vadd.f32 %v2118, %v2283
  %v2324 = vadd.f32 %v2119, %v2286
  %v2325 = vadd.f32 %v2120, %v2291
  %v2326 = vadd.f32 %v2121, %v2294
  %v2327 = vadd.f32 %v2122, %v2299
  %v2328 = vadd.f32 %v2123, %v2302
  %v2329 = vadd.f32 %v2124, %v2307
  %v2330 = vadd.f32 %v2125, %v2310
  %v2331 = vld [vmem:[%s1 + $0x280] sm:$0xf]
  %v2332 = vld [vmem:[%s1 + $0x284] sm:$0xf]
  %v2333 = vld [vmem:[%s1 + $0x288] sm:$0xf]
  %v2334 = vld [vmem:[%s1 + $0x28c] sm:$0xf]
  %v2335 = vld [vmem:[%s1 + $0x290] sm:$0xf]
  %v2336 = vld [vmem:[%s1 + $0x294] sm:$0xf]
  %v2337 = vld [vmem:[%s1 + $0x298] sm:$0xf]
  %v2338 = vld [vmem:[%s1 + $0x29c] sm:$0xf]
  %v2339 = vld [vmem:[%s1 + $0x2a0] sm:$0xf]
  %v2340 = vld [vmem:[%s1 + $0x2a4] sm:$0xf]
  %v2341 = vld [vmem:[%s1 + $0x2a8] sm:$0xf]
  %v2342 = vld [vmem:[%s1 + $0x2ac] sm:$0xf]
  %v2343 = vld [vmem:[%s1 + $0x2b0] sm:$0xf]
  %v2344 = vld [vmem:[%s1 + $0x2b4] sm:$0xf]
  %v2345 = vld [vmem:[%s1 + $0x2b8] sm:$0xf]
  %v2346 = vld [vmem:[%s1 + $0x2bc] sm:$0xf]
  %v2349 = vunpack.c.l.b16 %v153
  %v2350 = vunpack.c.l.b16 %v154
  %v2351 = vpack.c.b16 %v2350, %v2349
  %v2369 = vunpack.c.l.b16 %v2331
  %v2370 = vunpack.c.l.b16 %v2332
  %v2371 = vunpack.c.l.b16 %v2333
  %v2372 = vunpack.c.l.b16 %v2334
  %v2373 = vunpack.c.l.b16 %v2335
  %v2374 = vunpack.c.l.b16 %v2336
  %v2375 = vunpack.c.l.b16 %v2337
  %v2376 = vunpack.c.l.b16 %v2338
  %v2377 = vunpack.c.l.b16 %v2339
  %v2378 = vunpack.c.l.b16 %v2340
  %v2379 = vunpack.c.l.b16 %v2341
  %v2380 = vunpack.c.l.b16 %v2342
  %v2381 = vunpack.c.l.b16 %v2343
  %v2382 = vunpack.c.l.b16 %v2344
  %v2383 = vunpack.c.l.b16 %v2345
  %v2384 = vunpack.c.l.b16 %v2346
  %v2385 = vpack.c.b16 %v2370, %v2369
  %v2386 = vpack.c.b16 %v2372, %v2371
  %v2387 = vpack.c.b16 %v2374, %v2373
  %v2388 = vpack.c.b16 %v2376, %v2375
  %v2389 = vpack.c.b16 %v2378, %v2377
  %v2390 = vpack.c.b16 %v2380, %v2379
  %v2391 = vpack.c.b16 %v2382, %v2381
  %v2392 = vpack.c.b16 %v2384, %v2383
  %2401 = vmatprep.subr.bf16.mxu0 0
  %2402 = vmatpush1.bf16.msra.mxu0 %v2385
  %2403 = vmatprep.subr.bf16.mxu0 0
  %2404 = vmatpush1.bf16.msra.mxu0 %v2386
  %2405 = vmatprep.subr.bf16.mxu0 0
  %2406 = vmatpush1.bf16.msra.mxu0 %v2387
  %2407 = vmatprep.subr.bf16.mxu0 0
  %2408 = vmatpush1.bf16.msra.mxu0 %v2388
  %2409 = vmatprep.subr.bf16.mxu0 0
  %2410 = vmatpush1.bf16.msra.mxu0 %v2389
  %2411 = vmatprep.subr.bf16.mxu0 0
  %2412 = vmatpush1.bf16.msra.mxu0 %v2390
  %2413 = vmatprep.subr.bf16.mxu0 0
  %2414 = vmatpush1.bf16.msra.mxu0 %v2391
  %2415 = vmatprep.subr.bf16.mxu0 0
  %2416 = vmatpush1.bf16.msra.mxu0 %v2392
  %2417 = vmatprep.subr.bf16.mxu0 0
  %2418 = vmatpush1.bf16.msra.mxu0 0
  %2419 = vmatprep.subr.bf16.mxu0 0
  %2420 = vmatpush1.bf16.msra.mxu0 0
  %2421 = vmatprep.subr.bf16.mxu0 0
  %2422 = vmatpush1.bf16.msra.mxu0 0
  %2423 = vmatprep.subr.bf16.mxu0 0
  %2424 = vmatpush1.bf16.msra.mxu0 0
  %2425 = vmatprep.subr.bf16.mxu0 0
  %2426 = vmatpush1.bf16.msra.mxu0 0
  %2427 = vmatprep.subr.bf16.mxu0 0
  %2428 = vmatpush1.bf16.msra.mxu0 0
  %2429 = vmatprep.subr.bf16.mxu0 0
  %2430 = vmatpush1.bf16.msra.mxu0 0
  %2431 = vmatprep.subr.bf16.mxu0 0
  %2432 = vmatpush1.bf16.msra.mxu0 0
  %2433 = vmatprep.mubr.bf16.mxu0 0
  %2434 = vmatmul.mubr.bf16.gmra.mrb[0].mxu0 %v452
  %v2435 = vpop.f32.mrb[0].mxu0
  %v2436 = vadd.f32 0.0, %v2435
  %v2437 = vpop.f32.mrb[0].mxu0
  %v2438 = vpop.f32.mrb[0].mxu0
  %v2439 = vadd.f32 0.0, %v2438
  %v2440 = vpop.f32.mrb[0].mxu0
  %2441 = vmatprep.mubr.bf16.mxu0 0
  %2442 = vmatmul.mubr.bf16.gmra.mrb[0].mxu0 %v453
  %v2443 = vpop.f32.mrb[0].mxu0
  %v2444 = vadd.f32 0.0, %v2443
  %v2445 = vpop.f32.mrb[0].mxu0
  %v2446 = vpop.f32.mrb[0].mxu0
  %v2447 = vadd.f32 0.0, %v2446
  %v2448 = vpop.f32.mrb[0].mxu0
  %2449 = vmatprep.mubr.bf16.mxu0 0
  %2450 = vmatmul.mubr.bf16.gmra.mrb[0].mxu0 %v648
  %v2451 = vpop.f32.mrb[0].mxu0
  %v2452 = vadd.f32 0.0, %v2451
  %v2453 = vpop.f32.mrb[0].mxu0
  %v2454 = vpop.f32.mrb[0].mxu0
  %v2455 = vadd.f32 0.0, %v2454
  %v2456 = vpop.f32.mrb[0].mxu0
  %2457 = vmatprep.mubr.bf16.mxu0 0
  %2458 = vmatmul.mubr.bf16.gmra.mrb[0].mxu0 %v455
  %v2459 = vpop.f32.mrb[0].mxu0
  %v2460 = vadd.f32 0.0, %v2459
  %v2461 = vpop.f32.mrb[0].mxu0
  %v2462 = vpop.f32.mrb[0].mxu0
  %v2463 = vadd.f32 0.0, %v2462
  %v2464 = vpop.f32.mrb[0].mxu0
  %2465 = vmatprep.mubr.bf16.mxu0 0
  %2466 = vmatmul.mubr.bf16.gmra.mrb[0].mxu0 %v456
  %v2467 = vpop.f32.mrb[0].mxu0
  %v2468 = vadd.f32 0.0, %v2467
  %v2469 = vpop.f32.mrb[0].mxu0
  %v2470 = vpop.f32.mrb[0].mxu0
  %v2471 = vadd.f32 0.0, %v2470
  %v2472 = vpop.f32.mrb[0].mxu0
  %2473 = vmatprep.mubr.bf16.mxu0 0
  %2474 = vmatmul.mubr.bf16.gmra.mrb[0].mxu0 %v649
  %v2475 = vpop.f32.mrb[0].mxu0
  %v2476 = vadd.f32 0.0, %v2475
  %v2477 = vpop.f32.mrb[0].mxu0
  %v2478 = vpop.f32.mrb[0].mxu0
  %v2479 = vadd.f32 0.0, %v2478
  %v2480 = vpop.f32.mrb[0].mxu0
  %2481 = vmatprep.mubr.bf16.mxu0 0
  %2482 = vmatmul.mubr.bf16.gmra.mrb[0].mxu0 %v1950
  %v2483 = vpop.f32.mrb[0].mxu0
  %v2484 = vadd.f32 0.0, %v2483
  %v2485 = vpop.f32.mrb[0].mxu0
  %v2486 = vpop.f32.mrb[0].mxu0
  %v2487 = vadd.f32 0.0, %v2486
  %v2488 = vpop.f32.mrb[0].mxu0
  %2489 = vmatprep.mubr.bf16.mxu0 0
  %2490 = vmatmul.mubr.bf16.gmra.mrb[0].mxu0 %v1951
  %v2491 = vpop.f32.mrb[0].mxu0
  %v2492 = vadd.f32 0.0, %v2491
  %v2493 = vpop.f32.mrb[0].mxu0
  %v2494 = vpop.f32.mrb[0].mxu0
  %v2495 = vadd.f32 0.0, %v2494
  %v2496 = vpop.f32.mrb[0].mxu0
  %2497 = vmatprep.mubr.bf16.mxu0 0
  %2498 = vmatmul.mubr.bf16.gmra.mrb[0].mxu0 %v2351
  %v2499 = vpop.f32.mrb[0].mxu0
  %v2500 = vadd.f32 0.0, %v2499
  %v2501 = vpop.f32.mrb[0].mxu0
  %v2502 = vpop.f32.mrb[0].mxu0
  %v2503 = vadd.f32 0.0, %v2502
  %v2504 = vpop.f32.mrb[0].mxu0
  %2505 = vdwg.mxu0
  %v2506 = vadd.f32 %v2313, %v2436
  %v2507 = vadd.f32 %v2314, %v2439
  %v2508 = vadd.f32 %v2315, %v2444
  %v2509 = vadd.f32 %v2316, %v2447
  %v2510 = vadd.f32 %v2317, %v2452
  %v2511 = vadd.f32 %v2318, %v2455
  %v2512 = vadd.f32 %v2319, %v2460
  %v2513 = vadd.f32 %v2320, %v2463
  %v2514 = vadd.f32 %v2321, %v2468
  %v2515 = vadd.f32 %v2322, %v2471
  %v2516 = vadd.f32 %v2323, %v2476
  %v2517 = vadd.f32 %v2324, %v2479
  %v2518 = vadd.f32 %v2325, %v2484
  %v2519 = vadd.f32 %v2326, %v2487
  %v2520 = vadd.f32 %v2327, %v2492
  %v2521 = vadd.f32 %v2328, %v2495
  %v2522 = vadd.f32 %v2329, %v2500
  %v2523 = vadd.f32 %v2330, %v2503
  %v2524 = vld [vmem:[%s1 + $0x2c0] sm:$0xf]
  %v2525 = vld [vmem:[%s1 + $0x2c4] sm:$0xf]
  %v2526 = vld [vmem:[%s1 + $0x2c8] sm:$0xf]
  %v2527 = vld [vmem:[%s1 + $0x2cc] sm:$0xf]
  %v2528 = vld [vmem:[%s1 + $0x2d0] sm:$0xf]
  %v2529 = vld [vmem:[%s1 + $0x2d4] sm:$0xf]
  %v2530 = vld [vmem:[%s1 + $0x2d8] sm:$0xf]
  %v2531 = vld [vmem:[%s1 + $0x2dc] sm:$0xf]
  %v2532 = vld [vmem:[%s1 + $0x2e0] sm:$0xf]
  %v2533 = vld [vmem:[%s1 + $0x2e4] sm:$0xf]
  %v2534 = vld [vmem:[%s1 + $0x2e8] sm:$0xf]
  %v2535 = vld [vmem:[%s1 + $0x2ec] sm:$0xf]
  %v2536 = vld [vmem:[%s1 + $0x2f0] sm:$0xf]
  %v2537 = vld [vmem:[%s1 + $0x2f4] sm:$0xf]
  %v2538 = vld [vmem:[%s1 + $0x2f8] sm:$0xf]
  %v2539 = vld [vmem:[%s1 + $0x2fc] sm:$0xf]
  %v2542 = vunpack.c.l.b16 %v155
  %v2543 = vunpack.c.l.b16 %v156
  %v2544 = vpack.c.b16 %v2543, %v2542
  %v2562 = vunpack.c.l.b16 %v2524
  %v2563 = vunpack.c.l.b16 %v2525
  %v2564 = vunpack.c.l.b16 %v2526
  %v2565 = vunpack.c.l.b16 %v2527
  %v2566 = vunpack.c.l.b16 %v2528
  %v2567 = vunpack.c.l.b16 %v2529
  %v2568 = vunpack.c.l.b16 %v2530
  %v2569 = vunpack.c.l.b16 %v2531
  %v2570 = vunpack.c.l.b16 %v2532
  %v2571 = vunpack.c.l.b16 %v2533
  %v2572 = vunpack.c.l.b16 %v2534
  %v2573 = vunpack.c.l.b16 %v2535
  %v2574 = vunpack.c.l.b16 %v2536
  %v2575 = vunpack.c.l.b16 %v2537
  %v2576 = vunpack.c.l.b16 %v2538
  %v2577 = vunpack.c.l.b16 %v2539
  %v2578 = vpack.c.b16 %v2563, %v2562
  %v2579 = vpack.c.b16 %v2565, %v2564
  %v2580 = vpack.c.b16 %v2567, %v2566
  %v2581 = vpack.c.b16 %v2569, %v2568
  %v2582 = vpack.c.b16 %v2571, %v2570
  %v2583 = vpack.c.b16 %v2573, %v2572
  %v2584 = vpack.c.b16 %v2575, %v2574
  %v2585 = vpack.c.b16 %v2577, %v2576
  %2594 = vmatprep.subr.bf16.mxu0 0
  %2595 = vmatpush1.bf16.msra.mxu0 %v2578
  %2596 = vmatprep.subr.bf16.mxu0 0
  %2597 = vmatpush1.bf16.msra.mxu0 %v2579
  %2598 = vmatprep.subr.bf16.mxu0 0
  %2599 = vmatpush1.bf16.msra.mxu0 %v2580
  %2600 = vmatprep.subr.bf16.mxu0 0
  %2601 = vmatpush1.bf16.msra.mxu0 %v2581
  %2602 = vmatprep.subr.bf16.mxu0 0
  %2603 = vmatpush1.bf16.msra.mxu0 %v2582
  %2604 = vmatprep.subr.bf16.mxu0 0
  %2605 = vmatpush1.bf16.msra.mxu0 %v2583
  %2606 = vmatprep.subr.bf16.mxu0 0
  %2607 = vmatpush1.bf16.msra.mxu0 %v2584
  %2608 = vmatprep.subr.bf16.mxu0 0
  %2609 = vmatpush1.bf16.msra.mxu0 %v2585
  %2610 = vmatprep.subr.bf16.mxu0 0
  %2611 = vmatpush1.bf16.msra.mxu0 0
  %2612 = vmatprep.subr.bf16.mxu0 0
  %2613 = vmatpush1.bf16.msra.mxu0 0
  %2614 = vmatprep.subr.bf16.mxu0 0
  %2615 = vmatpush1.bf16.msra.mxu0 0
  %2616 = vmatprep.subr.bf16.mxu0 0
  %2617 = vmatpush1.bf16.msra.mxu0 0
  %2618 = vmatprep.subr.bf16.mxu0 0
  %2619 = vmatpush1.bf16.msra.mxu0 0
  %2620 = vmatprep.subr.bf16.mxu0 0
  %2621 = vmatpush1.bf16.msra.mxu0 0
  %2622 = vmatprep.subr.bf16.mxu0 0
  %2623 = vmatpush1.bf16.msra.mxu0 0
  %2624 = vmatprep.subr.bf16.mxu0 0
  %2625 = vmatpush1.bf16.msra.mxu0 0
  %2626 = vmatprep.mubr.bf16.mxu0 0
  %2627 = vmatmul.mubr.bf16.gmra.mrb[0].mxu0 %v245
  %v2628 = vpop.f32.mrb[0].mxu0
  %v2629 = vadd.f32 0.0, %v2628
  %v2630 = vpop.f32.mrb[0].mxu0
  %v2631 = vpop.f32.mrb[0].mxu0
  %v2632 = vadd.f32 0.0, %v2631
  %v2633 = vpop.f32.mrb[0].mxu0
  %2634 = vmatprep.mubr.bf16.mxu0 0
  %2635 = vmatmul.mubr.bf16.gmra.mrb[0].mxu0 %v246
  %v2636 = vpop.f32.mrb[0].mxu0
  %v2637 = vadd.f32 0.0, %v2636
  %v2638 = vpop.f32.mrb[0].mxu0
  %v2639 = vpop.f32.mrb[0].mxu0
  %v2640 = vadd.f32 0.0, %v2639
  %v2641 = vpop.f32.mrb[0].mxu0
  %2642 = vmatprep.mubr.bf16.mxu0 0
  %2643 = vmatmul.mubr.bf16.gmra.mrb[0].mxu0 %v853
  %v2644 = vpop.f32.mrb[0].mxu0
  %v2645 = vadd.f32 0.0, %v2644
  %v2646 = vpop.f32.mrb[0].mxu0
  %v2647 = vpop.f32.mrb[0].mxu0
  %v2648 = vadd.f32 0.0, %v2647
  %v2649 = vpop.f32.mrb[0].mxu0
  %2650 = vmatprep.mubr.bf16.mxu0 0
  %2651 = vmatmul.mubr.bf16.gmra.mrb[0].mxu0 %v248
  %v2652 = vpop.f32.mrb[0].mxu0
  %v2653 = vadd.f32 0.0, %v2652
  %v2654 = vpop.f32.mrb[0].mxu0
  %v2655 = vpop.f32.mrb[0].mxu0
  %v2656 = vadd.f32 0.0, %v2655
  %v2657 = vpop.f32.mrb[0].mxu0
  %2658 = vmatprep.mubr.bf16.mxu0 0
  %2659 = vmatmul.mubr.bf16.gmra.mrb[0].mxu0 %v249
  %v2660 = vpop.f32.mrb[0].mxu0
  %v2661 = vadd.f32 0.0, %v2660
  %v2662 = vpop.f32.mrb[0].mxu0
  %v2663 = vpop.f32.mrb[0].mxu0
  %v2664 = vadd.f32 0.0, %v2663
  %v2665 = vpop.f32.mrb[0].mxu0
  %2666 = vmatprep.mubr.bf16.mxu0 0
  %2667 = vmatmul.mubr.bf16.gmra.mrb[0].mxu0 %v854
  %v2668 = vpop.f32.mrb[0].mxu0
  %v2669 = vadd.f32 0.0, %v2668
  %v2670 = vpop.f32.mrb[0].mxu0
  %v2671 = vpop.f32.mrb[0].mxu0
  %v2672 = vadd.f32 0.0, %v2671
  %v2673 = vpop.f32.mrb[0].mxu0
  %2674 = vmatprep.mubr.bf16.mxu0 0
  %2675 = vmatmul.mubr.bf16.gmra.mrb[0].mxu0 %v2155
  %v2676 = vpop.f32.mrb[0].mxu0
  %v2677 = vadd.f32 0.0, %v2676
  %v2678 = vpop.f32.mrb[0].mxu0
  %v2679 = vpop.f32.mrb[0].mxu0
  %v2680 = vadd.f32 0.0, %v2679
  %v2681 = vpop.f32.mrb[0].mxu0
  %2682 = vmatprep.mubr.bf16.mxu0 0
  %2683 = vmatmul.mubr.bf16.gmra.mrb[0].mxu0 %v2156
  %v2684 = vpop.f32.mrb[0].mxu0
  %v2685 = vadd.f32 0.0, %v2684
  %v2686 = vpop.f32.mrb[0].mxu0
  %v2687 = vpop.f32.mrb[0].mxu0
  %v2688 = vadd.f32 0.0, %v2687
  %v2689 = vpop.f32.mrb[0].mxu0
  %2690 = vmatprep.mubr.bf16.mxu0 0
  %2691 = vmatmul.mubr.bf16.gmra.mrb[0].mxu0 %v2544
  %v2692 = vpop.f32.mrb[0].mxu0
  %v2693 = vadd.f32 0.0, %v2692
  %v2694 = vpop.f32.mrb[0].mxu0
  %v2695 = vpop.f32.mrb[0].mxu0
  %v2696 = vadd.f32 0.0, %v2695
  %v2697 = vpop.f32.mrb[0].mxu0
  %2698 = vdwg.mxu0
  %v2699 = vadd.f32 %v2506, %v2629
  %v2700 = vadd.f32 %v2507, %v2632
  %v2701 = vadd.f32 %v2508, %v2637
  %v2702 = vadd.f32 %v2509, %v2640
  %v2703 = vadd.f32 %v2510, %v2645
  %v2704 = vadd.f32 %v2511, %v2648
  %v2705 = vadd.f32 %v2512, %v2653
  %v2706 = vadd.f32 %v2513, %v2656
  %v2707 = vadd.f32 %v2514, %v2661
  %v2708 = vadd.f32 %v2515, %v2664
  %v2709 = vadd.f32 %v2516, %v2669
  %v2710 = vadd.f32 %v2517, %v2672
  %v2711 = vadd.f32 %v2518, %v2677
  %v2712 = vadd.f32 %v2519, %v2680
  %v2713 = vadd.f32 %v2520, %v2685
  %v2714 = vadd.f32 %v2521, %v2688
  %v2715 = vadd.f32 %v2522, %v2693
  %v2716 = vadd.f32 %v2523, %v2696
  %v2717 = vld [vmem:[%s1 + $0x300] sm:$0xf]
  %v2718 = vld [vmem:[%s1 + $0x304] sm:$0xf]
  %v2719 = vld [vmem:[%s1 + $0x308] sm:$0xf]
  %v2720 = vld [vmem:[%s1 + $0x30c] sm:$0xf]
  %v2721 = vld [vmem:[%s1 + $0x310] sm:$0xf]
  %v2722 = vld [vmem:[%s1 + $0x314] sm:$0xf]
  %v2723 = vld [vmem:[%s1 + $0x318] sm:$0xf]
  %v2724 = vld [vmem:[%s1 + $0x31c] sm:$0xf]
  %v2725 = vld [vmem:[%s1 + $0x320] sm:$0xf]
  %v2726 = vld [vmem:[%s1 + $0x324] sm:$0xf]
  %v2727 = vld [vmem:[%s1 + $0x328] sm:$0xf]
  %v2728 = vld [vmem:[%s1 + $0x32c] sm:$0xf]
  %v2729 = vld [vmem:[%s1 + $0x330] sm:$0xf]
  %v2730 = vld [vmem:[%s1 + $0x334] sm:$0xf]
  %v2731 = vld [vmem:[%s1 + $0x338] sm:$0xf]
  %v2732 = vld [vmem:[%s1 + $0x33c] sm:$0xf]
  %v2739 = vunpack.c.l.b16 %v157
  %v2740 = vunpack.c.l.b16 %v158
  %v2741 = vunpack.c.l.b16 %v161
  %v2742 = vunpack.c.l.b16 %v162
  %v2743 = vunpack.c.l.b16 %v165
  %v2744 = vunpack.c.l.b16 %v166
  %v2745 = vpack.c.b16 %v2740, %v2739
  %v2746 = vpack.c.b16 %v2742, %v2741
  %v2747 = vpack.c.b16 %v2744, %v2743
  %v2767 = vunpack.c.l.b16 %v2717
  %v2768 = vunpack.c.l.b16 %v2718
  %v2769 = vunpack.c.l.b16 %v2719
  %v2770 = vunpack.c.l.b16 %v2720
  %v2771 = vunpack.c.l.b16 %v2721
  %v2772 = vunpack.c.l.b16 %v2722
  %v2773 = vunpack.c.l.b16 %v2723
  %v2774 = vunpack.c.l.b16 %v2724
  %v2775 = vunpack.c.l.b16 %v2725
  %v2776 = vunpack.c.l.b16 %v2726
  %v2777 = vunpack.c.l.b16 %v2727
  %v2778 = vunpack.c.l.b16 %v2728
  %v2779 = vunpack.c.l.b16 %v2729
  %v2780 = vunpack.c.l.b16 %v2730
  %v2781 = vunpack.c.l.b16 %v2731
  %v2782 = vunpack.c.l.b16 %v2732
  %v2783 = vpack.c.b16 %v2768, %v2767
  %v2784 = vpack.c.b16 %v2770, %v2769
  %v2785 = vpack.c.b16 %v2772, %v2771
  %v2786 = vpack.c.b16 %v2774, %v2773
  %v2787 = vpack.c.b16 %v2776, %v2775
  %v2788 = vpack.c.b16 %v2778, %v2777
  %v2789 = vpack.c.b16 %v2780, %v2779
  %v2790 = vpack.c.b16 %v2782, %v2781
  %2799 = vmatprep.subr.bf16.mxu0 0
  %2800 = vmatpush1.bf16.msra.mxu0 %v2783
  %2801 = vmatprep.subr.bf16.mxu0 0
  %2802 = vmatpush1.bf16.msra.mxu0 %v2784
  %2803 = vmatprep.subr.bf16.mxu0 0
  %2804 = vmatpush1.bf16.msra.mxu0 %v2785
  %2805 = vmatprep.subr.bf16.mxu0 0
  %2806 = vmatpush1.bf16.msra.mxu0 %v2786
  %2807 = vmatprep.subr.bf16.mxu0 0
  %2808 = vmatpush1.bf16.msra.mxu0 %v2787
  %2809 = vmatprep.subr.bf16.mxu0 0
  %2810 = vmatpush1.bf16.msra.mxu0 %v2788
  %2811 = vmatprep.subr.bf16.mxu0 0
  %2812 = vmatpush1.bf16.msra.mxu0 %v2789
  %2813 = vmatprep.subr.bf16.mxu0 0
  %2814 = vmatpush1.bf16.msra.mxu0 %v2790
  %2815 = vmatprep.subr.bf16.mxu0 0
  %2816 = vmatpush1.bf16.msra.mxu0 0
  %2817 = vmatprep.subr.bf16.mxu0 0
  %2818 = vmatpush1.bf16.msra.mxu0 0
  %2819 = vmatprep.subr.bf16.mxu0 0
  %2820 = vmatpush1.bf16.msra.mxu0 0
  %2821 = vmatprep.subr.bf16.mxu0 0
  %2822 = vmatpush1.bf16.msra.mxu0 0
  %2823 = vmatprep.subr.bf16.mxu0 0
  %2824 = vmatpush1.bf16.msra.mxu0 0
  %2825 = vmatprep.subr.bf16.mxu0 0
  %2826 = vmatpush1.bf16.msra.mxu0 0
  %2827 = vmatprep.subr.bf16.mxu0 0
  %2828 = vmatpush1.bf16.msra.mxu0 0
  %2829 = vmatprep.subr.bf16.mxu0 0
  %2830 = vmatpush1.bf16.msra.mxu0 0
  %2831 = vmatprep.mubr.bf16.mxu0 0
  %2832 = vmatmul.mubr.bf16.gmra.mrb[0].mxu0 %v1084
  %v2833 = vpop.f32.mrb[0].mxu0
  %v2834 = vadd.f32 0.0, %v2833
  %v2835 = vpop.f32.mrb[0].mxu0
  %v2836 = vpop.f32.mrb[0].mxu0
  %v2837 = vadd.f32 0.0, %v2836
  %v2838 = vpop.f32.mrb[0].mxu0
  %2839 = vmatprep.mubr.bf16.mxu0 0
  %2840 = vmatmul.mubr.bf16.gmra.mrb[0].mxu0 %v1085
  %v2841 = vpop.f32.mrb[0].mxu0
  %v2842 = vadd.f32 0.0, %v2841
  %v2843 = vpop.f32.mrb[0].mxu0
  %v2844 = vpop.f32.mrb[0].mxu0
  %v2845 = vadd.f32 0.0, %v2844
  %v2846 = vpop.f32.mrb[0].mxu0
  %2847 = vmatprep.mubr.bf16.mxu0 0
  %2848 = vmatmul.mubr.bf16.gmra.mrb[0].mxu0 %v1086
  %v2849 = vpop.f32.mrb[0].mxu0
  %v2850 = vadd.f32 0.0, %v2849
  %v2851 = vpop.f32.mrb[0].mxu0
  %v2852 = vpop.f32.mrb[0].mxu0
  %v2853 = vadd.f32 0.0, %v2852
  %v2854 = vpop.f32.mrb[0].mxu0
  %2855 = vmatprep.mubr.bf16.mxu0 0
  %2856 = vmatmul.mubr.bf16.gmra.mrb[0].mxu0 %v1087
  %v2857 = vpop.f32.mrb[0].mxu0
  %v2858 = vadd.f32 0.0, %v2857
  %v2859 = vpop.f32.mrb[0].mxu0
  %v2860 = vpop.f32.mrb[0].mxu0
  %v2861 = vadd.f32 0.0, %v2860
  %v2862 = vpop.f32.mrb[0].mxu0
  %2863 = vmatprep.mubr.bf16.mxu0 0
  %2864 = vmatmul.mubr.bf16.gmra.mrb[0].mxu0 %v1088
  %v2865 = vpop.f32.mrb[0].mxu0
  %v2866 = vadd.f32 0.0, %v2865
  %v2867 = vpop.f32.mrb[0].mxu0
  %v2868 = vpop.f32.mrb[0].mxu0
  %v2869 = vadd.f32 0.0, %v2868
  %v2870 = vpop.f32.mrb[0].mxu0
  %2871 = vmatprep.mubr.bf16.mxu0 0
  %2872 = vmatmul.mubr.bf16.gmra.mrb[0].mxu0 %v1089
  %v2873 = vpop.f32.mrb[0].mxu0
  %v2874 = vadd.f32 0.0, %v2873
  %v2875 = vpop.f32.mrb[0].mxu0
  %v2876 = vpop.f32.mrb[0].mxu0
  %v2877 = vadd.f32 0.0, %v2876
  %v2878 = vpop.f32.mrb[0].mxu0
  %2879 = vmatprep.mubr.bf16.mxu0 0
  %2880 = vmatmul.mubr.bf16.gmra.mrb[0].mxu0 %v2745
  %v2881 = vpop.f32.mrb[0].mxu0
  %v2882 = vadd.f32 0.0, %v2881
  %v2883 = vpop.f32.mrb[0].mxu0
  %v2884 = vpop.f32.mrb[0].mxu0
  %v2885 = vadd.f32 0.0, %v2884
  %v2886 = vpop.f32.mrb[0].mxu0
  %2887 = vmatprep.mubr.bf16.mxu0 0
  %2888 = vmatmul.mubr.bf16.gmra.mrb[0].mxu0 %v2746
  %v2889 = vpop.f32.mrb[0].mxu0
  %v2890 = vadd.f32 0.0, %v2889
  %v2891 = vpop.f32.mrb[0].mxu0
  %v2892 = vpop.f32.mrb[0].mxu0
  %v2893 = vadd.f32 0.0, %v2892
  %v2894 = vpop.f32.mrb[0].mxu0
  %2895 = vmatprep.mubr.bf16.mxu0 0
  %2896 = vmatmul.mubr.bf16.gmra.mrb[0].mxu0 %v2747
  %v2897 = vpop.f32.mrb[0].mxu0
  %v2898 = vadd.f32 0.0, %v2897
  %v2899 = vpop.f32.mrb[0].mxu0
  %v2900 = vpop.f32.mrb[0].mxu0
  %v2901 = vadd.f32 0.0, %v2900
  %v2902 = vpop.f32.mrb[0].mxu0
  %2903 = vdwg.mxu0
  %v2904 = vadd.f32 %v2699, %v2834
  %v2905 = vadd.f32 %v2700, %v2837
  %v2906 = vadd.f32 %v2701, %v2842
  %v2907 = vadd.f32 %v2702, %v2845
  %v2908 = vadd.f32 %v2703, %v2850
  %v2909 = vadd.f32 %v2704, %v2853
  %v2910 = vadd.f32 %v2705, %v2858
  %v2911 = vadd.f32 %v2706, %v2861
  %v2912 = vadd.f32 %v2707, %v2866
  %v2913 = vadd.f32 %v2708, %v2869
  %v2914 = vadd.f32 %v2709, %v2874
  %v2915 = vadd.f32 %v2710, %v2877
  %v2916 = vadd.f32 %v2711, %v2882
  %v2917 = vadd.f32 %v2712, %v2885
  %v2918 = vadd.f32 %v2713, %v2890
  %v2919 = vadd.f32 %v2714, %v2893
  %v2920 = vadd.f32 %v2715, %v2898
  %v2921 = vadd.f32 %v2716, %v2901
  %v2922 = vld [vmem:[%s1 + $0x340] sm:$0xf]
  %v2923 = vld [vmem:[%s1 + $0x344] sm:$0xf]
  %v2924 = vld [vmem:[%s1 + $0x348] sm:$0xf]
  %v2925 = vld [vmem:[%s1 + $0x34c] sm:$0xf]
  %v2926 = vld [vmem:[%s1 + $0x350] sm:$0xf]
  %v2927 = vld [vmem:[%s1 + $0x354] sm:$0xf]
  %v2928 = vld [vmem:[%s1 + $0x358] sm:$0xf]
  %v2929 = vld [vmem:[%s1 + $0x35c] sm:$0xf]
  %v2930 = vld [vmem:[%s1 + $0x360] sm:$0xf]
  %v2931 = vld [vmem:[%s1 + $0x364] sm:$0xf]
  %v2932 = vld [vmem:[%s1 + $0x368] sm:$0xf]
  %v2933 = vld [vmem:[%s1 + $0x36c] sm:$0xf]
  %v2934 = vld [vmem:[%s1 + $0x370] sm:$0xf]
  %v2935 = vld [vmem:[%s1 + $0x374] sm:$0xf]
  %v2936 = vld [vmem:[%s1 + $0x378] sm:$0xf]
  %v2937 = vld [vmem:[%s1 + $0x37c] sm:$0xf]
  %v2944 = vunpack.c.l.b16 %v159
  %v2945 = vunpack.c.l.b16 %v160
  %v2946 = vunpack.c.l.b16 %v163
  %v2947 = vunpack.c.l.b16 %v164
  %v2948 = vunpack.c.l.b16 %v167
  %v2949 = vunpack.c.l.b16 %v168
  %v2950 = vpack.c.b16 %v2945, %v2944
  %v2951 = vpack.c.b16 %v2947, %v2946
  %v2952 = vpack.c.b16 %v2949, %v2948
  %v2972 = vunpack.c.l.b16 %v2922
  %v2973 = vunpack.c.l.b16 %v2923
  %v2974 = vunpack.c.l.b16 %v2924
  %v2975 = vunpack.c.l.b16 %v2925
  %v2976 = vunpack.c.l.b16 %v2926
  %v2977 = vunpack.c.l.b16 %v2927
  %v2978 = vunpack.c.l.b16 %v2928
  %v2979 = vunpack.c.l.b16 %v2929
  %v2980 = vunpack.c.l.b16 %v2930
  %v2981 = vunpack.c.l.b16 %v2931
  %v2982 = vunpack.c.l.b16 %v2932
  %v2983 = vunpack.c.l.b16 %v2933
  %v2984 = vunpack.c.l.b16 %v2934
  %v2985 = vunpack.c.l.b16 %v2935
  %v2986 = vunpack.c.l.b16 %v2936
  %v2987 = vunpack.c.l.b16 %v2937
  %v2988 = vpack.c.b16 %v2973, %v2972
  %v2989 = vpack.c.b16 %v2975, %v2974
  %v2990 = vpack.c.b16 %v2977, %v2976
  %v2991 = vpack.c.b16 %v2979, %v2978
  %v2992 = vpack.c.b16 %v2981, %v2980
  %v2993 = vpack.c.b16 %v2983, %v2982
  %v2994 = vpack.c.b16 %v2985, %v2984
  %v2995 = vpack.c.b16 %v2987, %v2986
  %3004 = vmatprep.subr.bf16.mxu0 0
  %3005 = vmatpush1.bf16.msra.mxu0 %v2988
  %3006 = vmatprep.subr.bf16.mxu0 0
  %3007 = vmatpush1.bf16.msra.mxu0 %v2989
  %3008 = vmatprep.subr.bf16.mxu0 0
  %3009 = vmatpush1.bf16.msra.mxu0 %v2990
  %3010 = vmatprep.subr.bf16.mxu0 0
  %3011 = vmatpush1.bf16.msra.mxu0 %v2991
  %3012 = vmatprep.subr.bf16.mxu0 0
  %3013 = vmatpush1.bf16.msra.mxu0 %v2992
  %3014 = vmatprep.subr.bf16.mxu0 0
  %3015 = vmatpush1.bf16.msra.mxu0 %v2993
  %3016 = vmatprep.subr.bf16.mxu0 0
  %3017 = vmatpush1.bf16.msra.mxu0 %v2994
  %3018 = vmatprep.subr.bf16.mxu0 0
  %3019 = vmatpush1.bf16.msra.mxu0 %v2995
  %3020 = vmatprep.subr.bf16.mxu0 0
  %3021 = vmatpush1.bf16.msra.mxu0 0
  %3022 = vmatprep.subr.bf16.mxu0 0
  %3023 = vmatpush1.bf16.msra.mxu0 0
  %3024 = vmatprep.subr.bf16.mxu0 0
  %3025 = vmatpush1.bf16.msra.mxu0 0
  %3026 = vmatprep.subr.bf16.mxu0 0
  %3027 = vmatpush1.bf16.msra.mxu0 0
  %3028 = vmatprep.subr.bf16.mxu0 0
  %3029 = vmatpush1.bf16.msra.mxu0 0
  %3030 = vmatprep.subr.bf16.mxu0 0
  %3031 = vmatpush1.bf16.msra.mxu0 0
  %3032 = vmatprep.subr.bf16.mxu0 0
  %3033 = vmatpush1.bf16.msra.mxu0 0
  %3034 = vmatprep.subr.bf16.mxu0 0
  %3035 = vmatpush1.bf16.msra.mxu0 0
  %3036 = vmatprep.mubr.bf16.mxu0 0
  %3037 = vmatmul.mubr.bf16.gmra.mrb[0].mxu0 %v1325
  %v3038 = vpop.f32.mrb[0].mxu0
  %v3039 = vadd.f32 0.0, %v3038
  %v3040 = vpop.f32.mrb[0].mxu0
  %v3041 = vpop.f32.mrb[0].mxu0
  %v3042 = vadd.f32 0.0, %v3041
  %v3043 = vpop.f32.mrb[0].mxu0
  %3044 = vmatprep.mubr.bf16.mxu0 0
  %3045 = vmatmul.mubr.bf16.gmra.mrb[0].mxu0 %v1326
  %v3046 = vpop.f32.mrb[0].mxu0
  %v3047 = vadd.f32 0.0, %v3046
  %v3048 = vpop.f32.mrb[0].mxu0
  %v3049 = vpop.f32.mrb[0].mxu0
  %v3050 = vadd.f32 0.0, %v3049
  %v3051 = vpop.f32.mrb[0].mxu0
  %3052 = vmatprep.mubr.bf16.mxu0 0
  %3053 = vmatmul.mubr.bf16.gmra.mrb[0].mxu0 %v1327
  %v3054 = vpop.f32.mrb[0].mxu0
  %v3055 = vadd.f32 0.0, %v3054
  %v3056 = vpop.f32.mrb[0].mxu0
  %v3057 = vpop.f32.mrb[0].mxu0
  %v3058 = vadd.f32 0.0, %v3057
  %v3059 = vpop.f32.mrb[0].mxu0
  %3060 = vmatprep.mubr.bf16.mxu0 0
  %3061 = vmatmul.mubr.bf16.gmra.mrb[0].mxu0 %v1328
  %v3062 = vpop.f32.mrb[0].mxu0
  %v3063 = vadd.f32 0.0, %v3062
  %v3064 = vpop.f32.mrb[0].mxu0
  %v3065 = vpop.f32.mrb[0].mxu0
  %v3066 = vadd.f32 0.0, %v3065
  %v3067 = vpop.f32.mrb[0].mxu0
  %3068 = vmatprep.mubr.bf16.mxu0 0
  %3069 = vmatmul.mubr.bf16.gmra.mrb[0].mxu0 %v1329
  %v3070 = vpop.f32.mrb[0].mxu0
  %v3071 = vadd.f32 0.0, %v3070
  %v3072 = vpop.f32.mrb[0].mxu0
  %v3073 = vpop.f32.mrb[0].mxu0
  %v3074 = vadd.f32 0.0, %v3073
  %v3075 = vpop.f32.mrb[0].mxu0
  %3076 = vmatprep.mubr.bf16.mxu0 0
  %3077 = vmatmul.mubr.bf16.gmra.mrb[0].mxu0 %v1330
  %v3078 = vpop.f32.mrb[0].mxu0
  %v3079 = vadd.f32 0.0, %v3078
  %v3080 = vpop.f32.mrb[0].mxu0
  %v3081 = vpop.f32.mrb[0].mxu0
  %v3082 = vadd.f32 0.0, %v3081
  %v3083 = vpop.f32.mrb[0].mxu0
  %3084 = vmatprep.mubr.bf16.mxu0 0
  %3085 = vmatmul.mubr.bf16.gmra.mrb[0].mxu0 %v2950
  %v3086 = vpop.f32.mrb[0].mxu0
  %v3087 = vadd.f32 0.0, %v3086
  %v3088 = vpop.f32.mrb[0].mxu0
  %v3089 = vpop.f32.mrb[0].mxu0
  %v3090 = vadd.f32 0.0, %v3089
  %v3091 = vpop.f32.mrb[0].mxu0
  %3092 = vmatprep.mubr.bf16.mxu0 0
  %3093 = vmatmul.mubr.bf16.gmra.mrb[0].mxu0 %v2951
  %v3094 = vpop.f32.mrb[0].mxu0
  %v3095 = vadd.f32 0.0, %v3094
  %v3096 = vpop.f32.mrb[0].mxu0
  %v3097 = vpop.f32.mrb[0].mxu0
  %v3098 = vadd.f32 0.0, %v3097
  %v3099 = vpop.f32.mrb[0].mxu0
  %3100 = vmatprep.mubr.bf16.mxu0 0
  %3101 = vmatmul.mubr.bf16.gmra.mrb[0].mxu0 %v2952
  %v3102 = vpop.f32.mrb[0].mxu0
  %v3103 = vadd.f32 0.0, %v3102
  %v3104 = vpop.f32.mrb[0].mxu0
  %v3105 = vpop.f32.mrb[0].mxu0
  %v3106 = vadd.f32 0.0, %v3105
  %v3107 = vpop.f32.mrb[0].mxu0
  %3108 = vdwg.mxu0
  %v3109 = vadd.f32 %v2904, %v3039
  %v3110 = vadd.f32 %v2905, %v3042
  %v3111 = vadd.f32 %v2906, %v3047
  %v3112 = vadd.f32 %v2907, %v3050
  %v3113 = vadd.f32 %v2908, %v3055
  %v3114 = vadd.f32 %v2909, %v3058
  %v3115 = vadd.f32 %v2910, %v3063
  %v3116 = vadd.f32 %v2911, %v3066
  %v3117 = vadd.f32 %v2912, %v3071
  %v3118 = vadd.f32 %v2913, %v3074
  %v3119 = vadd.f32 %v2914, %v3079
  %v3120 = vadd.f32 %v2915, %v3082
  %v3121 = vadd.f32 %v2916, %v3087
  %v3122 = vadd.f32 %v2917, %v3090
  %v3123 = vadd.f32 %v2918, %v3095
  %v3124 = vadd.f32 %v2919, %v3098
  %v3125 = vadd.f32 %v2920, %v3103
  %v3126 = vadd.f32 %v2921, %v3106
  %v3127 = vld [vmem:[%s1 + $0x380] sm:$0xf]
  %v3128 = vld [vmem:[%s1 + $0x384] sm:$0xf]
  %v3129 = vld [vmem:[%s1 + $0x388] sm:$0xf]
  %v3130 = vld [vmem:[%s1 + $0x38c] sm:$0xf]
  %v3131 = vld [vmem:[%s1 + $0x390] sm:$0xf]
  %v3132 = vld [vmem:[%s1 + $0x394] sm:$0xf]
  %v3133 = vld [vmem:[%s1 + $0x398] sm:$0xf]
  %v3134 = vld [vmem:[%s1 + $0x39c] sm:$0xf]
  %v3135 = vld [vmem:[%s1 + $0x3a0] sm:$0xf]
  %v3136 = vld [vmem:[%s1 + $0x3a4] sm:$0xf]
  %v3137 = vld [vmem:[%s1 + $0x3a8] sm:$0xf]
  %v3138 = vld [vmem:[%s1 + $0x3ac] sm:$0xf]
  %v3139 = vld [vmem:[%s1 + $0x3b0] sm:$0xf]
  %v3140 = vld [vmem:[%s1 + $0x3b4] sm:$0xf]
  %v3141 = vld [vmem:[%s1 + $0x3b8] sm:$0xf]
  %v3142 = vld [vmem:[%s1 + $0x3bc] sm:$0xf]
  %v3145 = vunpack.c.l.b16 %v169
  %v3146 = vunpack.c.l.b16 %v170
  %v3147 = vpack.c.b16 %v3146, %v3145
  %v3165 = vunpack.c.l.b16 %v3127
  %v3166 = vunpack.c.l.b16 %v3128
  %v3167 = vunpack.c.l.b16 %v3129
  %v3168 = vunpack.c.l.b16 %v3130
  %v3169 = vunpack.c.l.b16 %v3131
  %v3170 = vunpack.c.l.b16 %v3132
  %v3171 = vunpack.c.l.b16 %v3133
  %v3172 = vunpack.c.l.b16 %v3134
  %v3173 = vunpack.c.l.b16 %v3135
  %v3174 = vunpack.c.l.b16 %v3136
  %v3175 = vunpack.c.l.b16 %v3137
  %v3176 = vunpack.c.l.b16 %v3138
  %v3177 = vunpack.c.l.b16 %v3139
  %v3178 = vunpack.c.l.b16 %v3140
  %v3179 = vunpack.c.l.b16 %v3141
  %v3180 = vunpack.c.l.b16 %v3142
  %v3181 = vpack.c.b16 %v3166, %v3165
  %v3182 = vpack.c.b16 %v3168, %v3167
  %v3183 = vpack.c.b16 %v3170, %v3169
  %v3184 = vpack.c.b16 %v3172, %v3171
  %v3185 = vpack.c.b16 %v3174, %v3173
  %v3186 = vpack.c.b16 %v3176, %v3175
  %v3187 = vpack.c.b16 %v3178, %v3177
  %v3188 = vpack.c.b16 %v3180, %v3179
  %3197 = vmatprep.subr.bf16.mxu0 0
  %3198 = vmatpush1.bf16.msra.mxu0 %v3181
  %3199 = vmatprep.subr.bf16.mxu0 0
  %3200 = vmatpush1.bf16.msra.mxu0 %v3182
  %3201 = vmatprep.subr.bf16.mxu0 0
  %3202 = vmatpush1.bf16.msra.mxu0 %v3183
  %3203 = vmatprep.subr.bf16.mxu0 0
  %3204 = vmatpush1.bf16.msra.mxu0 %v3184
  %3205 = vmatprep.subr.bf16.mxu0 0
  %3206 = vmatpush1.bf16.msra.mxu0 %v3185
  %3207 = vmatprep.subr.bf16.mxu0 0
  %3208 = vmatpush1.bf16.msra.mxu0 %v3186
  %3209 = vmatprep.subr.bf16.mxu0 0
  %3210 = vmatpush1.bf16.msra.mxu0 %v3187
  %3211 = vmatprep.subr.bf16.mxu0 0
  %3212 = vmatpush1.bf16.msra.mxu0 %v3188
  %3213 = vmatprep.subr.bf16.mxu0 0
  %3214 = vmatpush1.bf16.msra.mxu0 0
  %3215 = vmatprep.subr.bf16.mxu0 0
  %3216 = vmatpush1.bf16.msra.mxu0 0
  %3217 = vmatprep.subr.bf16.mxu0 0
  %3218 = vmatpush1.bf16.msra.mxu0 0
  %3219 = vmatprep.subr.bf16.mxu0 0
  %3220 = vmatpush1.bf16.msra.mxu0 0
  %3221 = vmatprep.subr.bf16.mxu0 0
  %3222 = vmatpush1.bf16.msra.mxu0 0
  %3223 = vmatprep.subr.bf16.mxu0 0
  %3224 = vmatpush1.bf16.msra.mxu0 0
  %3225 = vmatprep.subr.bf16.mxu0 0
  %3226 = vmatpush1.bf16.msra.mxu0 0
  %3227 = vmatprep.subr.bf16.mxu0 0
  %3228 = vmatpush1.bf16.msra.mxu0 0
  %3229 = vmatprep.mubr.bf16.mxu0 0
  %3230 = vmatmul.mubr.bf16.gmra.mrb[0].mxu0 %v1085
  %v3231 = vpop.f32.mrb[0].mxu0
  %v3232 = vadd.f32 0.0, %v3231
  %v3233 = vpop.f32.mrb[0].mxu0
  %v3234 = vpop.f32.mrb[0].mxu0
  %v3235 = vadd.f32 0.0, %v3234
  %v3236 = vpop.f32.mrb[0].mxu0
  %3237 = vmatprep.mubr.bf16.mxu0 0
  %3238 = vmatmul.mubr.bf16.gmra.mrb[0].mxu0 %v1086
  %v3239 = vpop.f32.mrb[0].mxu0
  %v3240 = vadd.f32 0.0, %v3239
  %v3241 = vpop.f32.mrb[0].mxu0
  %v3242 = vpop.f32.mrb[0].mxu0
  %v3243 = vadd.f32 0.0, %v3242
  %v3244 = vpop.f32.mrb[0].mxu0
  %3245 = vmatprep.mubr.bf16.mxu0 0
  %3246 = vmatmul.mubr.bf16.gmra.mrb[0].mxu0 %v1540
  %v3247 = vpop.f32.mrb[0].mxu0
  %v3248 = vadd.f32 0.0, %v3247
  %v3249 = vpop.f32.mrb[0].mxu0
  %v3250 = vpop.f32.mrb[0].mxu0
  %v3251 = vadd.f32 0.0, %v3250
  %v3252 = vpop.f32.mrb[0].mxu0
  %3253 = vmatprep.mubr.bf16.mxu0 0
  %3254 = vmatmul.mubr.bf16.gmra.mrb[0].mxu0 %v1088
  %v3255 = vpop.f32.mrb[0].mxu0
  %v3256 = vadd.f32 0.0, %v3255
  %v3257 = vpop.f32.mrb[0].mxu0
  %v3258 = vpop.f32.mrb[0].mxu0
  %v3259 = vadd.f32 0.0, %v3258
  %v3260 = vpop.f32.mrb[0].mxu0
  %3261 = vmatprep.mubr.bf16.mxu0 0
  %3262 = vmatmul.mubr.bf16.gmra.mrb[0].mxu0 %v1089
  %v3263 = vpop.f32.mrb[0].mxu0
  %v3264 = vadd.f32 0.0, %v3263
  %v3265 = vpop.f32.mrb[0].mxu0
  %v3266 = vpop.f32.mrb[0].mxu0
  %v3267 = vadd.f32 0.0, %v3266
  %v3268 = vpop.f32.mrb[0].mxu0
  %3269 = vmatprep.mubr.bf16.mxu0 0
  %3270 = vmatmul.mubr.bf16.gmra.mrb[0].mxu0 %v1541
  %v3271 = vpop.f32.mrb[0].mxu0
  %v3272 = vadd.f32 0.0, %v3271
  %v3273 = vpop.f32.mrb[0].mxu0
  %v3274 = vpop.f32.mrb[0].mxu0
  %v3275 = vadd.f32 0.0, %v3274
  %v3276 = vpop.f32.mrb[0].mxu0
  %3277 = vmatprep.mubr.bf16.mxu0 0
  %3278 = vmatmul.mubr.bf16.gmra.mrb[0].mxu0 %v2746
  %v3279 = vpop.f32.mrb[0].mxu0
  %v3280 = vadd.f32 0.0, %v3279
  %v3281 = vpop.f32.mrb[0].mxu0
  %v3282 = vpop.f32.mrb[0].mxu0
  %v3283 = vadd.f32 0.0, %v3282
  %v3284 = vpop.f32.mrb[0].mxu0
  %3285 = vmatprep.mubr.bf16.mxu0 0
  %3286 = vmatmul.mubr.bf16.gmra.mrb[0].mxu0 %v2747
  %v3287 = vpop.f32.mrb[0].mxu0
  %v3288 = vadd.f32 0.0, %v3287
  %v3289 = vpop.f32.mrb[0].mxu0
  %v3290 = vpop.f32.mrb[0].mxu0
  %v3291 = vadd.f32 0.0, %v3290
  %v3292 = vpop.f32.mrb[0].mxu0
  %3293 = vmatprep.mubr.bf16.mxu0 0
  %3294 = vmatmul.mubr.bf16.gmra.mrb[0].mxu0 %v3147
  %v3295 = vpop.f32.mrb[0].mxu0
  %v3296 = vadd.f32 0.0, %v3295
  %v3297 = vpop.f32.mrb[0].mxu0
  %v3298 = vpop.f32.mrb[0].mxu0
  %v3299 = vadd.f32 0.0, %v3298
  %v3300 = vpop.f32.mrb[0].mxu0
  %3301 = vdwg.mxu0
  %v3302 = vadd.f32 %v3109, %v3232
  %v3303 = vadd.f32 %v3110, %v3235
  %v3304 = vadd.f32 %v3111, %v3240
  %v3305 = vadd.f32 %v3112, %v3243
  %v3306 = vadd.f32 %v3113, %v3248
  %v3307 = vadd.f32 %v3114, %v3251
  %v3308 = vadd.f32 %v3115, %v3256
  %v3309 = vadd.f32 %v3116, %v3259
  %v3310 = vadd.f32 %v3117, %v3264
  %v3311 = vadd.f32 %v3118, %v3267
  %v3312 = vadd.f32 %v3119, %v3272
  %v3313 = vadd.f32 %v3120, %v3275
  %v3314 = vadd.f32 %v3121, %v3280
  %v3315 = vadd.f32 %v3122, %v3283
  %v3316 = vadd.f32 %v3123, %v3288
  %v3317 = vadd.f32 %v3124, %v3291
  %v3318 = vadd.f32 %v3125, %v3296
  %v3319 = vadd.f32 %v3126, %v3299
  %v3320 = vld [vmem:[%s1 + $0x3c0] sm:$0xf]
  %v3321 = vld [vmem:[%s1 + $0x3c4] sm:$0xf]
  %v3322 = vld [vmem:[%s1 + $0x3c8] sm:$0xf]
  %v3323 = vld [vmem:[%s1 + $0x3cc] sm:$0xf]
  %v3324 = vld [vmem:[%s1 + $0x3d0] sm:$0xf]
  %v3325 = vld [vmem:[%s1 + $0x3d4] sm:$0xf]
  %v3326 = vld [vmem:[%s1 + $0x3d8] sm:$0xf]
  %v3327 = vld [vmem:[%s1 + $0x3dc] sm:$0xf]
  %v3328 = vld [vmem:[%s1 + $0x3e0] sm:$0xf]
  %v3329 = vld [vmem:[%s1 + $0x3e4] sm:$0xf]
  %v3330 = vld [vmem:[%s1 + $0x3e8] sm:$0xf]
  %v3331 = vld [vmem:[%s1 + $0x3ec] sm:$0xf]
  %v3332 = vld [vmem:[%s1 + $0x3f0] sm:$0xf]
  %v3333 = vld [vmem:[%s1 + $0x3f4] sm:$0xf]
  %v3334 = vld [vmem:[%s1 + $0x3f8] sm:$0xf]
  %v3335 = vld [vmem:[%s1 + $0x3fc] sm:$0xf]
  %v3338 = vunpack.c.l.b16 %v171
  %v3339 = vunpack.c.l.b16 %v172
  %v3340 = vpack.c.b16 %v3339, %v3338
  %v3358 = vunpack.c.l.b16 %v3320
  %v3359 = vunpack.c.l.b16 %v3321
  %v3360 = vunpack.c.l.b16 %v3322
  %v3361 = vunpack.c.l.b16 %v3323
  %v3362 = vunpack.c.l.b16 %v3324
  %v3363 = vunpack.c.l.b16 %v3325
  %v3364 = vunpack.c.l.b16 %v3326
  %v3365 = vunpack.c.l.b16 %v3327
  %v3366 = vunpack.c.l.b16 %v3328
  %v3367 = vunpack.c.l.b16 %v3329
  %v3368 = vunpack.c.l.b16 %v3330
  %v3369 = vunpack.c.l.b16 %v3331
  %v3370 = vunpack.c.l.b16 %v3332
  %v3371 = vunpack.c.l.b16 %v3333
  %v3372 = vunpack.c.l.b16 %v3334
  %v3373 = vunpack.c.l.b16 %v3335
  %v3374 = vpack.c.b16 %v3359, %v3358
  %v3375 = vpack.c.b16 %v3361, %v3360
  %v3376 = vpack.c.b16 %v3363, %v3362
  %v3377 = vpack.c.b16 %v3365, %v3364
  %v3378 = vpack.c.b16 %v3367, %v3366
  %v3379 = vpack.c.b16 %v3369, %v3368
  %v3380 = vpack.c.b16 %v3371, %v3370
  %v3381 = vpack.c.b16 %v3373, %v3372
  %3390 = vmatprep.subr.bf16.mxu0 0
  %3391 = vmatpush1.bf16.msra.mxu0 %v3374
  %3392 = vmatprep.subr.bf16.mxu0 0
  %3393 = vmatpush1.bf16.msra.mxu0 %v3375
  %3394 = vmatprep.subr.bf16.mxu0 0
  %3395 = vmatpush1.bf16.msra.mxu0 %v3376
  %3396 = vmatprep.subr.bf16.mxu0 0
  %3397 = vmatpush1.bf16.msra.mxu0 %v3377
  %3398 = vmatprep.subr.bf16.mxu0 0
  %3399 = vmatpush1.bf16.msra.mxu0 %v3378
  %3400 = vmatprep.subr.bf16.mxu0 0
  %3401 = vmatpush1.bf16.msra.mxu0 %v3379
  %3402 = vmatprep.subr.bf16.mxu0 0
  %3403 = vmatpush1.bf16.msra.mxu0 %v3380
  %3404 = vmatprep.subr.bf16.mxu0 0
  %3405 = vmatpush1.bf16.msra.mxu0 %v3381
  %3406 = vmatprep.subr.bf16.mxu0 0
  %3407 = vmatpush1.bf16.msra.mxu0 0
  %3408 = vmatprep.subr.bf16.mxu0 0
  %3409 = vmatpush1.bf16.msra.mxu0 0
  %3410 = vmatprep.subr.bf16.mxu0 0
  %3411 = vmatpush1.bf16.msra.mxu0 0
  %3412 = vmatprep.subr.bf16.mxu0 0
  %3413 = vmatpush1.bf16.msra.mxu0 0
  %3414 = vmatprep.subr.bf16.mxu0 0
  %3415 = vmatpush1.bf16.msra.mxu0 0
  %3416 = vmatprep.subr.bf16.mxu0 0
  %3417 = vmatpush1.bf16.msra.mxu0 0
  %3418 = vmatprep.subr.bf16.mxu0 0
  %3419 = vmatpush1.bf16.msra.mxu0 0
  %3420 = vmatprep.subr.bf16.mxu0 0
  %3421 = vmatpush1.bf16.msra.mxu0 0
  %3422 = vmatprep.mubr.bf16.mxu0 0
  %3423 = vmatmul.mubr.bf16.gmra.mrb[0].mxu0 %v1326
  %v3424 = vpop.f32.mrb[0].mxu0
  %v3425 = vadd.f32 0.0, %v3424
  %v3426 = vpop.f32.mrb[0].mxu0
  %v3427 = vpop.f32.mrb[0].mxu0
  %v3428 = vadd.f32 0.0, %v3427
  %v3429 = vpop.f32.mrb[0].mxu0
  %3430 = vmatprep.mubr.bf16.mxu0 0
  %3431 = vmatmul.mubr.bf16.gmra.mrb[0].mxu0 %v1327
  %v3432 = vpop.f32.mrb[0].mxu0
  %v3433 = vadd.f32 0.0, %v3432
  %v3434 = vpop.f32.mrb[0].mxu0
  %v3435 = vpop.f32.mrb[0].mxu0
  %v3436 = vadd.f32 0.0, %v3435
  %v3437 = vpop.f32.mrb[0].mxu0
  %3438 = vmatprep.mubr.bf16.mxu0 0
  %3439 = vmatmul.mubr.bf16.gmra.mrb[0].mxu0 %v1745
  %v3440 = vpop.f32.mrb[0].mxu0
  %v3441 = vadd.f32 0.0, %v3440
  %v3442 = vpop.f32.mrb[0].mxu0
  %v3443 = vpop.f32.mrb[0].mxu0
  %v3444 = vadd.f32 0.0, %v3443
  %v3445 = vpop.f32.mrb[0].mxu0
  %3446 = vmatprep.mubr.bf16.mxu0 0
  %3447 = vmatmul.mubr.bf16.gmra.mrb[0].mxu0 %v1329
  %v3448 = vpop.f32.mrb[0].mxu0
  %v3449 = vadd.f32 0.0, %v3448
  %v3450 = vpop.f32.mrb[0].mxu0
  %v3451 = vpop.f32.mrb[0].mxu0
  %v3452 = vadd.f32 0.0, %v3451
  %v3453 = vpop.f32.mrb[0].mxu0
  %3454 = vmatprep.mubr.bf16.mxu0 0
  %3455 = vmatmul.mubr.bf16.gmra.mrb[0].mxu0 %v1330
  %v3456 = vpop.f32.mrb[0].mxu0
  %v3457 = vadd.f32 0.0, %v3456
  %v3458 = vpop.f32.mrb[0].mxu0
  %v3459 = vpop.f32.mrb[0].mxu0
  %v3460 = vadd.f32 0.0, %v3459
  %v3461 = vpop.f32.mrb[0].mxu0
  %3462 = vmatprep.mubr.bf16.mxu0 0
  %3463 = vmatmul.mubr.bf16.gmra.mrb[0].mxu0 %v1746
  %v3464 = vpop.f32.mrb[0].mxu0
  %v3465 = vadd.f32 0.0, %v3464
  %v3466 = vpop.f32.mrb[0].mxu0
  %v3467 = vpop.f32.mrb[0].mxu0
  %v3468 = vadd.f32 0.0, %v3467
  %v3469 = vpop.f32.mrb[0].mxu0
  %3470 = vmatprep.mubr.bf16.mxu0 0
  %3471 = vmatmul.mubr.bf16.gmra.mrb[0].mxu0 %v2951
  %v3472 = vpop.f32.mrb[0].mxu0
  %v3473 = vadd.f32 0.0, %v3472
  %v3474 = vpop.f32.mrb[0].mxu0
  %v3475 = vpop.f32.mrb[0].mxu0
  %v3476 = vadd.f32 0.0, %v3475
  %v3477 = vpop.f32.mrb[0].mxu0
  %3478 = vmatprep.mubr.bf16.mxu0 0
  %3479 = vmatmul.mubr.bf16.gmra.mrb[0].mxu0 %v2952
  %v3480 = vpop.f32.mrb[0].mxu0
  %v3481 = vadd.f32 0.0, %v3480
  %v3482 = vpop.f32.mrb[0].mxu0
  %v3483 = vpop.f32.mrb[0].mxu0
  %v3484 = vadd.f32 0.0, %v3483
  %v3485 = vpop.f32.mrb[0].mxu0
  %3486 = vmatprep.mubr.bf16.mxu0 0
  %3487 = vmatmul.mubr.bf16.gmra.mrb[0].mxu0 %v3340
  %v3488 = vpop.f32.mrb[0].mxu0
  %v3489 = vadd.f32 0.0, %v3488
  %v3490 = vpop.f32.mrb[0].mxu0
  %v3491 = vpop.f32.mrb[0].mxu0
  %v3492 = vadd.f32 0.0, %v3491
  %v3493 = vpop.f32.mrb[0].mxu0
  %3494 = vdwg.mxu0
  %v3495 = vadd.f32 %v3302, %v3425
  %v3496 = vadd.f32 %v3303, %v3428
  %v3497 = vadd.f32 %v3304, %v3433
  %v3498 = vadd.f32 %v3305, %v3436
  %v3499 = vadd.f32 %v3306, %v3441
  %v3500 = vadd.f32 %v3307, %v3444
  %v3501 = vadd.f32 %v3308, %v3449
  %v3502 = vadd.f32 %v3309, %v3452
  %v3503 = vadd.f32 %v3310, %v3457
  %v3504 = vadd.f32 %v3311, %v3460
  %v3505 = vadd.f32 %v3312, %v3465
  %v3506 = vadd.f32 %v3313, %v3468
  %v3507 = vadd.f32 %v3314, %v3473
  %v3508 = vadd.f32 %v3315, %v3476
  %v3509 = vadd.f32 %v3316, %v3481
  %v3510 = vadd.f32 %v3317, %v3484
  %v3511 = vadd.f32 %v3318, %v3489
  %v3512 = vadd.f32 %v3319, %v3492
  %v3513 = vld [vmem:[%s2] sm:$0x1]
  %v3515 = vlaneseq
  %v3516 = vshrl.u32 %v3515, 7
  %v3517 = vsub.s32 0, %v3516
  %v3518 = vrot.slane %v3513, %v3517
  %v3520 = vadd.f32 %v3495, %v3518
  %v3521 = vadd.f32 %v3496, %v3518
  %v3522 = vadd.f32 %v3497, %v3518
  %v3523 = vadd.f32 %v3498, %v3518
  %v3524 = vadd.f32 %v3499, %v3518
  %v3525 = vadd.f32 %v3500, %v3518
  %v3526 = vadd.f32 %v3501, %v3518
  %v3527 = vadd.f32 %v3502, %v3518
  %v3528 = vadd.f32 %v3503, %v3518
  %v3529 = vadd.f32 %v3504, %v3518
  %v3530 = vadd.f32 %v3505, %v3518
  %v3531 = vadd.f32 %v3506, %v3518
  %v3532 = vadd.f32 %v3507, %v3518
  %v3533 = vadd.f32 %v3508, %v3518
  %v3534 = vadd.f32 %v3509, %v3518
  %v3535 = vadd.f32 %v3510, %v3518
  %v3536 = vadd.f32 %v3511, %v3518
  %v3537 = vadd.f32 %v3512, %v3518
  %v3538 = vmax.f32 %v3520, 0.0
  %v3539 = vmax.f32 %v3521, 0.0
  %v3540 = vmax.f32 %v3522, 0.0
  %v3541 = vmax.f32 %v3523, 0.0
  %v3542 = vmax.f32 %v3524, 0.0
  %v3543 = vmax.f32 %v3525, 0.0
  %v3544 = vmax.f32 %v3526, 0.0
  %v3545 = vmax.f32 %v3527, 0.0
  %v3546 = vmax.f32 %v3528, 0.0
  %v3547 = vmax.f32 %v3529, 0.0
  %v3548 = vmax.f32 %v3530, 0.0
  %v3549 = vmax.f32 %v3531, 0.0
  %v3550 = vmax.f32 %v3532, 0.0
  %v3551 = vmax.f32 %v3533, 0.0
  %v3552 = vmax.f32 %v3534, 0.0
  %v3553 = vmax.f32 %v3535, 0.0
  %v3554 = vmax.f32 %v3536, 0.0
  %v3555 = vmax.f32 %v3537, 0.0
  %v3556 = vpack.c.bf16 %v3539, %v3538
  %v3557 = vpack.c.bf16 %v3541, %v3540
  %v3558 = vpack.c.bf16 %v3543, %v3542
  %v3559 = vpack.c.bf16 %v3545, %v3544
  %v3560 = vpack.c.bf16 %v3547, %v3546
  %v3561 = vpack.c.bf16 %v3549, %v3548
  %v3562 = vpack.c.bf16 %v3551, %v3550
  %v3563 = vpack.c.bf16 %v3553, %v3552
  %v3564 = vpack.c.bf16 %v3555, %v3554
  %v3565 = vld [vmem:[%s3] sm:$0xf]
  %v3566 = vld [vmem:[%s3 + $0x4] sm:$0xf]
  %v3567 = vld [vmem:[%s3 + $0x8] sm:$0xf]
  %v3568 = vld [vmem:[%s3 + $0xc] sm:$0xf]
  %v3569 = vld [vmem:[%s3 + $0x10] sm:$0xf]
  %v3570 = vld [vmem:[%s3 + $0x14] sm:$0xf]
  %v3571 = vld [vmem:[%s3 + $0x18] sm:$0xf]
  %v3572 = vld [vmem:[%s3 + $0x1c] sm:$0xf]
  %v3573 = vld [vmem:[%s3 + $0x20] sm:$0xf]
  %v3574 = vld [vmem:[%s3 + $0x24] sm:$0xf]
  %v3575 = vld [vmem:[%s3 + $0x28] sm:$0xf]
  %v3576 = vld [vmem:[%s3 + $0x2c] sm:$0xf]
  %v3577 = vld [vmem:[%s3 + $0x30] sm:$0xf]
  %v3578 = vld [vmem:[%s3 + $0x34] sm:$0xf]
  %v3579 = vld [vmem:[%s3 + $0x38] sm:$0xf]
  %v3580 = vld [vmem:[%s3 + $0x3c] sm:$0xf]
  %v3581 = vld [vmem:[%s3 + $0x40] sm:$0xf]
  %v3582 = vld [vmem:[%s3 + $0x44] sm:$0xf]
  %v3583 = vld [vmem:[%s3 + $0x48] sm:$0xf]
  %v3584 = vld [vmem:[%s3 + $0x4c] sm:$0xf]
  %v3585 = vld [vmem:[%s3 + $0x50] sm:$0xf]
  %v3586 = vld [vmem:[%s3 + $0x54] sm:$0xf]
  %v3587 = vld [vmem:[%s3 + $0x58] sm:$0xf]
  %v3588 = vld [vmem:[%s3 + $0x5c] sm:$0xf]
  %v3589 = vld [vmem:[%s3 + $0x60] sm:$0xf]
  %v3590 = vld [vmem:[%s3 + $0x64] sm:$0xf]
  %v3591 = vld [vmem:[%s3 + $0x68] sm:$0xf]
  %v3592 = vld [vmem:[%s3 + $0x6c] sm:$0xf]
  %v3593 = vld [vmem:[%s3 + $0x70] sm:$0xf]
  %v3594 = vld [vmem:[%s3 + $0x74] sm:$0xf]
  %v3595 = vld [vmem:[%s3 + $0x78] sm:$0xf]
  %v3596 = vld [vmem:[%s3 + $0x7c] sm:$0xf]
  %v3613 = vunpack.c.l.b16 %v3581
  %v3614 = vunpack.c.l.b16 %v3582
  %v3615 = vunpack.c.l.b16 %v3583
  %v3616 = vunpack.c.l.b16 %v3584
  %v3617 = vunpack.c.l.b16 %v3585
  %v3618 = vunpack.c.l.b16 %v3586
  %v3619 = vunpack.c.l.b16 %v3587
  %v3620 = vunpack.c.l.b16 %v3588
  %v3621 = vunpack.c.l.b16 %v3589
  %v3622 = vunpack.c.l.b16 %v3590
  %v3623 = vunpack.c.l.b16 %v3591
  %v3624 = vunpack.c.l.b16 %v3592
  %v3625 = vunpack.c.l.b16 %v3593
  %v3626 = vunpack.c.l.b16 %v3594
  %v3627 = vunpack.c.l.b16 %v3595
  %v3628 = vunpack.c.l.b16 %v3596
  %v3629 = vpack.c.b16 %v3614, %v3613
  %v3630 = vpack.c.b16 %v3616, %v3615
  %v3631 = vpack.c.b16 %v3618, %v3617
  %v3632 = vpack.c.b16 %v3620, %v3619
  %v3633 = vpack.c.b16 %v3622, %v3621
  %v3634 = vpack.c.b16 %v3624, %v3623
  %v3635 = vpack.c.b16 %v3626, %v3625
  %v3636 = vpack.c.b16 %v3628, %v3627
  %3645 = vmatprep.subr.bf16.mxu0 0
  %3646 = vmatpush1.bf16.msra.mxu0 %v3629
  %3647 = vmatprep.subr.bf16.mxu0 0
  %3648 = vmatpush1.bf16.msra.mxu0 %v3630
  %3649 = vmatprep.subr.bf16.mxu0 0
  %3650 = vmatpush1.bf16.msra.mxu0 %v3631
  %3651 = vmatprep.subr.bf16.mxu0 0
  %3652 = vmatpush1.bf16.msra.mxu0 %v3632
  %3653 = vmatprep.subr.bf16.mxu0 0
  %3654 = vmatpush1.bf16.msra.mxu0 %v3633
  %3655 = vmatprep.subr.bf16.mxu0 0
  %3656 = vmatpush1.bf16.msra.mxu0 %v3634
  %3657 = vmatprep.subr.bf16.mxu0 0
  %3658 = vmatpush1.bf16.msra.mxu0 %v3635
  %3659 = vmatprep.subr.bf16.mxu0 0
  %3660 = vmatpush1.bf16.msra.mxu0 %v3636
  %3661 = vmatprep.subr.bf16.mxu0 0
  %3662 = vmatpush1.bf16.msra.mxu0 0
  %3663 = vmatprep.subr.bf16.mxu0 0
  %3664 = vmatpush1.bf16.msra.mxu0 0
  %3665 = vmatprep.subr.bf16.mxu0 0
  %3666 = vmatpush1.bf16.msra.mxu0 0
  %3667 = vmatprep.subr.bf16.mxu0 0
  %3668 = vmatpush1.bf16.msra.mxu0 0
  %3669 = vmatprep.subr.bf16.mxu0 0
  %3670 = vmatpush1.bf16.msra.mxu0 0
  %3671 = vmatprep.subr.bf16.mxu0 0
  %3672 = vmatpush1.bf16.msra.mxu0 0
  %3673 = vmatprep.subr.bf16.mxu0 0
  %3674 = vmatpush1.bf16.msra.mxu0 0
  %3675 = vmatprep.subr.bf16.mxu0 0
  %3676 = vmatpush1.bf16.msra.mxu0 0
  %3677 = vmatprep.mubr.bf16.mxu0 0
  %3678 = vmatmul.mubr.bf16.gmra.mrb[0].mxu0 %v3557
  %v3679 = vpop.f32.mrb[0].mxu0
  %v3680 = vadd.f32 0.0, %v3679
  %v3681 = vpop.f32.mrb[0].mxu0
  %v3682 = vpop.f32.mrb[0].mxu0
  %v3683 = vadd.f32 0.0, %v3682
  %v3684 = vpop.f32.mrb[0].mxu0
  %3685 = vdwg.mxu0
  %v3702 = vunpack.c.l.b16 %v3565
  %v3703 = vunpack.c.l.b16 %v3566
  %v3704 = vunpack.c.l.b16 %v3567
  %v3705 = vunpack.c.l.b16 %v3568
  %v3706 = vunpack.c.l.b16 %v3569
  %v3707 = vunpack.c.l.b16 %v3570
  %v3708 = vunpack.c.l.b16 %v3571
  %v3709 = vunpack.c.l.b16 %v3572
  %v3710 = vunpack.c.l.b16 %v3573
  %v3711 = vunpack.c.l.b16 %v3574
  %v3712 = vunpack.c.l.b16 %v3575
  %v3713 = vunpack.c.l.b16 %v3576
  %v3714 = vunpack.c.l.b16 %v3577
  %v3715 = vunpack.c.l.b16 %v3578
  %v3716 = vunpack.c.l.b16 %v3579
  %v3717 = vunpack.c.l.b16 %v3580
  %v3718 = vpack.c.b16 %v3703, %v3702
  %v3719 = vpack.c.b16 %v3705, %v3704
  %v3720 = vpack.c.b16 %v3707, %v3706
  %v3721 = vpack.c.b16 %v3709, %v3708
  %v3722 = vpack.c.b16 %v3711, %v3710
  %v3723 = vpack.c.b16 %v3713, %v3712
  %v3724 = vpack.c.b16 %v3715, %v3714
  %v3725 = vpack.c.b16 %v3717, %v3716
  %3734 = vmatprep.subr.bf16.mxu0 0
  %3735 = vmatpush1.bf16.msra.mxu0 %v3718
  %3736 = vmatprep.subr.bf16.mxu0 0
  %3737 = vmatpush1.bf16.msra.mxu0 %v3719
  %3738 = vmatprep.subr.bf16.mxu0 0
  %3739 = vmatpush1.bf16.msra.mxu0 %v3720
  %3740 = vmatprep.subr.bf16.mxu0 0
  %3741 = vmatpush1.bf16.msra.mxu0 %v3721
  %3742 = vmatprep.subr.bf16.mxu0 0
  %3743 = vmatpush1.bf16.msra.mxu0 %v3722
  %3744 = vmatprep.subr.bf16.mxu0 0
  %3745 = vmatpush1.bf16.msra.mxu0 %v3723
  %3746 = vmatprep.subr.bf16.mxu0 0
  %3747 = vmatpush1.bf16.msra.mxu0 %v3724
  %3748 = vmatprep.subr.bf16.mxu0 0
  %3749 = vmatpush1.bf16.msra.mxu0 %v3725
  %3750 = vmatprep.subr.bf16.mxu0 0
  %3751 = vmatpush1.bf16.msra.mxu0 0
  %3752 = vmatprep.subr.bf16.mxu0 0
  %3753 = vmatpush1.bf16.msra.mxu0 0
  %3754 = vmatprep.subr.bf16.mxu0 0
  %3755 = vmatpush1.bf16.msra.mxu0 0
  %3756 = vmatprep.subr.bf16.mxu0 0
  %3757 = vmatpush1.bf16.msra.mxu0 0
  %3758 = vmatprep.subr.bf16.mxu0 0
  %3759 = vmatpush1.bf16.msra.mxu0 0
  %3760 = vmatprep.subr.bf16.mxu0 0
  %3761 = vmatpush1.bf16.msra.mxu0 0
  %3762 = vmatprep.subr.bf16.mxu0 0
  %3763 = vmatpush1.bf16.msra.mxu0 0
  %3764 = vmatprep.subr.bf16.mxu0 0
  %3765 = vmatpush1.bf16.msra.mxu0 0
  %3766 = vmatprep.mubr.bf16.mxu0 0
  %3767 = vmatmul.mubr.bf16.gmra.mrb[0].mxu0 %v3556
  %v3768 = vpop.f32.mrb[0].mxu0
  %v3769 = vadd.f32 %v3680, %v3768
  %v3770 = vpop.f32.mrb[0].mxu0
  %v3771 = vpop.f32.mrb[0].mxu0
  %v3772 = vadd.f32 %v3683, %v3771
  %v3773 = vpop.f32.mrb[0].mxu0
  %3774 = vdwg.mxu0
  %v3775 = vld [vmem:[%s3 + $0x80] sm:$0xf]
  %v3776 = vld [vmem:[%s3 + $0x84] sm:$0xf]
  %v3777 = vld [vmem:[%s3 + $0x88] sm:$0xf]
  %v3778 = vld [vmem:[%s3 + $0x8c] sm:$0xf]
  %v3779 = vld [vmem:[%s3 + $0x90] sm:$0xf]
  %v3780 = vld [vmem:[%s3 + $0x94] sm:$0xf]
  %v3781 = vld [vmem:[%s3 + $0x98] sm:$0xf]
  %v3782 = vld [vmem:[%s3 + $0x9c] sm:$0xf]
  %v3783 = vld [vmem:[%s3 + $0xa0] sm:$0xf]
  %v3784 = vld [vmem:[%s3 + $0xa4] sm:$0xf]
  %v3785 = vld [vmem:[%s3 + $0xa8] sm:$0xf]
  %v3786 = vld [vmem:[%s3 + $0xac] sm:$0xf]
  %v3787 = vld [vmem:[%s3 + $0xb0] sm:$0xf]
  %v3788 = vld [vmem:[%s3 + $0xb4] sm:$0xf]
  %v3789 = vld [vmem:[%s3 + $0xb8] sm:$0xf]
  %v3790 = vld [vmem:[%s3 + $0xbc] sm:$0xf]
  %v3807 = vunpack.c.l.b16 %v3775
  %v3808 = vunpack.c.l.b16 %v3776
  %v3809 = vunpack.c.l.b16 %v3777
  %v3810 = vunpack.c.l.b16 %v3778
  %v3811 = vunpack.c.l.b16 %v3779
  %v3812 = vunpack.c.l.b16 %v3780
  %v3813 = vunpack.c.l.b16 %v3781
  %v3814 = vunpack.c.l.b16 %v3782
  %v3815 = vunpack.c.l.b16 %v3783
  %v3816 = vunpack.c.l.b16 %v3784
  %v3817 = vunpack.c.l.b16 %v3785
  %v3818 = vunpack.c.l.b16 %v3786
  %v3819 = vunpack.c.l.b16 %v3787
  %v3820 = vunpack.c.l.b16 %v3788
  %v3821 = vunpack.c.l.b16 %v3789
  %v3822 = vunpack.c.l.b16 %v3790
  %v3823 = vpack.c.b16 %v3808, %v3807
  %v3824 = vpack.c.b16 %v3810, %v3809
  %v3825 = vpack.c.b16 %v3812, %v3811
  %v3826 = vpack.c.b16 %v3814, %v3813
  %v3827 = vpack.c.b16 %v3816, %v3815
  %v3828 = vpack.c.b16 %v3818, %v3817
  %v3829 = vpack.c.b16 %v3820, %v3819
  %v3830 = vpack.c.b16 %v3822, %v3821
  %3839 = vmatprep.subr.bf16.mxu0 0
  %3840 = vmatpush1.bf16.msra.mxu0 %v3823
  %3841 = vmatprep.subr.bf16.mxu0 0
  %3842 = vmatpush1.bf16.msra.mxu0 %v3824
  %3843 = vmatprep.subr.bf16.mxu0 0
  %3844 = vmatpush1.bf16.msra.mxu0 %v3825
  %3845 = vmatprep.subr.bf16.mxu0 0
  %3846 = vmatpush1.bf16.msra.mxu0 %v3826
  %3847 = vmatprep.subr.bf16.mxu0 0
  %3848 = vmatpush1.bf16.msra.mxu0 %v3827
  %3849 = vmatprep.subr.bf16.mxu0 0
  %3850 = vmatpush1.bf16.msra.mxu0 %v3828
  %3851 = vmatprep.subr.bf16.mxu0 0
  %3852 = vmatpush1.bf16.msra.mxu0 %v3829
  %3853 = vmatprep.subr.bf16.mxu0 0
  %3854 = vmatpush1.bf16.msra.mxu0 %v3830
  %3855 = vmatprep.subr.bf16.mxu0 0
  %3856 = vmatpush1.bf16.msra.mxu0 0
  %3857 = vmatprep.subr.bf16.mxu0 0
  %3858 = vmatpush1.bf16.msra.mxu0 0
  %3859 = vmatprep.subr.bf16.mxu0 0
  %3860 = vmatpush1.bf16.msra.mxu0 0
  %3861 = vmatprep.subr.bf16.mxu0 0
  %3862 = vmatpush1.bf16.msra.mxu0 0
  %3863 = vmatprep.subr.bf16.mxu0 0
  %3864 = vmatpush1.bf16.msra.mxu0 0
  %3865 = vmatprep.subr.bf16.mxu0 0
  %3866 = vmatpush1.bf16.msra.mxu0 0
  %3867 = vmatprep.subr.bf16.mxu0 0
  %3868 = vmatpush1.bf16.msra.mxu0 0
  %3869 = vmatprep.subr.bf16.mxu0 0
  %3870 = vmatpush1.bf16.msra.mxu0 0
  %3871 = vmatprep.mubr.bf16.mxu0 0
  %3872 = vmatmul.mubr.bf16.gmra.mrb[0].mxu0 %v3558
  %v3873 = vpop.f32.mrb[0].mxu0
  %v3874 = vadd.f32 0.0, %v3873
  %v3875 = vpop.f32.mrb[0].mxu0
  %v3876 = vpop.f32.mrb[0].mxu0
  %v3877 = vadd.f32 0.0, %v3876
  %v3878 = vpop.f32.mrb[0].mxu0
  %3879 = vdwg.mxu0
  %v3880 = vadd.f32 %v3769, %v3874
  %v3881 = vadd.f32 %v3772, %v3877
  %v3882 = vld [vmem:[%s3 + $0xc0] sm:$0xf]
  %v3883 = vld [vmem:[%s3 + $0xc4] sm:$0xf]
  %v3884 = vld [vmem:[%s3 + $0xc8] sm:$0xf]
  %v3885 = vld [vmem:[%s3 + $0xcc] sm:$0xf]
  %v3886 = vld [vmem:[%s3 + $0xd0] sm:$0xf]
  %v3887 = vld [vmem:[%s3 + $0xd4] sm:$0xf]
  %v3888 = vld [vmem:[%s3 + $0xd8] sm:$0xf]
  %v3889 = vld [vmem:[%s3 + $0xdc] sm:$0xf]
  %v3890 = vld [vmem:[%s3 + $0xe0] sm:$0xf]
  %v3891 = vld [vmem:[%s3 + $0xe4] sm:$0xf]
  %v3892 = vld [vmem:[%s3 + $0xe8] sm:$0xf]
  %v3893 = vld [vmem:[%s3 + $0xec] sm:$0xf]
  %v3894 = vld [vmem:[%s3 + $0xf0] sm:$0xf]
  %v3895 = vld [vmem:[%s3 + $0xf4] sm:$0xf]
  %v3896 = vld [vmem:[%s3 + $0xf8] sm:$0xf]
  %v3897 = vld [vmem:[%s3 + $0xfc] sm:$0xf]
  %v3914 = vunpack.c.l.b16 %v3882
  %v3915 = vunpack.c.l.b16 %v3883
  %v3916 = vunpack.c.l.b16 %v3884
  %v3917 = vunpack.c.l.b16 %v3885
  %v3918 = vunpack.c.l.b16 %v3886
  %v3919 = vunpack.c.l.b16 %v3887
  %v3920 = vunpack.c.l.b16 %v3888
  %v3921 = vunpack.c.l.b16 %v3889
  %v3922 = vunpack.c.l.b16 %v3890
  %v3923 = vunpack.c.l.b16 %v3891
  %v3924 = vunpack.c.l.b16 %v3892
  %v3925 = vunpack.c.l.b16 %v3893
  %v3926 = vunpack.c.l.b16 %v3894
  %v3927 = vunpack.c.l.b16 %v3895
  %v3928 = vunpack.c.l.b16 %v3896
  %v3929 = vunpack.c.l.b16 %v3897
  %v3930 = vpack.c.b16 %v3915, %v3914
  %v3931 = vpack.c.b16 %v3917, %v3916
  %v3932 = vpack.c.b16 %v3919, %v3918
  %v3933 = vpack.c.b16 %v3921, %v3920
  %v3934 = vpack.c.b16 %v3923, %v3922
  %v3935 = vpack.c.b16 %v3925, %v3924
  %v3936 = vpack.c.b16 %v3927, %v3926
  %v3937 = vpack.c.b16 %v3929, %v3928
  %3946 = vmatprep.subr.bf16.mxu0 0
  %3947 = vmatpush1.bf16.msra.mxu0 %v3930
  %3948 = vmatprep.subr.bf16.mxu0 0
  %3949 = vmatpush1.bf16.msra.mxu0 %v3931
  %3950 = vmatprep.subr.bf16.mxu0 0
  %3951 = vmatpush1.bf16.msra.mxu0 %v3932
  %3952 = vmatprep.subr.bf16.mxu0 0
  %3953 = vmatpush1.bf16.msra.mxu0 %v3933
  %3954 = vmatprep.subr.bf16.mxu0 0
  %3955 = vmatpush1.bf16.msra.mxu0 %v3934
  %3956 = vmatprep.subr.bf16.mxu0 0
  %3957 = vmatpush1.bf16.msra.mxu0 %v3935
  %3958 = vmatprep.subr.bf16.mxu0 0
  %3959 = vmatpush1.bf16.msra.mxu0 %v3936
  %3960 = vmatprep.subr.bf16.mxu0 0
  %3961 = vmatpush1.bf16.msra.mxu0 %v3937
  %3962 = vmatprep.subr.bf16.mxu0 0
  %3963 = vmatpush1.bf16.msra.mxu0 0
  %3964 = vmatprep.subr.bf16.mxu0 0
  %3965 = vmatpush1.bf16.msra.mxu0 0
  %3966 = vmatprep.subr.bf16.mxu0 0
  %3967 = vmatpush1.bf16.msra.mxu0 0
  %3968 = vmatprep.subr.bf16.mxu0 0
  %3969 = vmatpush1.bf16.msra.mxu0 0
  %3970 = vmatprep.subr.bf16.mxu0 0
  %3971 = vmatpush1.bf16.msra.mxu0 0
  %3972 = vmatprep.subr.bf16.mxu0 0
  %3973 = vmatpush1.bf16.msra.mxu0 0
  %3974 = vmatprep.subr.bf16.mxu0 0
  %3975 = vmatpush1.bf16.msra.mxu0 0
  %3976 = vmatprep.subr.bf16.mxu0 0
  %3977 = vmatpush1.bf16.msra.mxu0 0
  %3978 = vmatprep.mubr.bf16.mxu0 0
  %3979 = vmatmul.mubr.bf16.gmra.mrb[0].mxu0 %v3559
  %v3980 = vpop.f32.mrb[0].mxu0
  %v3981 = vadd.f32 0.0, %v3980
  %v3982 = vpop.f32.mrb[0].mxu0
  %v3983 = vpop.f32.mrb[0].mxu0
  %v3984 = vadd.f32 0.0, %v3983
  %v3985 = vpop.f32.mrb[0].mxu0
  %3986 = vdwg.mxu0
  %v3987 = vadd.f32 %v3880, %v3981
  %v3988 = vadd.f32 %v3881, %v3984
  %v3989 = vld [vmem:[%s3 + $0x100] sm:$0xf]
  %v3990 = vld [vmem:[%s3 + $0x104] sm:$0xf]
  %v3991 = vld [vmem:[%s3 + $0x108] sm:$0xf]
  %v3992 = vld [vmem:[%s3 + $0x10c] sm:$0xf]
  %v3993 = vld [vmem:[%s3 + $0x110] sm:$0xf]
  %v3994 = vld [vmem:[%s3 + $0x114] sm:$0xf]
  %v3995 = vld [vmem:[%s3 + $0x118] sm:$0xf]
  %v3996 = vld [vmem:[%s3 + $0x11c] sm:$0xf]
  %v3997 = vld [vmem:[%s3 + $0x120] sm:$0xf]
  %v3998 = vld [vmem:[%s3 + $0x124] sm:$0xf]
  %v3999 = vld [vmem:[%s3 + $0x128] sm:$0xf]
  %v4000 = vld [vmem:[%s3 + $0x12c] sm:$0xf]
  %v4001 = vld [vmem:[%s3 + $0x130] sm:$0xf]
  %v4002 = vld [vmem:[%s3 + $0x134] sm:$0xf]
  %v4003 = vld [vmem:[%s3 + $0x138] sm:$0xf]
  %v4004 = vld [vmem:[%s3 + $0x13c] sm:$0xf]
  %v4021 = vunpack.c.l.b16 %v3989
  %v4022 = vunpack.c.l.b16 %v3990
  %v4023 = vunpack.c.l.b16 %v3991
  %v4024 = vunpack.c.l.b16 %v3992
  %v4025 = vunpack.c.l.b16 %v3993
  %v4026 = vunpack.c.l.b16 %v3994
  %v4027 = vunpack.c.l.b16 %v3995
  %v4028 = vunpack.c.l.b16 %v3996
  %v4029 = vunpack.c.l.b16 %v3997
  %v4030 = vunpack.c.l.b16 %v3998
  %v4031 = vunpack.c.l.b16 %v3999
  %v4032 = vunpack.c.l.b16 %v4000
  %v4033 = vunpack.c.l.b16 %v4001
  %v4034 = vunpack.c.l.b16 %v4002
  %v4035 = vunpack.c.l.b16 %v4003
  %v4036 = vunpack.c.l.b16 %v4004
  %v4037 = vpack.c.b16 %v4022, %v4021
  %v4038 = vpack.c.b16 %v4024, %v4023
  %v4039 = vpack.c.b16 %v4026, %v4025
  %v4040 = vpack.c.b16 %v4028, %v4027
  %v4041 = vpack.c.b16 %v4030, %v4029
  %v4042 = vpack.c.b16 %v4032, %v4031
  %v4043 = vpack.c.b16 %v4034, %v4033
  %v4044 = vpack.c.b16 %v4036, %v4035
  %4053 = vmatprep.subr.bf16.mxu0 0
  %4054 = vmatpush1.bf16.msra.mxu0 %v4037
  %4055 = vmatprep.subr.bf16.mxu0 0
  %4056 = vmatpush1.bf16.msra.mxu0 %v4038
  %4057 = vmatprep.subr.bf16.mxu0 0
  %4058 = vmatpush1.bf16.msra.mxu0 %v4039
  %4059 = vmatprep.subr.bf16.mxu0 0
  %4060 = vmatpush1.bf16.msra.mxu0 %v4040
  %4061 = vmatprep.subr.bf16.mxu0 0
  %4062 = vmatpush1.bf16.msra.mxu0 %v4041
  %4063 = vmatprep.subr.bf16.mxu0 0
  %4064 = vmatpush1.bf16.msra.mxu0 %v4042
  %4065 = vmatprep.subr.bf16.mxu0 0
  %4066 = vmatpush1.bf16.msra.mxu0 %v4043
  %4067 = vmatprep.subr.bf16.mxu0 0
  %4068 = vmatpush1.bf16.msra.mxu0 %v4044
  %4069 = vmatprep.subr.bf16.mxu0 0
  %4070 = vmatpush1.bf16.msra.mxu0 0
  %4071 = vmatprep.subr.bf16.mxu0 0
  %4072 = vmatpush1.bf16.msra.mxu0 0
  %4073 = vmatprep.subr.bf16.mxu0 0
  %4074 = vmatpush1.bf16.msra.mxu0 0
  %4075 = vmatprep.subr.bf16.mxu0 0
  %4076 = vmatpush1.bf16.msra.mxu0 0
  %4077 = vmatprep.subr.bf16.mxu0 0
  %4078 = vmatpush1.bf16.msra.mxu0 0
  %4079 = vmatprep.subr.bf16.mxu0 0
  %4080 = vmatpush1.bf16.msra.mxu0 0
  %4081 = vmatprep.subr.bf16.mxu0 0
  %4082 = vmatpush1.bf16.msra.mxu0 0
  %4083 = vmatprep.subr.bf16.mxu0 0
  %4084 = vmatpush1.bf16.msra.mxu0 0
  %4085 = vmatprep.mubr.bf16.mxu0 0
  %4086 = vmatmul.mubr.bf16.gmra.mrb[0].mxu0 %v3560
  %v4087 = vpop.f32.mrb[0].mxu0
  %v4088 = vadd.f32 0.0, %v4087
  %v4089 = vpop.f32.mrb[0].mxu0
  %v4090 = vpop.f32.mrb[0].mxu0
  %v4091 = vadd.f32 0.0, %v4090
  %v4092 = vpop.f32.mrb[0].mxu0
  %4093 = vdwg.mxu0
  %v4094 = vadd.f32 %v3987, %v4088
  %v4095 = vadd.f32 %v3988, %v4091
  %v4096 = vld [vmem:[%s3 + $0x140] sm:$0xf]
  %v4097 = vld [vmem:[%s3 + $0x144] sm:$0xf]
  %v4098 = vld [vmem:[%s3 + $0x148] sm:$0xf]
  %v4099 = vld [vmem:[%s3 + $0x14c] sm:$0xf]
  %v4100 = vld [vmem:[%s3 + $0x150] sm:$0xf]
  %v4101 = vld [vmem:[%s3 + $0x154] sm:$0xf]
  %v4102 = vld [vmem:[%s3 + $0x158] sm:$0xf]
  %v4103 = vld [vmem:[%s3 + $0x15c] sm:$0xf]
  %v4104 = vld [vmem:[%s3 + $0x160] sm:$0xf]
  %v4105 = vld [vmem:[%s3 + $0x164] sm:$0xf]
  %v4106 = vld [vmem:[%s3 + $0x168] sm:$0xf]
  %v4107 = vld [vmem:[%s3 + $0x16c] sm:$0xf]
  %v4108 = vld [vmem:[%s3 + $0x170] sm:$0xf]
  %v4109 = vld [vmem:[%s3 + $0x174] sm:$0xf]
  %v4110 = vld [vmem:[%s3 + $0x178] sm:$0xf]
  %v4111 = vld [vmem:[%s3 + $0x17c] sm:$0xf]
  %v4128 = vunpack.c.l.b16 %v4096
  %v4129 = vunpack.c.l.b16 %v4097
  %v4130 = vunpack.c.l.b16 %v4098
  %v4131 = vunpack.c.l.b16 %v4099
  %v4132 = vunpack.c.l.b16 %v4100
  %v4133 = vunpack.c.l.b16 %v4101
  %v4134 = vunpack.c.l.b16 %v4102
  %v4135 = vunpack.c.l.b16 %v4103
  %v4136 = vunpack.c.l.b16 %v4104
  %v4137 = vunpack.c.l.b16 %v4105
  %v4138 = vunpack.c.l.b16 %v4106
  %v4139 = vunpack.c.l.b16 %v4107
  %v4140 = vunpack.c.l.b16 %v4108
  %v4141 = vunpack.c.l.b16 %v4109
  %v4142 = vunpack.c.l.b16 %v4110
  %v4143 = vunpack.c.l.b16 %v4111
  %v4144 = vpack.c.b16 %v4129, %v4128
  %v4145 = vpack.c.b16 %v4131, %v4130
  %v4146 = vpack.c.b16 %v4133, %v4132
  %v4147 = vpack.c.b16 %v4135, %v4134
  %v4148 = vpack.c.b16 %v4137, %v4136
  %v4149 = vpack.c.b16 %v4139, %v4138
  %v4150 = vpack.c.b16 %v4141, %v4140
  %v4151 = vpack.c.b16 %v4143, %v4142
  %4160 = vmatprep.subr.bf16.mxu0 0
  %4161 = vmatpush1.bf16.msra.mxu0 %v4144
  %4162 = vmatprep.subr.bf16.mxu0 0
  %4163 = vmatpush1.bf16.msra.mxu0 %v4145
  %4164 = vmatprep.subr.bf16.mxu0 0
  %4165 = vmatpush1.bf16.msra.mxu0 %v4146
  %4166 = vmatprep.subr.bf16.mxu0 0
  %4167 = vmatpush1.bf16.msra.mxu0 %v4147
  %4168 = vmatprep.subr.bf16.mxu0 0
  %4169 = vmatpush1.bf16.msra.mxu0 %v4148
  %4170 = vmatprep.subr.bf16.mxu0 0
  %4171 = vmatpush1.bf16.msra.mxu0 %v4149
  %4172 = vmatprep.subr.bf16.mxu0 0
  %4173 = vmatpush1.bf16.msra.mxu0 %v4150
  %4174 = vmatprep.subr.bf16.mxu0 0
  %4175 = vmatpush1.bf16.msra.mxu0 %v4151
  %4176 = vmatprep.subr.bf16.mxu0 0
  %4177 = vmatpush1.bf16.msra.mxu0 0
  %4178 = vmatprep.subr.bf16.mxu0 0
  %4179 = vmatpush1.bf16.msra.mxu0 0
  %4180 = vmatprep.subr.bf16.mxu0 0
  %4181 = vmatpush1.bf16.msra.mxu0 0
  %4182 = vmatprep.subr.bf16.mxu0 0
  %4183 = vmatpush1.bf16.msra.mxu0 0
  %4184 = vmatprep.subr.bf16.mxu0 0
  %4185 = vmatpush1.bf16.msra.mxu0 0
  %4186 = vmatprep.subr.bf16.mxu0 0
  %4187 = vmatpush1.bf16.msra.mxu0 0
  %4188 = vmatprep.subr.bf16.mxu0 0
  %4189 = vmatpush1.bf16.msra.mxu0 0
  %4190 = vmatprep.subr.bf16.mxu0 0
  %4191 = vmatpush1.bf16.msra.mxu0 0
  %4192 = vmatprep.mubr.bf16.mxu0 0
  %4193 = vmatmul.mubr.bf16.gmra.mrb[0].mxu0 %v3561
  %v4194 = vpop.f32.mrb[0].mxu0
  %v4195 = vadd.f32 0.0, %v4194
  %v4196 = vpop.f32.mrb[0].mxu0
  %v4197 = vpop.f32.mrb[0].mxu0
  %v4198 = vadd.f32 0.0, %v4197
  %v4199 = vpop.f32.mrb[0].mxu0
  %4200 = vdwg.mxu0
  %v4201 = vadd.f32 %v4094, %v4195
  %v4202 = vadd.f32 %v4095, %v4198
  %v4203 = vld [vmem:[%s3 + $0x180] sm:$0xf]
  %v4204 = vld [vmem:[%s3 + $0x184] sm:$0xf]
  %v4205 = vld [vmem:[%s3 + $0x188] sm:$0xf]
  %v4206 = vld [vmem:[%s3 + $0x18c] sm:$0xf]
  %v4207 = vld [vmem:[%s3 + $0x190] sm:$0xf]
  %v4208 = vld [vmem:[%s3 + $0x194] sm:$0xf]
  %v4209 = vld [vmem:[%s3 + $0x198] sm:$0xf]
  %v4210 = vld [vmem:[%s3 + $0x19c] sm:$0xf]
  %v4211 = vld [vmem:[%s3 + $0x1a0] sm:$0xf]
  %v4212 = vld [vmem:[%s3 + $0x1a4] sm:$0xf]
  %v4213 = vld [vmem:[%s3 + $0x1a8] sm:$0xf]
  %v4214 = vld [vmem:[%s3 + $0x1ac] sm:$0xf]
  %v4215 = vld [vmem:[%s3 + $0x1b0] sm:$0xf]
  %v4216 = vld [vmem:[%s3 + $0x1b4] sm:$0xf]
  %v4217 = vld [vmem:[%s3 + $0x1b8] sm:$0xf]
  %v4218 = vld [vmem:[%s3 + $0x1bc] sm:$0xf]
  %v4235 = vunpack.c.l.b16 %v4203
  %v4236 = vunpack.c.l.b16 %v4204
  %v4237 = vunpack.c.l.b16 %v4205
  %v4238 = vunpack.c.l.b16 %v4206
  %v4239 = vunpack.c.l.b16 %v4207
  %v4240 = vunpack.c.l.b16 %v4208
  %v4241 = vunpack.c.l.b16 %v4209
  %v4242 = vunpack.c.l.b16 %v4210
  %v4243 = vunpack.c.l.b16 %v4211
  %v4244 = vunpack.c.l.b16 %v4212
  %v4245 = vunpack.c.l.b16 %v4213
  %v4246 = vunpack.c.l.b16 %v4214
  %v4247 = vunpack.c.l.b16 %v4215
  %v4248 = vunpack.c.l.b16 %v4216
  %v4249 = vunpack.c.l.b16 %v4217
  %v4250 = vunpack.c.l.b16 %v4218
  %v4251 = vpack.c.b16 %v4236, %v4235
  %v4252 = vpack.c.b16 %v4238, %v4237
  %v4253 = vpack.c.b16 %v4240, %v4239
  %v4254 = vpack.c.b16 %v4242, %v4241
  %v4255 = vpack.c.b16 %v4244, %v4243
  %v4256 = vpack.c.b16 %v4246, %v4245
  %v4257 = vpack.c.b16 %v4248, %v4247
  %v4258 = vpack.c.b16 %v4250, %v4249
  %4267 = vmatprep.subr.bf16.mxu0 0
  %4268 = vmatpush1.bf16.msra.mxu0 %v4251
  %4269 = vmatprep.subr.bf16.mxu0 0
  %4270 = vmatpush1.bf16.msra.mxu0 %v4252
  %4271 = vmatprep.subr.bf16.mxu0 0
  %4272 = vmatpush1.bf16.msra.mxu0 %v4253
  %4273 = vmatprep.subr.bf16.mxu0 0
  %4274 = vmatpush1.bf16.msra.mxu0 %v4254
  %4275 = vmatprep.subr.bf16.mxu0 0
  %4276 = vmatpush1.bf16.msra.mxu0 %v4255
  %4277 = vmatprep.subr.bf16.mxu0 0
  %4278 = vmatpush1.bf16.msra.mxu0 %v4256
  %4279 = vmatprep.subr.bf16.mxu0 0
  %4280 = vmatpush1.bf16.msra.mxu0 %v4257
  %4281 = vmatprep.subr.bf16.mxu0 0
  %4282 = vmatpush1.bf16.msra.mxu0 %v4258
  %4283 = vmatprep.subr.bf16.mxu0 0
  %4284 = vmatpush1.bf16.msra.mxu0 0
  %4285 = vmatprep.subr.bf16.mxu0 0
  %4286 = vmatpush1.bf16.msra.mxu0 0
  %4287 = vmatprep.subr.bf16.mxu0 0
  %4288 = vmatpush1.bf16.msra.mxu0 0
  %4289 = vmatprep.subr.bf16.mxu0 0
  %4290 = vmatpush1.bf16.msra.mxu0 0
  %4291 = vmatprep.subr.bf16.mxu0 0
  %4292 = vmatpush1.bf16.msra.mxu0 0
  %4293 = vmatprep.subr.bf16.mxu0 0
  %4294 = vmatpush1.bf16.msra.mxu0 0
  %4295 = vmatprep.subr.bf16.mxu0 0
  %4296 = vmatpush1.bf16.msra.mxu0 0
  %4297 = vmatprep.subr.bf16.mxu0 0
  %4298 = vmatpush1.bf16.msra.mxu0 0
  %4299 = vmatprep.mubr.bf16.mxu0 0
  %4300 = vmatmul.mubr.bf16.gmra.mrb[0].mxu0 %v3562
  %v4301 = vpop.f32.mrb[0].mxu0
  %v4302 = vadd.f32 0.0, %v4301
  %v4303 = vpop.f32.mrb[0].mxu0
  %v4304 = vpop.f32.mrb[0].mxu0
  %v4305 = vadd.f32 0.0, %v4304
  %v4306 = vpop.f32.mrb[0].mxu0
  %4307 = vdwg.mxu0
  %v4308 = vadd.f32 %v4201, %v4302
  %v4309 = vadd.f32 %v4202, %v4305
  %v4310 = vld [vmem:[%s3 + $0x1c0] sm:$0xf]
  %v4311 = vld [vmem:[%s3 + $0x1c4] sm:$0xf]
  %v4312 = vld [vmem:[%s3 + $0x1c8] sm:$0xf]
  %v4313 = vld [vmem:[%s3 + $0x1cc] sm:$0xf]
  %v4314 = vld [vmem:[%s3 + $0x1d0] sm:$0xf]
  %v4315 = vld [vmem:[%s3 + $0x1d4] sm:$0xf]
  %v4316 = vld [vmem:[%s3 + $0x1d8] sm:$0xf]
  %v4317 = vld [vmem:[%s3 + $0x1dc] sm:$0xf]
  %v4318 = vld [vmem:[%s3 + $0x1e0] sm:$0xf]
  %v4319 = vld [vmem:[%s3 + $0x1e4] sm:$0xf]
  %v4320 = vld [vmem:[%s3 + $0x1e8] sm:$0xf]
  %v4321 = vld [vmem:[%s3 + $0x1ec] sm:$0xf]
  %v4322 = vld [vmem:[%s3 + $0x1f0] sm:$0xf]
  %v4323 = vld [vmem:[%s3 + $0x1f4] sm:$0xf]
  %v4324 = vld [vmem:[%s3 + $0x1f8] sm:$0xf]
  %v4325 = vld [vmem:[%s3 + $0x1fc] sm:$0xf]
  %v4342 = vunpack.c.l.b16 %v4310
  %v4343 = vunpack.c.l.b16 %v4311
  %v4344 = vunpack.c.l.b16 %v4312
  %v4345 = vunpack.c.l.b16 %v4313
  %v4346 = vunpack.c.l.b16 %v4314
  %v4347 = vunpack.c.l.b16 %v4315
  %v4348 = vunpack.c.l.b16 %v4316
  %v4349 = vunpack.c.l.b16 %v4317
  %v4350 = vunpack.c.l.b16 %v4318
  %v4351 = vunpack.c.l.b16 %v4319
  %v4352 = vunpack.c.l.b16 %v4320
  %v4353 = vunpack.c.l.b16 %v4321
  %v4354 = vunpack.c.l.b16 %v4322
  %v4355 = vunpack.c.l.b16 %v4323
  %v4356 = vunpack.c.l.b16 %v4324
  %v4357 = vunpack.c.l.b16 %v4325
  %v4358 = vpack.c.b16 %v4343, %v4342
  %v4359 = vpack.c.b16 %v4345, %v4344
  %v4360 = vpack.c.b16 %v4347, %v4346
  %v4361 = vpack.c.b16 %v4349, %v4348
  %v4362 = vpack.c.b16 %v4351, %v4350
  %v4363 = vpack.c.b16 %v4353, %v4352
  %v4364 = vpack.c.b16 %v4355, %v4354
  %v4365 = vpack.c.b16 %v4357, %v4356
  %4374 = vmatprep.subr.bf16.mxu0 0
  %4375 = vmatpush1.bf16.msra.mxu0 %v4358
  %4376 = vmatprep.subr.bf16.mxu0 0
  %4377 = vmatpush1.bf16.msra.mxu0 %v4359
  %4378 = vmatprep.subr.bf16.mxu0 0
  %4379 = vmatpush1.bf16.msra.mxu0 %v4360
  %4380 = vmatprep.subr.bf16.mxu0 0
  %4381 = vmatpush1.bf16.msra.mxu0 %v4361
  %4382 = vmatprep.subr.bf16.mxu0 0
  %4383 = vmatpush1.bf16.msra.mxu0 %v4362
  %4384 = vmatprep.subr.bf16.mxu0 0
  %4385 = vmatpush1.bf16.msra.mxu0 %v4363
  %4386 = vmatprep.subr.bf16.mxu0 0
  %4387 = vmatpush1.bf16.msra.mxu0 %v4364
  %4388 = vmatprep.subr.bf16.mxu0 0
  %4389 = vmatpush1.bf16.msra.mxu0 %v4365
  %4390 = vmatprep.subr.bf16.mxu0 0
  %4391 = vmatpush1.bf16.msra.mxu0 0
  %4392 = vmatprep.subr.bf16.mxu0 0
  %4393 = vmatpush1.bf16.msra.mxu0 0
  %4394 = vmatprep.subr.bf16.mxu0 0
  %4395 = vmatpush1.bf16.msra.mxu0 0
  %4396 = vmatprep.subr.bf16.mxu0 0
  %4397 = vmatpush1.bf16.msra.mxu0 0
  %4398 = vmatprep.subr.bf16.mxu0 0
  %4399 = vmatpush1.bf16.msra.mxu0 0
  %4400 = vmatprep.subr.bf16.mxu0 0
  %4401 = vmatpush1.bf16.msra.mxu0 0
  %4402 = vmatprep.subr.bf16.mxu0 0
  %4403 = vmatpush1.bf16.msra.mxu0 0
  %4404 = vmatprep.subr.bf16.mxu0 0
  %4405 = vmatpush1.bf16.msra.mxu0 0
  %4406 = vmatprep.mubr.bf16.mxu0 0
  %4407 = vmatmul.mubr.bf16.gmra.mrb[0].mxu0 %v3563
  %v4408 = vpop.f32.mrb[0].mxu0
  %v4409 = vadd.f32 0.0, %v4408
  %v4410 = vpop.f32.mrb[0].mxu0
  %v4411 = vpop.f32.mrb[0].mxu0
  %v4412 = vadd.f32 0.0, %v4411
  %v4413 = vpop.f32.mrb[0].mxu0
  %4414 = vdwg.mxu0
  %v4415 = vadd.f32 %v4308, %v4409
  %v4416 = vadd.f32 %v4309, %v4412
  %v4417 = vld [vmem:[%s3 + $0x200] sm:$0xf]
  %v4418 = vld [vmem:[%s3 + $0x204] sm:$0xf]
  %v4419 = vld [vmem:[%s3 + $0x208] sm:$0xf]
  %v4420 = vld [vmem:[%s3 + $0x20c] sm:$0xf]
  %v4421 = vld [vmem:[%s3 + $0x210] sm:$0xf]
  %v4422 = vld [vmem:[%s3 + $0x214] sm:$0xf]
  %v4423 = vld [vmem:[%s3 + $0x218] sm:$0xf]
  %v4424 = vld [vmem:[%s3 + $0x21c] sm:$0xf]
  %v4425 = vld [vmem:[%s3 + $0x220] sm:$0xf]
  %v4426 = vld [vmem:[%s3 + $0x224] sm:$0xf]
  %v4427 = vld [vmem:[%s3 + $0x228] sm:$0xf]
  %v4428 = vld [vmem:[%s3 + $0x22c] sm:$0xf]
  %v4429 = vld [vmem:[%s3 + $0x230] sm:$0xf]
  %v4430 = vld [vmem:[%s3 + $0x234] sm:$0xf]
  %v4431 = vld [vmem:[%s3 + $0x238] sm:$0xf]
  %v4432 = vld [vmem:[%s3 + $0x23c] sm:$0xf]
  %v4449 = vunpack.c.l.b16 %v4417
  %v4450 = vunpack.c.l.b16 %v4418
  %v4451 = vunpack.c.l.b16 %v4419
  %v4452 = vunpack.c.l.b16 %v4420
  %v4453 = vunpack.c.l.b16 %v4421
  %v4454 = vunpack.c.l.b16 %v4422
  %v4455 = vunpack.c.l.b16 %v4423
  %v4456 = vunpack.c.l.b16 %v4424
  %v4457 = vunpack.c.l.b16 %v4425
  %v4458 = vunpack.c.l.b16 %v4426
  %v4459 = vunpack.c.l.b16 %v4427
  %v4460 = vunpack.c.l.b16 %v4428
  %v4461 = vunpack.c.l.b16 %v4429
  %v4462 = vunpack.c.l.b16 %v4430
  %v4463 = vunpack.c.l.b16 %v4431
  %v4464 = vunpack.c.l.b16 %v4432
  %v4465 = vpack.c.b16 %v4450, %v4449
  %v4466 = vpack.c.b16 %v4452, %v4451
  %v4467 = vpack.c.b16 %v4454, %v4453
  %v4468 = vpack.c.b16 %v4456, %v4455
  %v4469 = vpack.c.b16 %v4458, %v4457
  %v4470 = vpack.c.b16 %v4460, %v4459
  %v4471 = vpack.c.b16 %v4462, %v4461
  %v4472 = vpack.c.b16 %v4464, %v4463
  %4481 = vmatprep.subr.bf16.mxu0 0
  %4482 = vmatpush1.bf16.msra.mxu0 %v4465
  %4483 = vmatprep.subr.bf16.mxu0 0
  %4484 = vmatpush1.bf16.msra.mxu0 %v4466
  %4485 = vmatprep.subr.bf16.mxu0 0
  %4486 = vmatpush1.bf16.msra.mxu0 %v4467
  %4487 = vmatprep.subr.bf16.mxu0 0
  %4488 = vmatpush1.bf16.msra.mxu0 %v4468
  %4489 = vmatprep.subr.bf16.mxu0 0
  %4490 = vmatpush1.bf16.msra.mxu0 %v4469
  %4491 = vmatprep.subr.bf16.mxu0 0
  %4492 = vmatpush1.bf16.msra.mxu0 %v4470
  %4493 = vmatprep.subr.bf16.mxu0 0
  %4494 = vmatpush1.bf16.msra.mxu0 %v4471
  %4495 = vmatprep.subr.bf16.mxu0 0
  %4496 = vmatpush1.bf16.msra.mxu0 %v4472
  %4497 = vmatprep.subr.bf16.mxu0 0
  %4498 = vmatpush1.bf16.msra.mxu0 0
  %4499 = vmatprep.subr.bf16.mxu0 0
  %4500 = vmatpush1.bf16.msra.mxu0 0
  %4501 = vmatprep.subr.bf16.mxu0 0
  %4502 = vmatpush1.bf16.msra.mxu0 0
  %4503 = vmatprep.subr.bf16.mxu0 0
  %4504 = vmatpush1.bf16.msra.mxu0 0
  %4505 = vmatprep.subr.bf16.mxu0 0
  %4506 = vmatpush1.bf16.msra.mxu0 0
  %4507 = vmatprep.subr.bf16.mxu0 0
  %4508 = vmatpush1.bf16.msra.mxu0 0
  %4509 = vmatprep.subr.bf16.mxu0 0
  %4510 = vmatpush1.bf16.msra.mxu0 0
  %4511 = vmatprep.subr.bf16.mxu0 0
  %4512 = vmatpush1.bf16.msra.mxu0 0
  %4513 = vmatprep.mubr.bf16.mxu0 0
  %4514 = vmatmul.mubr.bf16.gmra.mrb[0].mxu0 %v3564
  %v4515 = vpop.f32.mrb[0].mxu0
  %v4516 = vadd.f32 0.0, %v4515
  %v4517 = vpop.f32.mrb[0].mxu0
  %v4518 = vpop.f32.mrb[0].mxu0
  %v4519 = vadd.f32 0.0, %v4518
  %v4520 = vpop.f32.mrb[0].mxu0
  %4521 = vdwg.mxu0
  %v4522 = vadd.f32 %v4415, %v4516
  %v4523 = vadd.f32 %v4416, %v4519
  %v4524 = vld [vmem:[%s4] sm:$0x1]
  %v4526 = vlaneseq
  %v4527 = vshrl.u32 %v4526, 7
  %v4528 = vsub.s32 0, %v4527
  %v4529 = vrot.slane %v4524, %v4528
  %v4531 = vadd.f32 %v4522, %v4529
  %v4532 = vadd.f32 %v4523, %v4529
  %v4533 = vmax.f32 %v4531, 0.0
  %v4534 = vmax.f32 %v4532, 0.0
  %v4535 = vpack.c.bf16 %v4534, %v4533
  %v4536 = vld [vmem:[%s5] sm:$0xf]
  %v4537 = vld [vmem:[%s5 + $0x4] sm:$0xf]
  %v4538 = vld [vmem:[%s5 + $0x8] sm:$0xf]
  %v4539 = vld [vmem:[%s5 + $0xc] sm:$0xf]
  %v4540 = vld [vmem:[%s5 + $0x10] sm:$0xf]
  %v4541 = vld [vmem:[%s5 + $0x14] sm:$0xf]
  %v4542 = vld [vmem:[%s5 + $0x18] sm:$0xf]
  %v4543 = vld [vmem:[%s5 + $0x1c] sm:$0xf]
  %v4544 = vld [vmem:[%s5 + $0x20] sm:$0xf]
  %v4545 = vld [vmem:[%s5 + $0x24] sm:$0xf]
  %v4546 = vld [vmem:[%s5 + $0x28] sm:$0xf]
  %v4547 = vld [vmem:[%s5 + $0x2c] sm:$0xf]
  %v4548 = vld [vmem:[%s5 + $0x30] sm:$0xf]
  %v4549 = vld [vmem:[%s5 + $0x34] sm:$0xf]
  %v4550 = vld [vmem:[%s5 + $0x38] sm:$0xf]
  %v4551 = vld [vmem:[%s5 + $0x3c] sm:$0xf]
  %v4552 = vld [vmem:[%s6] sm:$0x1]
  %v4554 = vlaneseq
  %v4555 = vshrl.u32 %v4554, 7
  %v4556 = vsub.s32 0, %v4555
  %v4557 = vrot.slane %v4552, %v4556
  %v4575 = vunpack.c.l.b16 %v4536
  %v4576 = vunpack.c.l.b16 %v4537
  %v4577 = vunpack.c.l.b16 %v4538
  %v4578 = vunpack.c.l.b16 %v4539
  %v4579 = vunpack.c.l.b16 %v4540
  %v4580 = vunpack.c.l.b16 %v4541
  %v4581 = vunpack.c.l.b16 %v4542
  %v4582 = vunpack.c.l.b16 %v4543
  %v4583 = vunpack.c.l.b16 %v4544
  %v4584 = vunpack.c.l.b16 %v4545
  %v4585 = vunpack.c.l.b16 %v4546
  %v4586 = vunpack.c.l.b16 %v4547
  %v4587 = vunpack.c.l.b16 %v4548
  %v4588 = vunpack.c.l.b16 %v4549
  %v4589 = vunpack.c.l.b16 %v4550
  %v4590 = vunpack.c.l.b16 %v4551
  %v4591 = vpack.c.b16 %v4576, %v4575
  %v4592 = vpack.c.b16 %v4578, %v4577
  %v4593 = vpack.c.b16 %v4580, %v4579
  %v4594 = vpack.c.b16 %v4582, %v4581
  %v4595 = vpack.c.b16 %v4584, %v4583
  %v4596 = vpack.c.b16 %v4586, %v4585
  %v4597 = vpack.c.b16 %v4588, %v4587
  %v4598 = vpack.c.b16 %v4590, %v4589
  %4607 = vmatprep.subr.bf16.mxu0 0
  %4608 = vmatpush1.bf16.msra.mxu0 %v4591
  %4609 = vmatprep.subr.bf16.mxu0 0
  %4610 = vmatpush1.bf16.msra.mxu0 %v4592
  %4611 = vmatprep.subr.bf16.mxu0 0
  %4612 = vmatpush1.bf16.msra.mxu0 %v4593
  %4613 = vmatprep.subr.bf16.mxu0 0
  %4614 = vmatpush1.bf16.msra.mxu0 %v4594
  %4615 = vmatprep.subr.bf16.mxu0 0
  %4616 = vmatpush1.bf16.msra.mxu0 %v4595
  %4617 = vmatprep.subr.bf16.mxu0 0
  %4618 = vmatpush1.bf16.msra.mxu0 %v4596
  %4619 = vmatprep.subr.bf16.mxu0 0
  %4620 = vmatpush1.bf16.msra.mxu0 %v4597
  %4621 = vmatprep.subr.bf16.mxu0 0
  %4622 = vmatpush1.bf16.msra.mxu0 %v4598
  %4623 = vmatprep.subr.bf16.mxu0 0
  %4624 = vmatpush1.bf16.msra.mxu0 0
  %4625 = vmatprep.subr.bf16.mxu0 0
  %4626 = vmatpush1.bf16.msra.mxu0 0
  %4627 = vmatprep.subr.bf16.mxu0 0
  %4628 = vmatpush1.bf16.msra.mxu0 0
  %4629 = vmatprep.subr.bf16.mxu0 0
  %4630 = vmatpush1.bf16.msra.mxu0 0
  %4631 = vmatprep.subr.bf16.mxu0 0
  %4632 = vmatpush1.bf16.msra.mxu0 0
  %4633 = vmatprep.subr.bf16.mxu0 0
  %4634 = vmatpush1.bf16.msra.mxu0 0
  %4635 = vmatprep.subr.bf16.mxu0 0
  %4636 = vmatpush1.bf16.msra.mxu0 0
  %4637 = vmatprep.subr.bf16.mxu0 0
  %4638 = vmatpush1.bf16.msra.mxu0 0
  %4639 = vmatprep.mubr.bf16.mxu0 0
  %4640 = vmatmul.mubr.bf16.gmra.mrb[0].mxu0 %v4535
  %v4641 = vpop.f32.mrb[0].mxu0
  %v4642 = vadd.f32 %v4557, %v4641
  %v4643 = vpop.f32.mrb[0].mxu0
  %v4644 = vpop.f32.mrb[0].mxu0
  %v4645 = vadd.f32 %v4557, %v4644
  %v4646 = vpop.f32.mrb[0].mxu0
  %4647 = vdwg.mxu0
  %v4648 = vpack.c.bf16 %v4645, %v4642
  %v4649 = vld [vmem:[%s7] sm:$0xf]
  %v4650 = vld [vmem:[%s7 + $0x4] sm:$0xf]
  %v4651 = vld [vmem:[%s7 + $0x8] sm:$0xf]
  %v4652 = vld [vmem:[%s7 + $0xc] sm:$0xf]
  %v4653 = vld [vmem:[%s8] sm:$0x1]
  %v4655 = vlaneseq
  %v4656 = vshrl.u32 %v4655, 7
  %v4657 = vsub.s32 0, %v4656
  %v4658 = vrot.slane %v4653, %v4657
  %v4664 = vunpack.c.l.b16 %v4649
  %v4665 = vunpack.c.l.b16 %v4650
  %v4666 = vunpack.c.l.b16 %v4651
  %v4667 = vunpack.c.l.b16 %v4652
  %v4668 = vpack.c.b16 %v4665, %v4664
  %v4669 = vpack.c.b16 %v4667, %v4666
  %vm4672 = vcmask 261120
  %v4674 = vsel %vm4672, %v4648, 0
  %4676 = vmatprep.subr.bf16.mxu0 0
  %4677 = vmatpush1.bf16.msra.mxu0 %v4668
  %4678 = vmatprep.subr.bf16.mxu0 0
  %4679 = vmatpush1.bf16.msra.mxu0 %v4669
  %4680 = vmatprep.subr.bf16.mxu0 0
  %4681 = vmatpush1.bf16.msra.mxu0 0
  %4682 = vmatprep.subr.bf16.mxu0 0
  %4683 = vmatpush1.bf16.msra.mxu0 0
  %4684 = vmatprep.subr.bf16.mxu0 0
  %4685 = vmatpush1.bf16.msra.mxu0 0
  %4686 = vmatprep.subr.bf16.mxu0 0
  %4687 = vmatpush1.bf16.msra.mxu0 0
  %4688 = vmatprep.subr.bf16.mxu0 0
  %4689 = vmatpush1.bf16.msra.mxu0 0
  %4690 = vmatprep.subr.bf16.mxu0 0
  %4691 = vmatpush1.bf16.msra.mxu0 0
  %4692 = vmatprep.subr.bf16.mxu0 0
  %4693 = vmatpush1.bf16.msra.mxu0 0
  %4694 = vmatprep.subr.bf16.mxu0 0
  %4695 = vmatpush1.bf16.msra.mxu0 0
  %4696 = vmatprep.subr.bf16.mxu0 0
  %4697 = vmatpush1.bf16.msra.mxu0 0
  %4698 = vmatprep.subr.bf16.mxu0 0
  %4699 = vmatpush1.bf16.msra.mxu0 0
  %4700 = vmatprep.subr.bf16.mxu0 0
  %4701 = vmatpush1.bf16.msra.mxu0 0
  %4702 = vmatprep.subr.bf16.mxu0 0
  %4703 = vmatpush1.bf16.msra.mxu0 0
  %4704 = vmatprep.subr.bf16.mxu0 0
  %4705 = vmatpush1.bf16.msra.mxu0 0
  %4706 = vmatprep.subr.bf16.mxu0 0
  %4707 = vmatpush1.bf16.msra.mxu0 0
  %4708 = vmatprep.mubr.bf16.mxu0 0
  %4709 = vmatmul.mubr.bf16.gmra.mrb[0].mxu0 %v4674
  %v4710 = vpop.f32.mrb[0].mxu0
  %v4711 = vadd.f32 %v4658, %v4710
  %v4712 = vpop.f32.mrb[0].mxu0
  %v4713 = vpop.f32.mrb[0].mxu0
  %v4714 = vadd.f32 %v4658, %v4713
  %v4715 = vpop.f32.mrb[0].mxu0
  %4716 = vdwg.mxu0
  %v4717 = vmax.f32 %v4711, 0.0
  %v4718 = vmax.f32 %v4714, 0.0
  %v4719 = vpack.c.bf16 %v4718, %v4717
  %v4720 = vld [vmem:[%s9] sm:$0xf]
  %v4721 = vld [vmem:[%s9 + $0x4] sm:$0xf]
  %v4722 = vld [vmem:[%s9 + $0x8] sm:$0xf]
  %v4723 = vld [vmem:[%s9 + $0xc] sm:$0xf]
  %v4724 = vld [vmem:[%s10] sm:$0x1]
  %v4726 = vlaneseq
  %v4727 = vshrl.u32 %v4726, 7
  %v4728 = vsub.s32 0, %v4727
  %v4729 = vrot.slane %v4724, %v4728
  %v4735 = vunpack.c.l.b16 %v4720
  %v4736 = vunpack.c.l.b16 %v4721
  %v4737 = vunpack.c.l.b16 %v4722
  %v4738 = vunpack.c.l.b16 %v4723
  %v4739 = vpack.c.b16 %v4736, %v4735
  %v4740 = vpack.c.b16 %v4738, %v4737
  %v4744 = vsel %vm4672, %v4719, 0
  %4746 = vmatprep.subr.bf16.mxu0 0
  %4747 = vmatpush1.bf16.msra.mxu0 %v4739
  %4748 = vmatprep.subr.bf16.mxu0 0
  %4749 = vmatpush1.bf16.msra.mxu0 %v4740
  %4750 = vmatprep.subr.bf16.mxu0 0
  %4751 = vmatpush1.bf16.msra.mxu0 0
  %4752 = vmatprep.subr.bf16.mxu0 0
  %4753 = vmatpush1.bf16.msra.mxu0 0
  %4754 = vmatprep.subr.bf16.mxu0 0
  %4755 = vmatpush1.bf16.msra.mxu0 0
  %4756 = vmatprep.subr.bf16.mxu0 0
  %4757 = vmatpush1.bf16.msra.mxu0 0
  %4758 = vmatprep.subr.bf16.mxu0 0
  %4759 = vmatpush1.bf16.msra.mxu0 0
  %4760 = vmatprep.subr.bf16.mxu0 0
  %4761 = vmatpush1.bf16.msra.mxu0 0
  %4762 = vmatprep.subr.bf16.mxu0 0
  %4763 = vmatpush1.bf16.msra.mxu0 0
  %4764 = vmatprep.subr.bf16.mxu0 0
  %4765 = vmatpush1.bf16.msra.mxu0 0
  %4766 = vmatprep.subr.bf16.mxu0 0
  %4767 = vmatpush1.bf16.msra.mxu0 0
  %4768 = vmatprep.subr.bf16.mxu0 0
  %4769 = vmatpush1.bf16.msra.mxu0 0
  %4770 = vmatprep.subr.bf16.mxu0 0
  %4771 = vmatpush1.bf16.msra.mxu0 0
  %4772 = vmatprep.subr.bf16.mxu0 0
  %4773 = vmatpush1.bf16.msra.mxu0 0
  %4774 = vmatprep.subr.bf16.mxu0 0
  %4775 = vmatpush1.bf16.msra.mxu0 0
  %4776 = vmatprep.subr.bf16.mxu0 0
  %4777 = vmatpush1.bf16.msra.mxu0 0
  %4778 = vmatprep.mubr.bf16.mxu0 0
  %4779 = vmatmul.mubr.bf16.gmra.mrb[0].mxu0 %v4744
  %v4780 = vpop.f32.mrb[0].mxu0
  %v4781 = vadd.f32 %v4729, %v4780
  %v4782 = vpop.f32.mrb[0].mxu0
  %v4783 = vpop.f32.mrb[0].mxu0
  %v4784 = vadd.f32 %v4729, %v4783
  %v4785 = vpop.f32.mrb[0].mxu0
  %4786 = vdwg.mxu0
  %v4787 = vmax.f32 %v4781, 0.0
  %v4788 = vmax.f32 %v4784, 0.0
  %v4789 = vpack.c.bf16 %v4788, %v4787
  %v4790 = vld [vmem:[%s11] sm:$0xff]
  %v4791 = vld [vmem:[%s11 + $0x8] sm:$0xff]
  %v4792 = vld [vmem:[%s11 + $0x10] sm:$0xff]
  %v4793 = vld [vmem:[%s11 + $0x18] sm:$0xff]
  %v4794 = vld [vmem:[%s11 + $0x20] sm:$0xff]
  %v4795 = vld [vmem:[%s11 + $0x28] sm:$0xff]
  %v4796 = vld [vmem:[%s11 + $0x30] sm:$0xff]
  %v4797 = vld [vmem:[%s11 + $0x38] sm:$0xff]
  %v4798 = vld [vmem:[%s12] sm:$0xf]
  %v4800 = vlaneseq
  %v4801 = vshrl.u32 %v4800, 7
  %v4802 = vsub.s32 0, %v4801
  %v4803 = vrot.slane %v4798, %v4802
  %v4804 = vlaneseq
  %v4805 = vshrl.u32 %v4804, 7
  %v4806 = vsub.s32 1, %v4805
  %v4807 = vrot.slane %v4798, %v4806
  %v4808 = vlaneseq
  %v4809 = vshrl.u32 %v4808, 7
  %v4810 = vsub.s32 2, %v4809
  %v4811 = vrot.slane %v4798, %v4810
  %v4812 = vlaneseq
  %v4813 = vshrl.u32 %v4812, 7
  %v4814 = vsub.s32 3, %v4813
  %v4815 = vrot.slane %v4798, %v4814
  %v4828 = vunpack.c.l.b16 %v4790
  %v4829 = vunpack.c.h.b16 %v4790
  %v4830 = vunpack.c.l.b16 %v4791
  %v4831 = vunpack.c.h.b16 %v4791
  %v4832 = vunpack.c.l.b16 %v4792
  %v4833 = vunpack.c.h.b16 %v4792
  %v4834 = vunpack.c.l.b16 %v4793
  %v4835 = vunpack.c.h.b16 %v4793
  %v4836 = vunpack.c.l.b16 %v4794
  %v4837 = vunpack.c.h.b16 %v4794
  %v4838 = vunpack.c.l.b16 %v4795
  %v4839 = vunpack.c.h.b16 %v4795
  %v4840 = vunpack.c.l.b16 %v4796
  %v4841 = vunpack.c.h.b16 %v4796
  %v4842 = vunpack.c.l.b16 %v4797
  %v4843 = vunpack.c.h.b16 %v4797
  %v4844 = vpack.c.b16 %v4832, %v4828
  %v4845 = vpack.c.b16 %v4833, %v4829
  %v4846 = vpack.c.b16 %v4834, %v4830
  %v4847 = vpack.c.b16 %v4835, %v4831
  %v4848 = vpack.c.b16 %v4840, %v4836
  %v4849 = vpack.c.b16 %v4841, %v4837
  %v4850 = vpack.c.b16 %v4842, %v4838
  %v4851 = vpack.c.b16 %v4843, %v4839
  %v4861 = vsel %vm4672, %v4789, 0
  %4863 = vmatprep.subr.bf16.mxu0 %v4845
  %4864 = vmatpush1.bf16.msra.mxu0 %v4844
  %4865 = vmatprep.subr.bf16.mxu0 %v4849
  %4866 = vmatpush1.bf16.msra.mxu0 %v4848
  %4867 = vmatprep.subr.bf16.mxu0 0
  %4868 = vmatpush1.bf16.msra.mxu0 0
  %4869 = vmatprep.subr.bf16.mxu0 0
  %4870 = vmatpush1.bf16.msra.mxu0 0
  %4871 = vmatprep.subr.bf16.mxu0 0
  %4872 = vmatpush1.bf16.msra.mxu0 0
  %4873 = vmatprep.subr.bf16.mxu0 0
  %4874 = vmatpush1.bf16.msra.mxu0 0
  %4875 = vmatprep.subr.bf16.mxu0 0
  %4876 = vmatpush1.bf16.msra.mxu0 0
  %4877 = vmatprep.subr.bf16.mxu0 0
  %4878 = vmatpush1.bf16.msra.mxu0 0
  %4879 = vmatprep.subr.bf16.mxu0 0
  %4880 = vmatpush1.bf16.msra.mxu0 0
  %4881 = vmatprep.subr.bf16.mxu0 0
  %4882 = vmatpush1.bf16.msra.mxu0 0
  %4883 = vmatprep.subr.bf16.mxu0 0
  %4884 = vmatpush1.bf16.msra.mxu0 0
  %4885 = vmatprep.subr.bf16.mxu0 0
  %4886 = vmatpush1.bf16.msra.mxu0 0
  %4887 = vmatprep.subr.bf16.mxu0 0
  %4888 = vmatpush1.bf16.msra.mxu0 0
  %4889 = vmatprep.subr.bf16.mxu0 0
  %4890 = vmatpush1.bf16.msra.mxu0 0
  %4891 = vmatprep.subr.bf16.mxu0 0
  %4892 = vmatpush1.bf16.msra.mxu0 0
  %4893 = vmatprep.subr.bf16.mxu0 0
  %4894 = vmatpush1.bf16.msra.mxu0 0
  %4895 = vmatprep.mubr.bf16.mxu0 0
  %4896 = vmatmul.mubr.bf16.gmra.mrb[0].mxu0 %v4861
  %v4897 = vpop.f32.mrb[0].mxu0
  %v4898 = vadd.f32 %v4803, %v4897
  %v4899 = vpop.f32.mrb[0].mxu0
  %v4900 = vadd.f32 %v4807, %v4899
  %v4901 = vpop.f32.mrb[0].mxu0
  %v4902 = vadd.f32 %v4803, %v4901
  %v4903 = vpop.f32.mrb[0].mxu0
  %v4904 = vadd.f32 %v4807, %v4903
  %4905 = vdwg.mxu0
  %4906 = vmatprep.subr.bf16.mxu0 %v4847
  %4907 = vmatpush1.bf16.msra.mxu0 %v4846
  %4908 = vmatprep.subr.bf16.mxu0 %v4851
  %4909 = vmatpush1.bf16.msra.mxu0 %v4850
  %4910 = vmatprep.subr.bf16.mxu0 0
  %4911 = vmatpush1.bf16.msra.mxu0 0
  %4912 = vmatprep.subr.bf16.mxu0 0
  %4913 = vmatpush1.bf16.msra.mxu0 0
  %4914 = vmatprep.subr.bf16.mxu0 0
  %4915 = vmatpush1.bf16.msra.mxu0 0
  %4916 = vmatprep.subr.bf16.mxu0 0
  %4917 = vmatpush1.bf16.msra.mxu0 0
  %4918 = vmatprep.subr.bf16.mxu0 0
  %4919 = vmatpush1.bf16.msra.mxu0 0
  %4920 = vmatprep.subr.bf16.mxu0 0
  %4921 = vmatpush1.bf16.msra.mxu0 0
  %4922 = vmatprep.subr.bf16.mxu0 0
  %4923 = vmatpush1.bf16.msra.mxu0 0
  %4924 = vmatprep.subr.bf16.mxu0 0
  %4925 = vmatpush1.bf16.msra.mxu0 0
  %4926 = vmatprep.subr.bf16.mxu0 0
  %4927 = vmatpush1.bf16.msra.mxu0 0
  %4928 = vmatprep.subr.bf16.mxu0 0
  %4929 = vmatpush1.bf16.msra.mxu0 0
  %4930 = vmatprep.subr.bf16.mxu0 0
  %4931 = vmatpush1.bf16.msra.mxu0 0
  %4932 = vmatprep.subr.bf16.mxu0 0
  %4933 = vmatpush1.bf16.msra.mxu0 0
  %4934 = vmatprep.subr.bf16.mxu0 0
  %4935 = vmatpush1.bf16.msra.mxu0 0
  %4936 = vmatprep.subr.bf16.mxu0 0
  %4937 = vmatpush1.bf16.msra.mxu0 0
  %4938 = vmatprep.mubr.bf16.mxu0 0
  %4939 = vmatmul.mubr.bf16.gmra.mrb[0].mxu0 %v4861
  %v4940 = vpop.f32.mrb[0].mxu0
  %v4941 = vadd.f32 %v4811, %v4940
  %v4942 = vpop.f32.mrb[0].mxu0
  %v4943 = vadd.f32 %v4815, %v4942
  %v4944 = vpop.f32.mrb[0].mxu0
  %v4945 = vadd.f32 %v4811, %v4944
  %v4946 = vpop.f32.mrb[0].mxu0
  %v4947 = vadd.f32 %v4815, %v4946
  %4948 = vdwg.mxu0
  %4949 = vmax.xlane.f32.xlu0 %v4898
  %v4950 = vpop.xlane.xlu0 %4949
  %4951 = vmax.xlane.f32.xlu0 %v4902
  %v4952 = vpop.xlane.xlu0 %4951
  %v4953 = vsub.f32 %v4898, %v4950
  %v4954 = vsub.f32 %v4902, %v4952
  %v4955 = vmul.f32 %v4953, 1.442695
  %v4956 = vpow.pop %v4955
  %v4957 = vmul.f32 %v4954, 1.442695
  %v4958 = vpow.pop %v4957
  %4959 = vadd.xlane.f32.xlu0 %v4956
  %v4960 = vpop.xlane.xlu0 %4959
  %4961 = vadd.xlane.f32.xlu0 %v4958
  %v4962 = vpop.xlane.xlu0 %4961
  %v4963 = vrcp.pop %v4960
  %v4964 = vmul.f32 1.0, %v4963
  %v4965 = vrcp.pop %v4962
  %v4966 = vmul.f32 1.0, %v4965
  %v4967 = vmul.f32 %v4956, %v4964
  %v4968 = vmul.f32 %v4958, %v4966
  %4969 = vst [vmem:[%s13] sm:$0xff] %v4967
  %4970 = vst [vmem:[%s13 + $0x20] sm:$0xff] %v4968
  %4971 = vmax.xlane.f32.xlu0 %v4900
  %v4972 = vpop.xlane.xlu0 %4971
  %4973 = vmax.xlane.f32.xlu0 %v4904
  %v4974 = vpop.xlane.xlu0 %4973
  %v4975 = vsub.f32 %v4900, %v4972
  %v4976 = vsub.f32 %v4904, %v4974
  %v4977 = vmul.f32 %v4975, 1.442695
  %v4978 = vpow.pop %v4977
  %v4979 = vmul.f32 %v4976, 1.442695
  %v4980 = vpow.pop %v4979
  %4981 = vadd.xlane.f32.xlu0 %v4978
  %v4982 = vpop.xlane.xlu0 %4981
  %4983 = vadd.xlane.f32.xlu0 %v4980
  %v4984 = vpop.xlane.xlu0 %4983
  %v4985 = vrcp.pop %v4982
  %v4986 = vmul.f32 1.0, %v4985
  %v4987 = vrcp.pop %v4984
  %v4988 = vmul.f32 1.0, %v4987
  %v4989 = vmul.f32 %v4978, %v4986
  %v4990 = vmul.f32 %v4980, %v4988
  %4991 = vst [vmem:[%s13 + $0x8] sm:$0xff] %v4989
  %4992 = vst [vmem:[%s13 + $0x28] sm:$0xff] %v4990
  %4993 = vmax.xlane.f32.xlu0 %v4941
  %v4994 = vpop.xlane.xlu0 %4993
  %4995 = vmax.xlane.f32.xlu0 %v4945
  %v4996 = vpop.xlane.xlu0 %4995
  %v4997 = vsub.f32 %v4941, %v4994
  %v4998 = vsub.f32 %v4945, %v4996
  %v4999 = vmul.f32 %v4997, 1.442695
  %v5000 = vpow.pop %v4999
  %v5001 = vmul.f32 %v4998, 1.442695
  %v5002 = vpow.pop %v5001
  %5003 = vadd.xlane.f32.xlu0 %v5000
  %v5004 = vpop.xlane.xlu0 %5003
  %5005 = vadd.xlane.f32.xlu0 %v5002
  %v5006 = vpop.xlane.xlu0 %5005
  %v5007 = vrcp.pop %v5004
  %v5008 = vmul.f32 1.0, %v5007
  %v5009 = vrcp.pop %v5006
  %v5010 = vmul.f32 1.0, %v5009
  %v5011 = vmul.f32 %v5000, %v5008
  %v5012 = vmul.f32 %v5002, %v5010
  %5013 = vst [vmem:[%s13 + $0x10] sm:$0xff] %v5011
  %5014 = vst [vmem:[%s13 + $0x30] sm:$0xff] %v5012
  %5015 = vmax.xlane.f32.xlu0 %v4943
  %v5016 = vpop.xlane.xlu0 %5015
  %5017 = vmax.xlane.f32.xlu0 %v4947
  %v5018 = vpop.xlane.xlu0 %5017
  %v5019 = vsub.f32 %v4943, %v5016
  %v5020 = vsub.f32 %v4947, %v5018
  %v5021 = vmul.f32 %v5019, 1.442695
  %v5022 = vpow.pop %v5021
  %v5023 = vmul.f32 %v5020, 1.442695
  %v5024 = vpow.pop %v5023
  %5025 = vadd.xlane.f32.xlu0 %v5022
  %v5026 = vpop.xlane.xlu0 %5025
  %5027 = vadd.xlane.f32.xlu0 %v5024
  %v5028 = vpop.xlane.xlu0 %5027
  %v5029 = vrcp.pop %v5026
  %v5030 = vmul.f32 1.0, %v5029
  %v5031 = vrcp.pop %v5028
  %v5032 = vmul.f32 1.0, %v5031
  %v5033 = vmul.f32 %v5022, %v5030
  %v5034 = vmul.f32 %v5024, %v5032
  %5035 = vst [vmem:[%s13 + $0x18] sm:$0xff] %v5033
  %5036 = vst [vmem:[%s13 + $0x38] sm:$0xff] %v5034
  // Predicated region
  $region54: #{categorical_agent_forward.3} parent=0 // pred_check
    _
  $region55: #{categorical_agent_forward.3} parent=0 // pred_check_branch
    %5038 = sbr.rel (0) target = $region57
  $region56: #{categorical_agent_forward.3} parent=0 // pred_region
    _
  $region57: #{categorical_agent_forward.3} parent=0 // pred_fallthru
    _
  // Predicated region
  $region58: #{categorical_agent_forward.3} parent=0 // pred_check
    _
  $region59: #{categorical_agent_forward.3} parent=0 // pred_check_branch
    %5040 = sbr.rel (0) target = $region61
  $region60: #{categorical_agent_forward.3} parent=0 // pred_region
    _
  $region61: #{categorical_agent_forward.3} parent=0 // pred_fallthru
    _

</llo_original>
